<compile_context>
chip_gen: v7x
topology: tpu7x:2x2x1
jax: 0.10.0
libtpu: 0.0.40
codegen_flags: <defaults>
</compile_context>

<pallas_src>
import functools

import jax
import jax.numpy as jnp
from jax import lax
from jax.experimental import pallas as pl
from jax.experimental.pallas import tpu as pltpu

INPUT_SIZE = 8
HIDDEN = 24
NUM_FEATURES = 26
SEQ_LEN = 5          # repeat factor along dim 1 (PyTorch: x.repeat(1, seq_len, 1))
F_PAD = 128          # lane-dense padded fc output width
SUBLANE = 8


def _decoder_kernel(x_ref, wx_ref, wh_ref, b_ref, wfc_ref, bfc_ref, out_ref,
                    gi_scr, gf_scr, gg_scr, go_scr, *, T, Bp):
    """One invocation computes the whole sequence.

    x_ref   : (T*Bp, I)        flattened, batch padded to Bp sublanes
    wx_ref  : (4, I, H)        per-gate input weights (i, f, g, o), pre-transposed
    wh_ref  : (4, H, H)        per-gate hidden weights, pre-transposed
    b_ref   : (4, 1, H)        per-gate fused bias (b_ih + b_hh)
    wfc_ref : (H, F_PAD)       fc weight, transposed + zero-padded to 128 lanes
    bfc_ref : (1, F_PAD)       fc bias, zero-padded
    out_ref : (T*Bp, F_PAD)    lane-dense output
    g*_scr  : (T*Bp, H)        precomputed input-gate projections (one per gate)
    """
    x_all = x_ref[...]                                   # (T*Bp, I)

    # Hoisted input projection + bias for all timesteps and all four gates.
    pre = (gi_scr, gf_scr, gg_scr, go_scr)
    for k in range(4):
        pre[k][...] = (
            jnp.dot(x_all, wx_ref[k], preferred_element_type=jnp.float32)
            + b_ref[k])

    def step(t, carry):
        h, c = carry
        r = pl.multiple_of(t * Bp, SUBLANE)

        # Recurrent path: only h @ W_hh per gate remains in the loop.
        gi = gi_scr[pl.ds(r, Bp), :] + jnp.dot(
            h, wh_ref[0], preferred_element_type=jnp.float32)
        gf = gf_scr[pl.ds(r, Bp), :] + jnp.dot(
            h, wh_ref[1], preferred_element_type=jnp.float32)
        gg = gg_scr[pl.ds(r, Bp), :] + jnp.dot(
            h, wh_ref[2], preferred_element_type=jnp.float32)
        go = go_scr[pl.ds(r, Bp), :] + jnp.dot(
            h, wh_ref[3], preferred_element_type=jnp.float32)

        i = jax.nn.sigmoid(gi)
        f = jax.nn.sigmoid(gf)
        g = jnp.tanh(gg)
        o = jax.nn.sigmoid(go)

        c_new = f * c + i * g
        h_new = o * jnp.tanh(c_new)

        # fc projection + lane-dense store into the resident output block.
        y = jnp.dot(h_new, wfc_ref[...],
                    preferred_element_type=jnp.float32) + bfc_ref[...]
        out_ref[pl.ds(r, Bp), :] = y
        return (h_new, c_new)

    h0 = jnp.zeros((Bp, HIDDEN), jnp.float32)
    c0 = jnp.zeros((Bp, HIDDEN), jnp.float32)
    lax.fori_loop(0, T, step, (h0, c0), unroll=True)


def decoder_forward(x, params, seq_len=SEQ_LEN):
    T, B, I = x.shape
    assert I == INPUT_SIZE
    H = HIDDEN
    Bp = ((B + SUBLANE - 1) // SUBLANE) * SUBLANE        # pad batch to sublanes

    # --- Parameter preprocessing (pure layout work, done once in XLA) -------
    w_ih = params["w_ih"]                                # (4H, I), rows = i,f,g,o
    w_hh = params["w_hh"]                                # (4H, H)
    b = params["b_ih"] + params["b_hh"]                  # (4H,)

    wx4 = jnp.stack([w_ih[k * H:(k + 1) * H, :].T for k in range(4)])   # (4, I, H)
    wh4 = jnp.stack([w_hh[k * H:(k + 1) * H, :].T for k in range(4)])   # (4, H, H)
    b4 = jnp.stack([b[k * H:(k + 1) * H] for k in range(4)])[:, None, :]  # (4, 1, H)

    wfc = jnp.zeros((H, F_PAD), jnp.float32).at[:, :NUM_FEATURES].set(
        params["w_fc"].T)                                # (H, 128)
    bfc = jnp.zeros((1, F_PAD), jnp.float32).at[0, :NUM_FEATURES].set(
        params["b_fc"])                                  # (1, 128)

    # Batch padded to Bp, flattened to 2-D (sublane-aligned rows per timestep).
    x_pad = jnp.zeros((T, Bp, I), jnp.float32).at[:, :B, :].set(x)
    x2d = x_pad.reshape(T * Bp, I)

    kernel = functools.partial(_decoder_kernel, T=T, Bp=Bp)

    out2d = pl.pallas_call(
        kernel,
        out_shape=jax.ShapeDtypeStruct((T * Bp, F_PAD), jnp.float32),
        grid=(1,),
        in_specs=[
            pl.BlockSpec((T * Bp, I), lambda i: (0, 0)),
            pl.BlockSpec((4, I, H), lambda i: (0, 0, 0)),
            pl.BlockSpec((4, H, H), lambda i: (0, 0, 0)),
            pl.BlockSpec((4, 1, H), lambda i: (0, 0, 0)),
            pl.BlockSpec((H, F_PAD), lambda i: (0, 0)),
            pl.BlockSpec((1, F_PAD), lambda i: (0, 0)),
        ],
        out_specs=pl.BlockSpec((T * Bp, F_PAD), lambda i: (0, 0)),
        scratch_shapes=[pltpu.VMEM((T * Bp, H), jnp.float32) for _ in range(4)],
        compiler_params=pltpu.CompilerParams(
            dimension_semantics=("arbitrary",)),
    )(x2d, wx4, wh4, b4, wfc, bfc)

    # Un-pad, un-flatten, and replicate the batch seq_len times.  All replicas
    # of PyTorch's x.repeat(1, seq_len, 1) are identical because the LSTM
    # starts from a zero state, so tiling the B-sized result is exact.
    out = out2d.reshape(T, Bp, F_PAD)[:, :B, :NUM_FEATURES]
    return jnp.tile(out, (1, seq_len, 1))                # (T, B*seq_len, F)


def _reference(x, params, seq_len=SEQ_LEN):
    # Pure-JAX reference of the PyTorch forward (verification only).
    x_rep = jnp.tile(x, (1, seq_len, 1))
    H = HIDDEN
    wx, wh = params["w_ih"], params["w_hh"]
    b = params["b_ih"] + params["b_hh"]

    def step(carry, x_t):
        h, c = carry
        gates = x_t @ wx.T + h @ wh.T + b
        i = jax.nn.sigmoid(gates[:, :H])
        f = jax.nn.sigmoid(gates[:, H:2 * H])
        g = jnp.tanh(gates[:, 2 * H:3 * H])
        o = jax.nn.sigmoid(gates[:, 3 * H:])
        c = f * c + i * g
        h = o * jnp.tanh(c)
        return (h, c), h

    Brep = x_rep.shape[1]
    h0 = jnp.zeros((Brep, H), jnp.float32)
    (_, _), hs = jax.lax.scan(step, (h0, h0), x_rep)
    return hs @ params["w_fc"].T + params["b_fc"]


def init_params(key):
    # Deterministic synthetic params, PyTorch-style U(-1/sqrt(H), 1/sqrt(H)).
    ks = jax.random.split(key, 6)
    bound = 1.0 / float(jnp.sqrt(jnp.float32(HIDDEN)))
    u = lambda k, shape: jax.random.uniform(k, shape, jnp.float32, -bound, bound)
    return {
        "w_ih": u(ks[0], (4 * HIDDEN, INPUT_SIZE)),
        "w_hh": u(ks[1], (4 * HIDDEN, HIDDEN)),
        "b_ih": u(ks[2], (4 * HIDDEN,)),
        "b_hh": u(ks[3], (4 * HIDDEN,)),
        "w_fc": u(ks[4], (NUM_FEATURES, HIDDEN)),
        "b_fc": u(ks[5], (NUM_FEATURES,)),
    }


if __name__ == "__main__":
    key = jax.random.PRNGKey(0)
    pkey, xkey = jax.random.split(key)
    params = init_params(pkey)

    T, B = 7, 2   # x: (seq=7, batch=2, input=8) -> LSTM batch becomes 2*5=10
    x = jax.random.normal(xkey, (T, B, INPUT_SIZE), jnp.float32)

    out = decoder_forward(x, params)
    out = jax.block_until_ready(out)

    ref = _reference(x, params)
    assert out.shape == (T, B * SEQ_LEN, NUM_FEATURES), out.shape
    assert jnp.allclose(out, ref, atol=1e-5, rtol=1e-5), \
        float(jnp.max(jnp.abs(out - ref)))

    print("KERNEL_OK")
</pallas_src>

<mosaic_0001>
module attributes {stable_mosaic.version = 11 : i64} {
  func.func @_decoder_kernel(%arg0: i32, %arg1: memref<56x8xf32, #tpu.memory_space<vmem>>, %arg2: memref<4x8x24xf32, #tpu.memory_space<vmem>>, %arg3: memref<4x24x24xf32, #tpu.memory_space<vmem>>, %arg4: memref<4x1x24xf32, #tpu.memory_space<vmem>>, %arg5: memref<24x128xf32, #tpu.memory_space<vmem>>, %arg6: memref<1x128xf32, #tpu.memory_space<vmem>>, %arg7: memref<56x128xf32, #tpu.memory_space<vmem>>, %arg8: memref<56x24xf32, #tpu.memory_space<vmem>>, %arg9: memref<56x24xf32, #tpu.memory_space<vmem>>, %arg10: memref<56x24xf32, #tpu.memory_space<vmem>>, %arg11: memref<56x24xf32, #tpu.memory_space<vmem>>) attributes {dimension_semantics = [#tpu.dimension_semantics<arbitrary>], iteration_bounds = array<i64: 1>, scalar_prefetch = 0 : i64, scratch_operands = 4 : i64, tpu.core_type = #tpu.core_type<tc>, window_params = [{pipeline_mode = #tpu.pipeline_mode<synchronous>, transform_indices = @transform_0, window_bounds = array<i64: 56, 8>}, {pipeline_mode = #tpu.pipeline_mode<synchronous>, transform_indices = @transform_1, window_bounds = array<i64: 4, 8, 24>}, {pipeline_mode = #tpu.pipeline_mode<synchronous>, transform_indices = @transform_2, window_bounds = array<i64: 4, 24, 24>}, {pipeline_mode = #tpu.pipeline_mode<synchronous>, transform_indices = @transform_3, window_bounds = array<i64: 4, 1, 24>}, {pipeline_mode = #tpu.pipeline_mode<synchronous>, transform_indices = @transform_4, window_bounds = array<i64: 24, 128>}, {pipeline_mode = #tpu.pipeline_mode<synchronous>, transform_indices = @transform_5, window_bounds = array<i64: 1, 128>}, {pipeline_mode = #tpu.pipeline_mode<synchronous>, transform_indices = @transform_6, window_bounds = array<i64: 56, 128>}]} {
    %c0 = arith.constant 0 : index
    %c0_0 = arith.constant 0 : index
    %0 = vector.load %arg1[%c0, %c0_0] : memref<56x8xf32, #tpu.memory_space<vmem>>, vector<56x8xf32>
    %c0_1 = arith.constant 0 : index
    %c0_2 = arith.constant 0 : index
    %c0_3 = arith.constant 0 : index
    %1 = vector.load %arg2[%c0_1, %c0_2, %c0_3] : memref<4x8x24xf32, #tpu.memory_space<vmem>>, vector<1x8x24xf32>
    %2 = vector.shape_cast %1 : vector<1x8x24xf32> to vector<8x24xf32>
    %cst = arith.constant dense<0.000000e+00> : vector<56x24xf32>
    %3 = tpu.matmul %0, %2, %cst {dimension_numbers = #tpu.dot_dimension_numbers<[1], [0], [0], [1], [0, 0, 1, 1], [], []>} : vector<56x8xf32>, vector<8x24xf32>, vector<56x24xf32> -> vector<56x24xf32>
    %c0_4 = arith.constant 0 : index
    %c0_5 = arith.constant 0 : index
    %c0_6 = arith.constant 0 : index
    %4 = vector.load %arg4[%c0_4, %c0_5, %c0_6] : memref<4x1x24xf32, #tpu.memory_space<vmem>>, vector<1x1x24xf32>
    %5 = vector.shape_cast %4 : vector<1x1x24xf32> to vector<1x24xf32>
    %6 = vector.broadcast %5 : vector<1x24xf32> to vector<56x24xf32>
    %7 = arith.addf %3, %6 : vector<56x24xf32>
    %c0_7 = arith.constant 0 : index
    %c0_8 = arith.constant 0 : index
    %8 = vector.load %arg8[%c0_7, %c0_8] : memref<56x24xf32, #tpu.memory_space<vmem>>, vector<56x24xf32>
    tpu.vector_store %arg8[%c0_7, %c0_8], %7 {strides = array<i32>} : memref<56x24xf32, #tpu.memory_space<vmem>>, vector<56x24xf32>,
    %c1 = arith.constant 1 : index
    %c0_9 = arith.constant 0 : index
    %c0_10 = arith.constant 0 : index
    %9 = vector.load %arg2[%c1, %c0_9, %c0_10] : memref<4x8x24xf32, #tpu.memory_space<vmem>>, vector<1x8x24xf32>
    %10 = vector.shape_cast %9 : vector<1x8x24xf32> to vector<8x24xf32>
    %cst_11 = arith.constant dense<0.000000e+00> : vector<56x24xf32>
    %11 = tpu.matmul %0, %10, %cst_11 {dimension_numbers = #tpu.dot_dimension_numbers<[1], [0], [0], [1], [0, 0, 1, 1], [], []>} : vector<56x8xf32>, vector<8x24xf32>, vector<56x24xf32> -> vector<56x24xf32>
    %c1_12 = arith.constant 1 : index
    %c0_13 = arith.constant 0 : index
    %c0_14 = arith.constant 0 : index
    %12 = vector.load %arg4[%c1_12, %c0_13, %c0_14] : memref<4x1x24xf32, #tpu.memory_space<vmem>>, vector<1x1x24xf32>
    %13 = vector.shape_cast %12 : vector<1x1x24xf32> to vector<1x24xf32>
    %14 = vector.broadcast %13 : vector<1x24xf32> to vector<56x24xf32>
    %15 = arith.addf %11, %14 : vector<56x24xf32>
    %c0_15 = arith.constant 0 : index
    %c0_16 = arith.constant 0 : index
    %16 = vector.load %arg9[%c0_15, %c0_16] : memref<56x24xf32, #tpu.memory_space<vmem>>, vector<56x24xf32>
    tpu.vector_store %arg9[%c0_15, %c0_16], %15 {strides = array<i32>} : memref<56x24xf32, #tpu.memory_space<vmem>>, vector<56x24xf32>,
    %c2 = arith.constant 2 : index
    %c0_17 = arith.constant 0 : index
    %c0_18 = arith.constant 0 : index
    %17 = vector.load %arg2[%c2, %c0_17, %c0_18] : memref<4x8x24xf32, #tpu.memory_space<vmem>>, vector<1x8x24xf32>
    %18 = vector.shape_cast %17 : vector<1x8x24xf32> to vector<8x24xf32>
    %cst_19 = arith.constant dense<0.000000e+00> : vector<56x24xf32>
    %19 = tpu.matmul %0, %18, %cst_19 {dimension_numbers = #tpu.dot_dimension_numbers<[1], [0], [0], [1], [0, 0, 1, 1], [], []>} : vector<56x8xf32>, vector<8x24xf32>, vector<56x24xf32> -> vector<56x24xf32>
    %c2_20 = arith.constant 2 : index
    %c0_21 = arith.constant 0 : index
    %c0_22 = arith.constant 0 : index
    %20 = vector.load %arg4[%c2_20, %c0_21, %c0_22] : memref<4x1x24xf32, #tpu.memory_space<vmem>>, vector<1x1x24xf32>
    %21 = vector.shape_cast %20 : vector<1x1x24xf32> to vector<1x24xf32>
    %22 = vector.broadcast %21 : vector<1x24xf32> to vector<56x24xf32>
    %23 = arith.addf %19, %22 : vector<56x24xf32>
    %c0_23 = arith.constant 0 : index
    %c0_24 = arith.constant 0 : index
    %24 = vector.load %arg10[%c0_23, %c0_24] : memref<56x24xf32, #tpu.memory_space<vmem>>, vector<56x24xf32>
    tpu.vector_store %arg10[%c0_23, %c0_24], %23 {strides = array<i32>} : memref<56x24xf32, #tpu.memory_space<vmem>>, vector<56x24xf32>,
    %c3 = arith.constant 3 : index
    %c0_25 = arith.constant 0 : index
    %c0_26 = arith.constant 0 : index
    %25 = vector.load %arg2[%c3, %c0_25, %c0_26] : memref<4x8x24xf32, #tpu.memory_space<vmem>>, vector<1x8x24xf32>
    %26 = vector.shape_cast %25 : vector<1x8x24xf32> to vector<8x24xf32>
    %cst_27 = arith.constant dense<0.000000e+00> : vector<56x24xf32>
    %27 = tpu.matmul %0, %26, %cst_27 {dimension_numbers = #tpu.dot_dimension_numbers<[1], [0], [0], [1], [0, 0, 1, 1], [], []>} : vector<56x8xf32>, vector<8x24xf32>, vector<56x24xf32> -> vector<56x24xf32>
    %c3_28 = arith.constant 3 : index
    %c0_29 = arith.constant 0 : index
    %c0_30 = arith.constant 0 : index
    %28 = vector.load %arg4[%c3_28, %c0_29, %c0_30] : memref<4x1x24xf32, #tpu.memory_space<vmem>>, vector<1x1x24xf32>
    %29 = vector.shape_cast %28 : vector<1x1x24xf32> to vector<1x24xf32>
    %30 = vector.broadcast %29 : vector<1x24xf32> to vector<56x24xf32>
    %31 = arith.addf %27, %30 : vector<56x24xf32>
    %c0_31 = arith.constant 0 : index
    %c0_32 = arith.constant 0 : index
    %32 = vector.load %arg11[%c0_31, %c0_32] : memref<56x24xf32, #tpu.memory_space<vmem>>, vector<56x24xf32>
    tpu.vector_store %arg11[%c0_31, %c0_32], %31 {strides = array<i32>} : memref<56x24xf32, #tpu.memory_space<vmem>>, vector<56x24xf32>,
    %cst_33 = arith.constant 0.000000e+00 : f32
    %33 = vector.broadcast %cst_33 : f32 to vector<8x24xf32>
    %cst_34 = arith.constant 0.000000e+00 : f32
    %34 = vector.broadcast %cst_34 : f32 to vector<8x24xf32>
    %c0_i32 = arith.constant 0 : i32
    %c8_i32 = arith.constant 8 : i32
    %35 = arith.muli %c0_i32, %c8_i32 : i32
    %36 = tpu.assume_multiple %35, 8 : i32
    %37 = arith.index_cast %36 : i32 to index
    %c0_35 = arith.constant 0 : index
    %38 = vector.load %arg8[%37, %c0_35] : memref<56x24xf32, #tpu.memory_space<vmem>>, vector<8x24xf32>
    %c0_36 = arith.constant 0 : index
    %c0_37 = arith.constant 0 : index
    %c0_38 = arith.constant 0 : index
    %39 = vector.load %arg3[%c0_36, %c0_37, %c0_38] : memref<4x24x24xf32, #tpu.memory_space<vmem>>, vector<1x24x24xf32>
    %40 = vector.shape_cast %39 : vector<1x24x24xf32> to vector<24x24xf32>
    %cst_39 = arith.constant dense<0.000000e+00> : vector<8x24xf32>
    %41 = tpu.matmul %33, %40, %cst_39 {dimension_numbers = #tpu.dot_dimension_numbers<[1], [0], [0], [1], [0, 0, 1, 1], [], []>} : vector<8x24xf32>, vector<24x24xf32>, vector<8x24xf32> -> vector<8x24xf32>
    %42 = arith.addf %38, %41 : vector<8x24xf32>
    %43 = arith.index_cast %36 : i32 to index
    %c0_40 = arith.constant 0 : index
    %44 = vector.load %arg9[%43, %c0_40] : memref<56x24xf32, #tpu.memory_space<vmem>>, vector<8x24xf32>
    %c1_41 = arith.constant 1 : index
    %c0_42 = arith.constant 0 : index
    %c0_43 = arith.constant 0 : index
    %45 = vector.load %arg3[%c1_41, %c0_42, %c0_43] : memref<4x24x24xf32, #tpu.memory_space<vmem>>, vector<1x24x24xf32>
    %46 = vector.shape_cast %45 : vector<1x24x24xf32> to vector<24x24xf32>
    %cst_44 = arith.constant dense<0.000000e+00> : vector<8x24xf32>
    %47 = tpu.matmul %33, %46, %cst_44 {dimension_numbers = #tpu.dot_dimension_numbers<[1], [0], [0], [1], [0, 0, 1, 1], [], []>} : vector<8x24xf32>, vector<24x24xf32>, vector<8x24xf32> -> vector<8x24xf32>
    %48 = arith.addf %44, %47 : vector<8x24xf32>
    %49 = arith.index_cast %36 : i32 to index
    %c0_45 = arith.constant 0 : index
    %50 = vector.load %arg10[%49, %c0_45] : memref<56x24xf32, #tpu.memory_space<vmem>>, vector<8x24xf32>
    %c2_46 = arith.constant 2 : index
    %c0_47 = arith.constant 0 : index
    %c0_48 = arith.constant 0 : index
    %51 = vector.load %arg3[%c2_46, %c0_47, %c0_48] : memref<4x24x24xf32, #tpu.memory_space<vmem>>, vector<1x24x24xf32>
    %52 = vector.shape_cast %51 : vector<1x24x24xf32> to vector<24x24xf32>
    %cst_49 = arith.constant dense<0.000000e+00> : vector<8x24xf32>
    %53 = tpu.matmul %33, %52, %cst_49 {dimension_numbers = #tpu.dot_dimension_numbers<[1], [0], [0], [1], [0, 0, 1, 1], [], []>} : vector<8x24xf32>, vector<24x24xf32>, vector<8x24xf32> -> vector<8x24xf32>
    %54 = arith.addf %50, %53 : vector<8x24xf32>
    %55 = arith.index_cast %36 : i32 to index
    %c0_50 = arith.constant 0 : index
    %56 = vector.load %arg11[%55, %c0_50] : memref<56x24xf32, #tpu.memory_space<vmem>>, vector<8x24xf32>
    %c3_51 = arith.constant 3 : index
    %c0_52 = arith.constant 0 : index
    %c0_53 = arith.constant 0 : index
    %57 = vector.load %arg3[%c3_51, %c0_52, %c0_53] : memref<4x24x24xf32, #tpu.memory_space<vmem>>, vector<1x24x24xf32>
    %58 = vector.shape_cast %57 : vector<1x24x24xf32> to vector<24x24xf32>
    %cst_54 = arith.constant dense<0.000000e+00> : vector<8x24xf32>
    %59 = tpu.matmul %33, %58, %cst_54 {dimension_numbers = #tpu.dot_dimension_numbers<[1], [0], [0], [1], [0, 0, 1, 1], [], []>} : vector<8x24xf32>, vector<24x24xf32>, vector<8x24xf32> -> vector<8x24xf32>
    %60 = arith.addf %56, %59 : vector<8x24xf32>
    %61 = arith.negf %42 : vector<8x24xf32>
    %62 = math.exp %61 : vector<8x24xf32>
    %cst_55 = arith.constant 1.000000e+00 : f32
    %63 = vector.broadcast %cst_55 : f32 to vector<8x24xf32>
    %64 = arith.addf %63, %62 : vector<8x24xf32>
    %65 = arith.divf %63, %64 : vector<8x24xf32>
    %66 = arith.negf %48 : vector<8x24xf32>
    %67 = math.exp %66 : vector<8x24xf32>
    %cst_56 = arith.constant 1.000000e+00 : f32
    %68 = vector.broadcast %cst_56 : f32 to vector<8x24xf32>
    %69 = arith.addf %68, %67 : vector<8x24xf32>
    %70 = arith.divf %68, %69 : vector<8x24xf32>
    %71 = math.tanh %54 : vector<8x24xf32>
    %72 = arith.negf %60 : vector<8x24xf32>
    %73 = math.exp %72 : vector<8x24xf32>
    %cst_57 = arith.constant 1.000000e+00 : f32
    %74 = vector.broadcast %cst_57 : f32 to vector<8x24xf32>
    %75 = arith.addf %74, %73 : vector<8x24xf32>
    %76 = arith.divf %74, %75 : vector<8x24xf32>
    %77 = arith.mulf %70, %34 : vector<8x24xf32>
    %78 = arith.mulf %65, %71 : vector<8x24xf32>
    %79 = arith.addf %77, %78 : vector<8x24xf32>
    %80 = math.tanh %79 : vector<8x24xf32>
    %81 = arith.mulf %76, %80 : vector<8x24xf32>
    %c0_58 = arith.constant 0 : index
    %c0_59 = arith.constant 0 : index
    %82 = vector.load %arg5[%c0_58, %c0_59] : memref<24x128xf32, #tpu.memory_space<vmem>>, vector<24x128xf32>
    %cst_60 = arith.constant dense<0.000000e+00> : vector<8x128xf32>
    %83 = tpu.matmul %81, %82, %cst_60 {dimension_numbers = #tpu.dot_dimension_numbers<[1], [0], [0], [1], [0, 0, 1, 1], [], []>} : vector<8x24xf32>, vector<24x128xf32>, vector<8x128xf32> -> vector<8x128xf32>
    %c0_61 = arith.constant 0 : index
    %c0_62 = arith.constant 0 : index
    %84 = vector.load %arg6[%c0_61, %c0_62] : memref<1x128xf32, #tpu.memory_space<vmem>>, vector<1x128xf32>
    %85 = vector.broadcast %84 : vector<1x128xf32> to vector<8x128xf32>
    %86 = arith.addf %83, %85 : vector<8x128xf32>
    %87 = arith.index_cast %36 : i32 to index
    %c0_63 = arith.constant 0 : index
    %88 = vector.load %arg7[%87, %c0_63] : memref<56x128xf32, #tpu.memory_space<vmem>>, vector<8x128xf32>
    tpu.vector_store %arg7[%87, %c0_63], %86 {strides = array<i32>} : memref<56x128xf32, #tpu.memory_space<vmem>>, vector<8x128xf32>,
    %c1_i32 = arith.constant 1 : i32
    %c8_i32_64 = arith.constant 8 : i32
    %89 = arith.muli %c1_i32, %c8_i32_64 : i32
    %90 = tpu.assume_multiple %89, 8 : i32
    %91 = arith.index_cast %90 : i32 to index
    %c0_65 = arith.constant 0 : index
    %92 = vector.load %arg8[%91, %c0_65] : memref<56x24xf32, #tpu.memory_space<vmem>>, vector<8x24xf32>
    %c0_66 = arith.constant 0 : index
    %c0_67 = arith.constant 0 : index
    %c0_68 = arith.constant 0 : index
    %93 = vector.load %arg3[%c0_66, %c0_67, %c0_68] : memref<4x24x24xf32, #tpu.memory_space<vmem>>, vector<1x24x24xf32>
    %94 = vector.shape_cast %93 : vector<1x24x24xf32> to vector<24x24xf32>
    %cst_69 = arith.constant dense<0.000000e+00> : vector<8x24xf32>
    %95 = tpu.matmul %81, %94, %cst_69 {dimension_numbers = #tpu.dot_dimension_numbers<[1], [0], [0], [1], [0, 0, 1, 1], [], []>} : vector<8x24xf32>, vector<24x24xf32>, vector<8x24xf32> -> vector<8x24xf32>
    %96 = arith.addf %92, %95 : vector<8x24xf32>
    %97 = arith.index_cast %90 : i32 to index
    %c0_70 = arith.constant 0 : index
    %98 = vector.load %arg9[%97, %c0_70] : memref<56x24xf32, #tpu.memory_space<vmem>>, vector<8x24xf32>
    %c1_71 = arith.constant 1 : index
    %c0_72 = arith.constant 0 : index
    %c0_73 = arith.constant 0 : index
    %99 = vector.load %arg3[%c1_71, %c0_72, %c0_73] : memref<4x24x24xf32, #tpu.memory_space<vmem>>, vector<1x24x24xf32>
    %100 = vector.shape_cast %99 : vector<1x24x24xf32> to vector<24x24xf32>
    %cst_74 = arith.constant dense<0.000000e+00> : vector<8x24xf32>
    %101 = tpu.matmul %81, %100, %cst_74 {dimension_numbers = #tpu.dot_dimension_numbers<[1], [0], [0], [1], [0, 0, 1, 1], [], []>} : vector<8x24xf32>, vector<24x24xf32>, vector<8x24xf32> -> vector<8x24xf32>
    %102 = arith.addf %98, %101 : vector<8x24xf32>
    %103 = arith.index_cast %90 : i32 to index
    %c0_75 = arith.constant 0 : index
    %104 = vector.load %arg10[%103, %c0_75] : memref<56x24xf32, #tpu.memory_space<vmem>>, vector<8x24xf32>
    %c2_76 = arith.constant 2 : index
    %c0_77 = arith.constant 0 : index
    %c0_78 = arith.constant 0 : index
    %105 = vector.load %arg3[%c2_76, %c0_77, %c0_78] : memref<4x24x24xf32, #tpu.memory_space<vmem>>, vector<1x24x24xf32>
    %106 = vector.shape_cast %105 : vector<1x24x24xf32> to vector<24x24xf32>
    %cst_79 = arith.constant dense<0.000000e+00> : vector<8x24xf32>
    %107 = tpu.matmul %81, %106, %cst_79 {dimension_numbers = #tpu.dot_dimension_numbers<[1], [0], [0], [1], [0, 0, 1, 1], [], []>} : vector<8x24xf32>, vector<24x24xf32>, vector<8x24xf32> -> vector<8x24xf32>
    %108 = arith.addf %104, %107 : vector<8x24xf32>
    %109 = arith.index_cast %90 : i32 to index
    %c0_80 = arith.constant 0 : index
    %110 = vector.load %arg11[%109, %c0_80] : memref<56x24xf32, #tpu.memory_space<vmem>>, vector<8x24xf32>
    %c3_81 = arith.constant 3 : index
    %c0_82 = arith.constant 0 : index
    %c0_83 = arith.constant 0 : index
    %111 = vector.load %arg3[%c3_81, %c0_82, %c0_83] : memref<4x24x24xf32, #tpu.memory_space<vmem>>, vector<1x24x24xf32>
    %112 = vector.shape_cast %111 : vector<1x24x24xf32> to vector<24x24xf32>
    %cst_84 = arith.constant dense<0.000000e+00> : vector<8x24xf32>
    %113 = tpu.matmul %81, %112, %cst_84 {dimension_numbers = #tpu.dot_dimension_numbers<[1], [0], [0], [1], [0, 0, 1, 1], [], []>} : vector<8x24xf32>, vector<24x24xf32>, vector<8x24xf32> -> vector<8x24xf32>
    %114 = arith.addf %110, %113 : vector<8x24xf32>
    %115 = arith.negf %96 : vector<8x24xf32>
    %116 = math.exp %115 : vector<8x24xf32>
    %cst_85 = arith.constant 1.000000e+00 : f32
    %117 = vector.broadcast %cst_85 : f32 to vector<8x24xf32>
    %118 = arith.addf %117, %116 : vector<8x24xf32>
    %119 = arith.divf %117, %118 : vector<8x24xf32>
    %120 = arith.negf %102 : vector<8x24xf32>
    %121 = math.exp %120 : vector<8x24xf32>
    %cst_86 = arith.constant 1.000000e+00 : f32
    %122 = vector.broadcast %cst_86 : f32 to vector<8x24xf32>
    %123 = arith.addf %122, %121 : vector<8x24xf32>
    %124 = arith.divf %122, %123 : vector<8x24xf32>
    %125 = math.tanh %108 : vector<8x24xf32>
    %126 = arith.negf %114 : vector<8x24xf32>
    %127 = math.exp %126 : vector<8x24xf32>
    %cst_87 = arith.constant 1.000000e+00 : f32
    %128 = vector.broadcast %cst_87 : f32 to vector<8x24xf32>
    %129 = arith.addf %128, %127 : vector<8x24xf32>
    %130 = arith.divf %128, %129 : vector<8x24xf32>
    %131 = arith.mulf %124, %79 : vector<8x24xf32>
    %132 = arith.mulf %119, %125 : vector<8x24xf32>
    %133 = arith.addf %131, %132 : vector<8x24xf32>
    %134 = math.tanh %133 : vector<8x24xf32>
    %135 = arith.mulf %130, %134 : vector<8x24xf32>
    %c0_88 = arith.constant 0 : index
    %c0_89 = arith.constant 0 : index
    %136 = vector.load %arg5[%c0_88, %c0_89] : memref<24x128xf32, #tpu.memory_space<vmem>>, vector<24x128xf32>
    %cst_90 = arith.constant dense<0.000000e+00> : vector<8x128xf32>
    %137 = tpu.matmul %135, %136, %cst_90 {dimension_numbers = #tpu.dot_dimension_numbers<[1], [0], [0], [1], [0, 0, 1, 1], [], []>} : vector<8x24xf32>, vector<24x128xf32>, vector<8x128xf32> -> vector<8x128xf32>
    %c0_91 = arith.constant 0 : index
    %c0_92 = arith.constant 0 : index
    %138 = vector.load %arg6[%c0_91, %c0_92] : memref<1x128xf32, #tpu.memory_space<vmem>>, vector<1x128xf32>
    %139 = vector.broadcast %138 : vector<1x128xf32> to vector<8x128xf32>
    %140 = arith.addf %137, %139 : vector<8x128xf32>
    %141 = arith.index_cast %90 : i32 to index
    %c0_93 = arith.constant 0 : index
    %142 = vector.load %arg7[%141, %c0_93] : memref<56x128xf32, #tpu.memory_space<vmem>>, vector<8x128xf32>
    tpu.vector_store %arg7[%141, %c0_93], %140 {strides = array<i32>} : memref<56x128xf32, #tpu.memory_space<vmem>>, vector<8x128xf32>,
    %c2_i32 = arith.constant 2 : i32
    %c8_i32_94 = arith.constant 8 : i32
    %143 = arith.muli %c2_i32, %c8_i32_94 : i32
    %144 = tpu.assume_multiple %143, 8 : i32
    %145 = arith.index_cast %144 : i32 to index
    %c0_95 = arith.constant 0 : index
    %146 = vector.load %arg8[%145, %c0_95] : memref<56x24xf32, #tpu.memory_space<vmem>>, vector<8x24xf32>
    %c0_96 = arith.constant 0 : index
    %c0_97 = arith.constant 0 : index
    %c0_98 = arith.constant 0 : index
    %147 = vector.load %arg3[%c0_96, %c0_97, %c0_98] : memref<4x24x24xf32, #tpu.memory_space<vmem>>, vector<1x24x24xf32>
    %148 = vector.shape_cast %147 : vector<1x24x24xf32> to vector<24x24xf32>
    %cst_99 = arith.constant dense<0.000000e+00> : vector<8x24xf32>
    %149 = tpu.matmul %135, %148, %cst_99 {dimension_numbers = #tpu.dot_dimension_numbers<[1], [0], [0], [1], [0, 0, 1, 1], [], []>} : vector<8x24xf32>, vector<24x24xf32>, vector<8x24xf32> -> vector<8x24xf32>
    %150 = arith.addf %146, %149 : vector<8x24xf32>
    %151 = arith.index_cast %144 : i32 to index
    %c0_100 = arith.constant 0 : index
    %152 = vector.load %arg9[%151, %c0_100] : memref<56x24xf32, #tpu.memory_space<vmem>>, vector<8x24xf32>
    %c1_101 = arith.constant 1 : index
    %c0_102 = arith.constant 0 : index
    %c0_103 = arith.constant 0 : index
    %153 = vector.load %arg3[%c1_101, %c0_102, %c0_103] : memref<4x24x24xf32, #tpu.memory_space<vmem>>, vector<1x24x24xf32>
    %154 = vector.shape_cast %153 : vector<1x24x24xf32> to vector<24x24xf32>
    %cst_104 = arith.constant dense<0.000000e+00> : vector<8x24xf32>
    %155 = tpu.matmul %135, %154, %cst_104 {dimension_numbers = #tpu.dot_dimension_numbers<[1], [0], [0], [1], [0, 0, 1, 1], [], []>} : vector<8x24xf32>, vector<24x24xf32>, vector<8x24xf32> -> vector<8x24xf32>
    %156 = arith.addf %152, %155 : vector<8x24xf32>
    %157 = arith.index_cast %144 : i32 to index
    %c0_105 = arith.constant 0 : index
    %158 = vector.load %arg10[%157, %c0_105] : memref<56x24xf32, #tpu.memory_space<vmem>>, vector<8x24xf32>
    %c2_106 = arith.constant 2 : index
    %c0_107 = arith.constant 0 : index
    %c0_108 = arith.constant 0 : index
    %159 = vector.load %arg3[%c2_106, %c0_107, %c0_108] : memref<4x24x24xf32, #tpu.memory_space<vmem>>, vector<1x24x24xf32>
    %160 = vector.shape_cast %159 : vector<1x24x24xf32> to vector<24x24xf32>
    %cst_109 = arith.constant dense<0.000000e+00> : vector<8x24xf32>
    %161 = tpu.matmul %135, %160, %cst_109 {dimension_numbers = #tpu.dot_dimension_numbers<[1], [0], [0], [1], [0, 0, 1, 1], [], []>} : vector<8x24xf32>, vector<24x24xf32>, vector<8x24xf32> -> vector<8x24xf32>
    %162 = arith.addf %158, %161 : vector<8x24xf32>
    %163 = arith.index_cast %144 : i32 to index
    %c0_110 = arith.constant 0 : index
    %164 = vector.load %arg11[%163, %c0_110] : memref<56x24xf32, #tpu.memory_space<vmem>>, vector<8x24xf32>
    %c3_111 = arith.constant 3 : index
    %c0_112 = arith.constant 0 : index
    %c0_113 = arith.constant 0 : index
    %165 = vector.load %arg3[%c3_111, %c0_112, %c0_113] : memref<4x24x24xf32, #tpu.memory_space<vmem>>, vector<1x24x24xf32>
    %166 = vector.shape_cast %165 : vector<1x24x24xf32> to vector<24x24xf32>
    %cst_114 = arith.constant dense<0.000000e+00> : vector<8x24xf32>
    %167 = tpu.matmul %135, %166, %cst_114 {dimension_numbers = #tpu.dot_dimension_numbers<[1], [0], [0], [1], [0, 0, 1, 1], [], []>} : vector<8x24xf32>, vector<24x24xf32>, vector<8x24xf32> -> vector<8x24xf32>
    %168 = arith.addf %164, %167 : vector<8x24xf32>
    %169 = arith.negf %150 : vector<8x24xf32>
    %170 = math.exp %169 : vector<8x24xf32>
    %cst_115 = arith.constant 1.000000e+00 : f32
    %171 = vector.broadcast %cst_115 : f32 to vector<8x24xf32>
    %172 = arith.addf %171, %170 : vector<8x24xf32>
    %173 = arith.divf %171, %172 : vector<8x24xf32>
    %174 = arith.negf %156 : vector<8x24xf32>
    %175 = math.exp %174 : vector<8x24xf32>
    %cst_116 = arith.constant 1.000000e+00 : f32
    %176 = vector.broadcast %cst_116 : f32 to vector<8x24xf32>
    %177 = arith.addf %176, %175 : vector<8x24xf32>
    %178 = arith.divf %176, %177 : vector<8x24xf32>
    %179 = math.tanh %162 : vector<8x24xf32>
    %180 = arith.negf %168 : vector<8x24xf32>
    %181 = math.exp %180 : vector<8x24xf32>
    %cst_117 = arith.constant 1.000000e+00 : f32
    %182 = vector.broadcast %cst_117 : f32 to vector<8x24xf32>
    %183 = arith.addf %182, %181 : vector<8x24xf32>
    %184 = arith.divf %182, %183 : vector<8x24xf32>
    %185 = arith.mulf %178, %133 : vector<8x24xf32>
    %186 = arith.mulf %173, %179 : vector<8x24xf32>
    %187 = arith.addf %185, %186 : vector<8x24xf32>
    %188 = math.tanh %187 : vector<8x24xf32>
    %189 = arith.mulf %184, %188 : vector<8x24xf32>
    %c0_118 = arith.constant 0 : index
    %c0_119 = arith.constant 0 : index
    %190 = vector.load %arg5[%c0_118, %c0_119] : memref<24x128xf32, #tpu.memory_space<vmem>>, vector<24x128xf32>
    %cst_120 = arith.constant dense<0.000000e+00> : vector<8x128xf32>
    %191 = tpu.matmul %189, %190, %cst_120 {dimension_numbers = #tpu.dot_dimension_numbers<[1], [0], [0], [1], [0, 0, 1, 1], [], []>} : vector<8x24xf32>, vector<24x128xf32>, vector<8x128xf32> -> vector<8x128xf32>
    %c0_121 = arith.constant 0 : index
    %c0_122 = arith.constant 0 : index
    %192 = vector.load %arg6[%c0_121, %c0_122] : memref<1x128xf32, #tpu.memory_space<vmem>>, vector<1x128xf32>
    %193 = vector.broadcast %192 : vector<1x128xf32> to vector<8x128xf32>
    %194 = arith.addf %191, %193 : vector<8x128xf32>
    %195 = arith.index_cast %144 : i32 to index
    %c0_123 = arith.constant 0 : index
    %196 = vector.load %arg7[%195, %c0_123] : memref<56x128xf32, #tpu.memory_space<vmem>>, vector<8x128xf32>
    tpu.vector_store %arg7[%195, %c0_123], %194 {strides = array<i32>} : memref<56x128xf32, #tpu.memory_space<vmem>>, vector<8x128xf32>,
    %c3_i32 = arith.constant 3 : i32
    %c8_i32_124 = arith.constant 8 : i32
    %197 = arith.muli %c3_i32, %c8_i32_124 : i32
    %198 = tpu.assume_multiple %197, 8 : i32
    %199 = arith.index_cast %198 : i32 to index
    %c0_125 = arith.constant 0 : index
    %200 = vector.load %arg8[%199, %c0_125] : memref<56x24xf32, #tpu.memory_space<vmem>>, vector<8x24xf32>
    %c0_126 = arith.constant 0 : index
    %c0_127 = arith.constant 0 : index
    %c0_128 = arith.constant 0 : index
    %201 = vector.load %arg3[%c0_126, %c0_127, %c0_128] : memref<4x24x24xf32, #tpu.memory_space<vmem>>, vector<1x24x24xf32>
    %202 = vector.shape_cast %201 : vector<1x24x24xf32> to vector<24x24xf32>
    %cst_129 = arith.constant dense<0.000000e+00> : vector<8x24xf32>
    %203 = tpu.matmul %189, %202, %cst_129 {dimension_numbers = #tpu.dot_dimension_numbers<[1], [0], [0], [1], [0, 0, 1, 1], [], []>} : vector<8x24xf32>, vector<24x24xf32>, vector<8x24xf32> -> vector<8x24xf32>
    %204 = arith.addf %200, %203 : vector<8x24xf32>
    %205 = arith.index_cast %198 : i32 to index
    %c0_130 = arith.constant 0 : index
    %206 = vector.load %arg9[%205, %c0_130] : memref<56x24xf32, #tpu.memory_space<vmem>>, vector<8x24xf32>
    %c1_131 = arith.constant 1 : index
    %c0_132 = arith.constant 0 : index
    %c0_133 = arith.constant 0 : index
    %207 = vector.load %arg3[%c1_131, %c0_132, %c0_133] : memref<4x24x24xf32, #tpu.memory_space<vmem>>, vector<1x24x24xf32>
    %208 = vector.shape_cast %207 : vector<1x24x24xf32> to vector<24x24xf32>
    %cst_134 = arith.constant dense<0.000000e+00> : vector<8x24xf32>
    %209 = tpu.matmul %189, %208, %cst_134 {dimension_numbers = #tpu.dot_dimension_numbers<[1], [0], [0], [1], [0, 0, 1, 1], [], []>} : vector<8x24xf32>, vector<24x24xf32>, vector<8x24xf32> -> vector<8x24xf32>
    %210 = arith.addf %206, %209 : vector<8x24xf32>
    %211 = arith.index_cast %198 : i32 to index
    %c0_135 = arith.constant 0 : index
    %212 = vector.load %arg10[%211, %c0_135] : memref<56x24xf32, #tpu.memory_space<vmem>>, vector<8x24xf32>
    %c2_136 = arith.constant 2 : index
    %c0_137 = arith.constant 0 : index
    %c0_138 = arith.constant 0 : index
    %213 = vector.load %arg3[%c2_136, %c0_137, %c0_138] : memref<4x24x24xf32, #tpu.memory_space<vmem>>, vector<1x24x24xf32>
    %214 = vector.shape_cast %213 : vector<1x24x24xf32> to vector<24x24xf32>
    %cst_139 = arith.constant dense<0.000000e+00> : vector<8x24xf32>
    %215 = tpu.matmul %189, %214, %cst_139 {dimension_numbers = #tpu.dot_dimension_numbers<[1], [0], [0], [1], [0, 0, 1, 1], [], []>} : vector<8x24xf32>, vector<24x24xf32>, vector<8x24xf32> -> vector<8x24xf32>
    %216 = arith.addf %212, %215 : vector<8x24xf32>
    %217 = arith.index_cast %198 : i32 to index
    %c0_140 = arith.constant 0 : index
    %218 = vector.load %arg11[%217, %c0_140] : memref<56x24xf32, #tpu.memory_space<vmem>>, vector<8x24xf32>
    %c3_141 = arith.constant 3 : index
    %c0_142 = arith.constant 0 : index
    %c0_143 = arith.constant 0 : index
    %219 = vector.load %arg3[%c3_141, %c0_142, %c0_143] : memref<4x24x24xf32, #tpu.memory_space<vmem>>, vector<1x24x24xf32>
    %220 = vector.shape_cast %219 : vector<1x24x24xf32> to vector<24x24xf32>
    %cst_144 = arith.constant dense<0.000000e+00> : vector<8x24xf32>
    %221 = tpu.matmul %189, %220, %cst_144 {dimension_numbers = #tpu.dot_dimension_numbers<[1], [0], [0], [1], [0, 0, 1, 1], [], []>} : vector<8x24xf32>, vector<24x24xf32>, vector<8x24xf32> -> vector<8x24xf32>
    %222 = arith.addf %218, %221 : vector<8x24xf32>
    %223 = arith.negf %204 : vector<8x24xf32>
    %224 = math.exp %223 : vector<8x24xf32>
    %cst_145 = arith.constant 1.000000e+00 : f32
    %225 = vector.broadcast %cst_145 : f32 to vector<8x24xf32>
    %226 = arith.addf %225, %224 : vector<8x24xf32>
    %227 = arith.divf %225, %226 : vector<8x24xf32>
    %228 = arith.negf %210 : vector<8x24xf32>
    %229 = math.exp %228 : vector<8x24xf32>
    %cst_146 = arith.constant 1.000000e+00 : f32
    %230 = vector.broadcast %cst_146 : f32 to vector<8x24xf32>
    %231 = arith.addf %230, %229 : vector<8x24xf32>
    %232 = arith.divf %230, %231 : vector<8x24xf32>
    %233 = math.tanh %216 : vector<8x24xf32>
    %234 = arith.negf %222 : vector<8x24xf32>
    %235 = math.exp %234 : vector<8x24xf32>
    %cst_147 = arith.constant 1.000000e+00 : f32
    %236 = vector.broadcast %cst_147 : f32 to vector<8x24xf32>
    %237 = arith.addf %236, %235 : vector<8x24xf32>
    %238 = arith.divf %236, %237 : vector<8x24xf32>
    %239 = arith.mulf %232, %187 : vector<8x24xf32>
    %240 = arith.mulf %227, %233 : vector<8x24xf32>
    %241 = arith.addf %239, %240 : vector<8x24xf32>
    %242 = math.tanh %241 : vector<8x24xf32>
    %243 = arith.mulf %238, %242 : vector<8x24xf32>
    %c0_148 = arith.constant 0 : index
    %c0_149 = arith.constant 0 : index
    %244 = vector.load %arg5[%c0_148, %c0_149] : memref<24x128xf32, #tpu.memory_space<vmem>>, vector<24x128xf32>
    %cst_150 = arith.constant dense<0.000000e+00> : vector<8x128xf32>
    %245 = tpu.matmul %243, %244, %cst_150 {dimension_numbers = #tpu.dot_dimension_numbers<[1], [0], [0], [1], [0, 0, 1, 1], [], []>} : vector<8x24xf32>, vector<24x128xf32>, vector<8x128xf32> -> vector<8x128xf32>
    %c0_151 = arith.constant 0 : index
    %c0_152 = arith.constant 0 : index
    %246 = vector.load %arg6[%c0_151, %c0_152] : memref<1x128xf32, #tpu.memory_space<vmem>>, vector<1x128xf32>
    %247 = vector.broadcast %246 : vector<1x128xf32> to vector<8x128xf32>
    %248 = arith.addf %245, %247 : vector<8x128xf32>
    %249 = arith.index_cast %198 : i32 to index
    %c0_153 = arith.constant 0 : index
    %250 = vector.load %arg7[%249, %c0_153] : memref<56x128xf32, #tpu.memory_space<vmem>>, vector<8x128xf32>
    tpu.vector_store %arg7[%249, %c0_153], %248 {strides = array<i32>} : memref<56x128xf32, #tpu.memory_space<vmem>>, vector<8x128xf32>,
    %c4_i32 = arith.constant 4 : i32
    %c8_i32_154 = arith.constant 8 : i32
    %251 = arith.muli %c4_i32, %c8_i32_154 : i32
    %252 = tpu.assume_multiple %251, 8 : i32
    %253 = arith.index_cast %252 : i32 to index
    %c0_155 = arith.constant 0 : index
    %254 = vector.load %arg8[%253, %c0_155] : memref<56x24xf32, #tpu.memory_space<vmem>>, vector<8x24xf32>
    %c0_156 = arith.constant 0 : index
    %c0_157 = arith.constant 0 : index
    %c0_158 = arith.constant 0 : index
    %255 = vector.load %arg3[%c0_156, %c0_157, %c0_158] : memref<4x24x24xf32, #tpu.memory_space<vmem>>, vector<1x24x24xf32>
    %256 = vector.shape_cast %255 : vector<1x24x24xf32> to vector<24x24xf32>
    %cst_159 = arith.constant dense<0.000000e+00> : vector<8x24xf32>
    %257 = tpu.matmul %243, %256, %cst_159 {dimension_numbers = #tpu.dot_dimension_numbers<[1], [0], [0], [1], [0, 0, 1, 1], [], []>} : vector<8x24xf32>, vector<24x24xf32>, vector<8x24xf32> -> vector<8x24xf32>
    %258 = arith.addf %254, %257 : vector<8x24xf32>
    %259 = arith.index_cast %252 : i32 to index
    %c0_160 = arith.constant 0 : index
    %260 = vector.load %arg9[%259, %c0_160] : memref<56x24xf32, #tpu.memory_space<vmem>>, vector<8x24xf32>
    %c1_161 = arith.constant 1 : index
    %c0_162 = arith.constant 0 : index
    %c0_163 = arith.constant 0 : index
    %261 = vector.load %arg3[%c1_161, %c0_162, %c0_163] : memref<4x24x24xf32, #tpu.memory_space<vmem>>, vector<1x24x24xf32>
    %262 = vector.shape_cast %261 : vector<1x24x24xf32> to vector<24x24xf32>
    %cst_164 = arith.constant dense<0.000000e+00> : vector<8x24xf32>
    %263 = tpu.matmul %243, %262, %cst_164 {dimension_numbers = #tpu.dot_dimension_numbers<[1], [0], [0], [1], [0, 0, 1, 1], [], []>} : vector<8x24xf32>, vector<24x24xf32>, vector<8x24xf32> -> vector<8x24xf32>
    %264 = arith.addf %260, %263 : vector<8x24xf32>
    %265 = arith.index_cast %252 : i32 to index
    %c0_165 = arith.constant 0 : index
    %266 = vector.load %arg10[%265, %c0_165] : memref<56x24xf32, #tpu.memory_space<vmem>>, vector<8x24xf32>
    %c2_166 = arith.constant 2 : index
    %c0_167 = arith.constant 0 : index
    %c0_168 = arith.constant 0 : index
    %267 = vector.load %arg3[%c2_166, %c0_167, %c0_168] : memref<4x24x24xf32, #tpu.memory_space<vmem>>, vector<1x24x24xf32>
    %268 = vector.shape_cast %267 : vector<1x24x24xf32> to vector<24x24xf32>
    %cst_169 = arith.constant dense<0.000000e+00> : vector<8x24xf32>
    %269 = tpu.matmul %243, %268, %cst_169 {dimension_numbers = #tpu.dot_dimension_numbers<[1], [0], [0], [1], [0, 0, 1, 1], [], []>} : vector<8x24xf32>, vector<24x24xf32>, vector<8x24xf32> -> vector<8x24xf32>
    %270 = arith.addf %266, %269 : vector<8x24xf32>
    %271 = arith.index_cast %252 : i32 to index
    %c0_170 = arith.constant 0 : index
    %272 = vector.load %arg11[%271, %c0_170] : memref<56x24xf32, #tpu.memory_space<vmem>>, vector<8x24xf32>
    %c3_171 = arith.constant 3 : index
    %c0_172 = arith.constant 0 : index
    %c0_173 = arith.constant 0 : index
    %273 = vector.load %arg3[%c3_171, %c0_172, %c0_173] : memref<4x24x24xf32, #tpu.memory_space<vmem>>, vector<1x24x24xf32>
    %274 = vector.shape_cast %273 : vector<1x24x24xf32> to vector<24x24xf32>
    %cst_174 = arith.constant dense<0.000000e+00> : vector<8x24xf32>
    %275 = tpu.matmul %243, %274, %cst_174 {dimension_numbers = #tpu.dot_dimension_numbers<[1], [0], [0], [1], [0, 0, 1, 1], [], []>} : vector<8x24xf32>, vector<24x24xf32>, vector<8x24xf32> -> vector<8x24xf32>
    %276 = arith.addf %272, %275 : vector<8x24xf32>
    %277 = arith.negf %258 : vector<8x24xf32>
    %278 = math.exp %277 : vector<8x24xf32>
    %cst_175 = arith.constant 1.000000e+00 : f32
    %279 = vector.broadcast %cst_175 : f32 to vector<8x24xf32>
    %280 = arith.addf %279, %278 : vector<8x24xf32>
    %281 = arith.divf %279, %280 : vector<8x24xf32>
    %282 = arith.negf %264 : vector<8x24xf32>
    %283 = math.exp %282 : vector<8x24xf32>
    %cst_176 = arith.constant 1.000000e+00 : f32
    %284 = vector.broadcast %cst_176 : f32 to vector<8x24xf32>
    %285 = arith.addf %284, %283 : vector<8x24xf32>
    %286 = arith.divf %284, %285 : vector<8x24xf32>
    %287 = math.tanh %270 : vector<8x24xf32>
    %288 = arith.negf %276 : vector<8x24xf32>
    %289 = math.exp %288 : vector<8x24xf32>
    %cst_177 = arith.constant 1.000000e+00 : f32
    %290 = vector.broadcast %cst_177 : f32 to vector<8x24xf32>
    %291 = arith.addf %290, %289 : vector<8x24xf32>
    %292 = arith.divf %290, %291 : vector<8x24xf32>
    %293 = arith.mulf %286, %241 : vector<8x24xf32>
    %294 = arith.mulf %281, %287 : vector<8x24xf32>
    %295 = arith.addf %293, %294 : vector<8x24xf32>
    %296 = math.tanh %295 : vector<8x24xf32>
    %297 = arith.mulf %292, %296 : vector<8x24xf32>
    %c0_178 = arith.constant 0 : index
    %c0_179 = arith.constant 0 : index
    %298 = vector.load %arg5[%c0_178, %c0_179] : memref<24x128xf32, #tpu.memory_space<vmem>>, vector<24x128xf32>
    %cst_180 = arith.constant dense<0.000000e+00> : vector<8x128xf32>
    %299 = tpu.matmul %297, %298, %cst_180 {dimension_numbers = #tpu.dot_dimension_numbers<[1], [0], [0], [1], [0, 0, 1, 1], [], []>} : vector<8x24xf32>, vector<24x128xf32>, vector<8x128xf32> -> vector<8x128xf32>
    %c0_181 = arith.constant 0 : index
    %c0_182 = arith.constant 0 : index
    %300 = vector.load %arg6[%c0_181, %c0_182] : memref<1x128xf32, #tpu.memory_space<vmem>>, vector<1x128xf32>
    %301 = vector.broadcast %300 : vector<1x128xf32> to vector<8x128xf32>
    %302 = arith.addf %299, %301 : vector<8x128xf32>
    %303 = arith.index_cast %252 : i32 to index
    %c0_183 = arith.constant 0 : index
    %304 = vector.load %arg7[%303, %c0_183] : memref<56x128xf32, #tpu.memory_space<vmem>>, vector<8x128xf32>
    tpu.vector_store %arg7[%303, %c0_183], %302 {strides = array<i32>} : memref<56x128xf32, #tpu.memory_space<vmem>>, vector<8x128xf32>,
    %c5_i32 = arith.constant 5 : i32
    %c8_i32_184 = arith.constant 8 : i32
    %305 = arith.muli %c5_i32, %c8_i32_184 : i32
    %306 = tpu.assume_multiple %305, 8 : i32
    %307 = arith.index_cast %306 : i32 to index
    %c0_185 = arith.constant 0 : index
    %308 = vector.load %arg8[%307, %c0_185] : memref<56x24xf32, #tpu.memory_space<vmem>>, vector<8x24xf32>
    %c0_186 = arith.constant 0 : index
    %c0_187 = arith.constant 0 : index
    %c0_188 = arith.constant 0 : index
    %309 = vector.load %arg3[%c0_186, %c0_187, %c0_188] : memref<4x24x24xf32, #tpu.memory_space<vmem>>, vector<1x24x24xf32>
    %310 = vector.shape_cast %309 : vector<1x24x24xf32> to vector<24x24xf32>
    %cst_189 = arith.constant dense<0.000000e+00> : vector<8x24xf32>
    %311 = tpu.matmul %297, %310, %cst_189 {dimension_numbers = #tpu.dot_dimension_numbers<[1], [0], [0], [1], [0, 0, 1, 1], [], []>} : vector<8x24xf32>, vector<24x24xf32>, vector<8x24xf32> -> vector<8x24xf32>
    %312 = arith.addf %308, %311 : vector<8x24xf32>
    %313 = arith.index_cast %306 : i32 to index
    %c0_190 = arith.constant 0 : index
    %314 = vector.load %arg9[%313, %c0_190] : memref<56x24xf32, #tpu.memory_space<vmem>>, vector<8x24xf32>
    %c1_191 = arith.constant 1 : index
    %c0_192 = arith.constant 0 : index
    %c0_193 = arith.constant 0 : index
    %315 = vector.load %arg3[%c1_191, %c0_192, %c0_193] : memref<4x24x24xf32, #tpu.memory_space<vmem>>, vector<1x24x24xf32>
    %316 = vector.shape_cast %315 : vector<1x24x24xf32> to vector<24x24xf32>
    %cst_194 = arith.constant dense<0.000000e+00> : vector<8x24xf32>
    %317 = tpu.matmul %297, %316, %cst_194 {dimension_numbers = #tpu.dot_dimension_numbers<[1], [0], [0], [1], [0, 0, 1, 1], [], []>} : vector<8x24xf32>, vector<24x24xf32>, vector<8x24xf32> -> vector<8x24xf32>
    %318 = arith.addf %314, %317 : vector<8x24xf32>
    %319 = arith.index_cast %306 : i32 to index
    %c0_195 = arith.constant 0 : index
    %320 = vector.load %arg10[%319, %c0_195] : memref<56x24xf32, #tpu.memory_space<vmem>>, vector<8x24xf32>
    %c2_196 = arith.constant 2 : index
    %c0_197 = arith.constant 0 : index
    %c0_198 = arith.constant 0 : index
    %321 = vector.load %arg3[%c2_196, %c0_197, %c0_198] : memref<4x24x24xf32, #tpu.memory_space<vmem>>, vector<1x24x24xf32>
    %322 = vector.shape_cast %321 : vector<1x24x24xf32> to vector<24x24xf32>
    %cst_199 = arith.constant dense<0.000000e+00> : vector<8x24xf32>
    %323 = tpu.matmul %297, %322, %cst_199 {dimension_numbers = #tpu.dot_dimension_numbers<[1], [0], [0], [1], [0, 0, 1, 1], [], []>} : vector<8x24xf32>, vector<24x24xf32>, vector<8x24xf32> -> vector<8x24xf32>
    %324 = arith.addf %320, %323 : vector<8x24xf32>
    %325 = arith.index_cast %306 : i32 to index
    %c0_200 = arith.constant 0 : index
    %326 = vector.load %arg11[%325, %c0_200] : memref<56x24xf32, #tpu.memory_space<vmem>>, vector<8x24xf32>
    %c3_201 = arith.constant 3 : index
    %c0_202 = arith.constant 0 : index
    %c0_203 = arith.constant 0 : index
    %327 = vector.load %arg3[%c3_201, %c0_202, %c0_203] : memref<4x24x24xf32, #tpu.memory_space<vmem>>, vector<1x24x24xf32>
    %328 = vector.shape_cast %327 : vector<1x24x24xf32> to vector<24x24xf32>
    %cst_204 = arith.constant dense<0.000000e+00> : vector<8x24xf32>
    %329 = tpu.matmul %297, %328, %cst_204 {dimension_numbers = #tpu.dot_dimension_numbers<[1], [0], [0], [1], [0, 0, 1, 1], [], []>} : vector<8x24xf32>, vector<24x24xf32>, vector<8x24xf32> -> vector<8x24xf32>
    %330 = arith.addf %326, %329 : vector<8x24xf32>
    %331 = arith.negf %312 : vector<8x24xf32>
    %332 = math.exp %331 : vector<8x24xf32>
    %cst_205 = arith.constant 1.000000e+00 : f32
    %333 = vector.broadcast %cst_205 : f32 to vector<8x24xf32>
    %334 = arith.addf %333, %332 : vector<8x24xf32>
    %335 = arith.divf %333, %334 : vector<8x24xf32>
    %336 = arith.negf %318 : vector<8x24xf32>
    %337 = math.exp %336 : vector<8x24xf32>
    %cst_206 = arith.constant 1.000000e+00 : f32
    %338 = vector.broadcast %cst_206 : f32 to vector<8x24xf32>
    %339 = arith.addf %338, %337 : vector<8x24xf32>
    %340 = arith.divf %338, %339 : vector<8x24xf32>
    %341 = math.tanh %324 : vector<8x24xf32>
    %342 = arith.negf %330 : vector<8x24xf32>
    %343 = math.exp %342 : vector<8x24xf32>
    %cst_207 = arith.constant 1.000000e+00 : f32
    %344 = vector.broadcast %cst_207 : f32 to vector<8x24xf32>
    %345 = arith.addf %344, %343 : vector<8x24xf32>
    %346 = arith.divf %344, %345 : vector<8x24xf32>
    %347 = arith.mulf %340, %295 : vector<8x24xf32>
    %348 = arith.mulf %335, %341 : vector<8x24xf32>
    %349 = arith.addf %347, %348 : vector<8x24xf32>
    %350 = math.tanh %349 : vector<8x24xf32>
    %351 = arith.mulf %346, %350 : vector<8x24xf32>
    %c0_208 = arith.constant 0 : index
    %c0_209 = arith.constant 0 : index
    %352 = vector.load %arg5[%c0_208, %c0_209] : memref<24x128xf32, #tpu.memory_space<vmem>>, vector<24x128xf32>
    %cst_210 = arith.constant dense<0.000000e+00> : vector<8x128xf32>
    %353 = tpu.matmul %351, %352, %cst_210 {dimension_numbers = #tpu.dot_dimension_numbers<[1], [0], [0], [1], [0, 0, 1, 1], [], []>} : vector<8x24xf32>, vector<24x128xf32>, vector<8x128xf32> -> vector<8x128xf32>
    %c0_211 = arith.constant 0 : index
    %c0_212 = arith.constant 0 : index
    %354 = vector.load %arg6[%c0_211, %c0_212] : memref<1x128xf32, #tpu.memory_space<vmem>>, vector<1x128xf32>
    %355 = vector.broadcast %354 : vector<1x128xf32> to vector<8x128xf32>
    %356 = arith.addf %353, %355 : vector<8x128xf32>
    %357 = arith.index_cast %306 : i32 to index
    %c0_213 = arith.constant 0 : index
    %358 = vector.load %arg7[%357, %c0_213] : memref<56x128xf32, #tpu.memory_space<vmem>>, vector<8x128xf32>
    tpu.vector_store %arg7[%357, %c0_213], %356 {strides = array<i32>} : memref<56x128xf32, #tpu.memory_space<vmem>>, vector<8x128xf32>,
    %c6_i32 = arith.constant 6 : i32
    %c8_i32_214 = arith.constant 8 : i32
    %359 = arith.muli %c6_i32, %c8_i32_214 : i32
    %360 = tpu.assume_multiple %359, 8 : i32
    %361 = arith.index_cast %360 : i32 to index
    %c0_215 = arith.constant 0 : index
    %362 = vector.load %arg8[%361, %c0_215] : memref<56x24xf32, #tpu.memory_space<vmem>>, vector<8x24xf32>
    %c0_216 = arith.constant 0 : index
    %c0_217 = arith.constant 0 : index
    %c0_218 = arith.constant 0 : index
    %363 = vector.load %arg3[%c0_216, %c0_217, %c0_218] : memref<4x24x24xf32, #tpu.memory_space<vmem>>, vector<1x24x24xf32>
    %364 = vector.shape_cast %363 : vector<1x24x24xf32> to vector<24x24xf32>
    %cst_219 = arith.constant dense<0.000000e+00> : vector<8x24xf32>
    %365 = tpu.matmul %351, %364, %cst_219 {dimension_numbers = #tpu.dot_dimension_numbers<[1], [0], [0], [1], [0, 0, 1, 1], [], []>} : vector<8x24xf32>, vector<24x24xf32>, vector<8x24xf32> -> vector<8x24xf32>
    %366 = arith.addf %362, %365 : vector<8x24xf32>
    %367 = arith.index_cast %360 : i32 to index
    %c0_220 = arith.constant 0 : index
    %368 = vector.load %arg9[%367, %c0_220] : memref<56x24xf32, #tpu.memory_space<vmem>>, vector<8x24xf32>
    %c1_221 = arith.constant 1 : index
    %c0_222 = arith.constant 0 : index
    %c0_223 = arith.constant 0 : index
    %369 = vector.load %arg3[%c1_221, %c0_222, %c0_223] : memref<4x24x24xf32, #tpu.memory_space<vmem>>, vector<1x24x24xf32>
    %370 = vector.shape_cast %369 : vector<1x24x24xf32> to vector<24x24xf32>
    %cst_224 = arith.constant dense<0.000000e+00> : vector<8x24xf32>
    %371 = tpu.matmul %351, %370, %cst_224 {dimension_numbers = #tpu.dot_dimension_numbers<[1], [0], [0], [1], [0, 0, 1, 1], [], []>} : vector<8x24xf32>, vector<24x24xf32>, vector<8x24xf32> -> vector<8x24xf32>
    %372 = arith.addf %368, %371 : vector<8x24xf32>
    %373 = arith.index_cast %360 : i32 to index
    %c0_225 = arith.constant 0 : index
    %374 = vector.load %arg10[%373, %c0_225] : memref<56x24xf32, #tpu.memory_space<vmem>>, vector<8x24xf32>
    %c2_226 = arith.constant 2 : index
    %c0_227 = arith.constant 0 : index
    %c0_228 = arith.constant 0 : index
    %375 = vector.load %arg3[%c2_226, %c0_227, %c0_228] : memref<4x24x24xf32, #tpu.memory_space<vmem>>, vector<1x24x24xf32>
    %376 = vector.shape_cast %375 : vector<1x24x24xf32> to vector<24x24xf32>
    %cst_229 = arith.constant dense<0.000000e+00> : vector<8x24xf32>
    %377 = tpu.matmul %351, %376, %cst_229 {dimension_numbers = #tpu.dot_dimension_numbers<[1], [0], [0], [1], [0, 0, 1, 1], [], []>} : vector<8x24xf32>, vector<24x24xf32>, vector<8x24xf32> -> vector<8x24xf32>
    %378 = arith.addf %374, %377 : vector<8x24xf32>
    %379 = arith.index_cast %360 : i32 to index
    %c0_230 = arith.constant 0 : index
    %380 = vector.load %arg11[%379, %c0_230] : memref<56x24xf32, #tpu.memory_space<vmem>>, vector<8x24xf32>
    %c3_231 = arith.constant 3 : index
    %c0_232 = arith.constant 0 : index
    %c0_233 = arith.constant 0 : index
    %381 = vector.load %arg3[%c3_231, %c0_232, %c0_233] : memref<4x24x24xf32, #tpu.memory_space<vmem>>, vector<1x24x24xf32>
    %382 = vector.shape_cast %381 : vector<1x24x24xf32> to vector<24x24xf32>
    %cst_234 = arith.constant dense<0.000000e+00> : vector<8x24xf32>
    %383 = tpu.matmul %351, %382, %cst_234 {dimension_numbers = #tpu.dot_dimension_numbers<[1], [0], [0], [1], [0, 0, 1, 1], [], []>} : vector<8x24xf32>, vector<24x24xf32>, vector<8x24xf32> -> vector<8x24xf32>
    %384 = arith.addf %380, %383 : vector<8x24xf32>
    %385 = arith.negf %366 : vector<8x24xf32>
    %386 = math.exp %385 : vector<8x24xf32>
    %cst_235 = arith.constant 1.000000e+00 : f32
    %387 = vector.broadcast %cst_235 : f32 to vector<8x24xf32>
    %388 = arith.addf %387, %386 : vector<8x24xf32>
    %389 = arith.divf %387, %388 : vector<8x24xf32>
    %390 = arith.negf %372 : vector<8x24xf32>
    %391 = math.exp %390 : vector<8x24xf32>
    %cst_236 = arith.constant 1.000000e+00 : f32
    %392 = vector.broadcast %cst_236 : f32 to vector<8x24xf32>
    %393 = arith.addf %392, %391 : vector<8x24xf32>
    %394 = arith.divf %392, %393 : vector<8x24xf32>
    %395 = math.tanh %378 : vector<8x24xf32>
    %396 = arith.negf %384 : vector<8x24xf32>
    %397 = math.exp %396 : vector<8x24xf32>
    %cst_237 = arith.constant 1.000000e+00 : f32
    %398 = vector.broadcast %cst_237 : f32 to vector<8x24xf32>
    %399 = arith.addf %398, %397 : vector<8x24xf32>
    %400 = arith.divf %398, %399 : vector<8x24xf32>
    %401 = arith.mulf %394, %349 : vector<8x24xf32>
    %402 = arith.mulf %389, %395 : vector<8x24xf32>
    %403 = arith.addf %401, %402 : vector<8x24xf32>
    %404 = math.tanh %403 : vector<8x24xf32>
    %405 = arith.mulf %400, %404 : vector<8x24xf32>
    %c0_238 = arith.constant 0 : index
    %c0_239 = arith.constant 0 : index
    %406 = vector.load %arg5[%c0_238, %c0_239] : memref<24x128xf32, #tpu.memory_space<vmem>>, vector<24x128xf32>
    %cst_240 = arith.constant dense<0.000000e+00> : vector<8x128xf32>
    %407 = tpu.matmul %405, %406, %cst_240 {dimension_numbers = #tpu.dot_dimension_numbers<[1], [0], [0], [1], [0, 0, 1, 1], [], []>} : vector<8x24xf32>, vector<24x128xf32>, vector<8x128xf32> -> vector<8x128xf32>
    %c0_241 = arith.constant 0 : index
    %c0_242 = arith.constant 0 : index
    %408 = vector.load %arg6[%c0_241, %c0_242] : memref<1x128xf32, #tpu.memory_space<vmem>>, vector<1x128xf32>
    %409 = vector.broadcast %408 : vector<1x128xf32> to vector<8x128xf32>
    %410 = arith.addf %407, %409 : vector<8x128xf32>
    %411 = arith.index_cast %360 : i32 to index
    %c0_243 = arith.constant 0 : index
    %412 = vector.load %arg7[%411, %c0_243] : memref<56x128xf32, #tpu.memory_space<vmem>>, vector<8x128xf32>
    tpu.vector_store %arg7[%411, %c0_243], %410 {strides = array<i32>} : memref<56x128xf32, #tpu.memory_space<vmem>>, vector<8x128xf32>,
    %c7_i32 = arith.constant 7 : i32
    return
  }
  func.func @transform_0(%arg0: i32) -> (i32, i32) {
    %c0_i32 = arith.constant 0 : i32
    %c0_i32_0 = arith.constant 0 : i32
    %c0_i32_1 = arith.constant 0 : i32
    return %c0_i32, %c0_i32_0 : i32, i32
  }
  func.func @transform_1(%arg0: i32) -> (i32, i32, i32) {
    %c0_i32 = arith.constant 0 : i32
    %c0_i32_0 = arith.constant 0 : i32
    %c0_i32_1 = arith.constant 0 : i32
    %c0_i32_2 = arith.constant 0 : i32
    return %c0_i32, %c0_i32_0, %c0_i32_1 : i32, i32, i32
  }
  func.func @transform_2(%arg0: i32) -> (i32, i32, i32) {
    %c0_i32 = arith.constant 0 : i32
    %c0_i32_0 = arith.constant 0 : i32
    %c0_i32_1 = arith.constant 0 : i32
    %c0_i32_2 = arith.constant 0 : i32
    return %c0_i32, %c0_i32_0, %c0_i32_1 : i32, i32, i32
  }
  func.func @transform_3(%arg0: i32) -> (i32, i32, i32) {
    %c0_i32 = arith.constant 0 : i32
    %c0_i32_0 = arith.constant 0 : i32
    %c0_i32_1 = arith.constant 0 : i32
    %c0_i32_2 = arith.constant 0 : i32
    return %c0_i32, %c0_i32_0, %c0_i32_1 : i32, i32, i32
  }
  func.func @transform_4(%arg0: i32) -> (i32, i32) {
    %c0_i32 = arith.constant 0 : i32
    %c0_i32_0 = arith.constant 0 : i32
    %c0_i32_1 = arith.constant 0 : i32
    return %c0_i32, %c0_i32_0 : i32, i32
  }
  func.func @transform_5(%arg0: i32) -> (i32, i32) {
    %c0_i32 = arith.constant 0 : i32
    %c0_i32_0 = arith.constant 0 : i32
    %c0_i32_1 = arith.constant 0 : i32
    return %c0_i32, %c0_i32_0 : i32, i32
  }
  func.func @transform_6(%arg0: i32) -> (i32, i32) {
    %c0_i32 = arith.constant 0 : i32
    %c0_i32_0 = arith.constant 0 : i32
    %c0_i32_1 = arith.constant 0 : i32
    return %c0_i32, %c0_i32_0 : i32, i32
  }
}

</mosaic_0001>

<llo_original>
// kernel: tpu_custom_call.1
$region0: #{tpu_custom_call.1}
  #allocation0 [shape = 'u32[]', space=smem, size = 0x4, offset = 0x4, fixed_abs, tag = 'smem constant byte address 0x4 - core index']
  #allocation1 [shape = 'u32[144,128]{1,0:T(1,128)}', space=vmem, size = 0x12000, scoped, tag = 'internal scratch']
  #allocation2 [shape = 'f32[56,24]{1,0:T(8,128)}', space=vmem, size = 0x7000, scoped, tag = 'scratch operand']
  #allocation3 [shape = 'f32[56,24]{1,0:T(8,128)}', space=vmem, size = 0x7000, scoped, tag = 'scratch operand']
  #allocation4 [shape = 'f32[56,24]{1,0:T(8,128)}', space=vmem, size = 0x7000, scoped, tag = 'scratch operand']
  #allocation5 [shape = 'f32[56,24]{1,0:T(8,128)}', space=vmem, size = 0x7000, scoped, tag = 'scratch operand']
  %s0 = inlined_call_operand.vmem [shape: f32[56,8], index: 0, kind: input, shape index: {}]
  %s1 = inlined_call_operand.vmem [shape: f32[4,8,24], index: 1, kind: input, shape index: {}]
  %s2 = inlined_call_operand.hbm [shape: f32[4,24,24], index: 2, kind: input, shape index: {}]
  %s3 = inlined_call_operand.vmem [shape: f32[4,1,24], index: 3, kind: input, shape index: {}]
  %s4 = inlined_call_operand.vmem [shape: f32[24,128], index: 4, kind: input, shape index: {}]
  %s5 = inlined_call_operand.vmem [shape: f32[1,128], index: 5, kind: input, shape index: {}]
  %s6 = inlined_call_operand.hbm [shape: f32[56,128], index: 6, kind: output, shape index: {}]
  %s7 = sld [smem:[#allocation0]]
  $region38: #{tpu_custom_call.1} parent=0
    _
  %s9 = ssub.s32 1, %s7
  %s10 = scalar_select 0, %s9, %s7
  $region1: #{tpu_custom_call.1} parent=0
    #allocation6 [shape = 'u8[49152]{0}', space=vmem, size = 0xc000, scoped, tag = 'input window, operand 2, single buffered']
    #allocation7 [shape = 's32[1]{0}', space=sflag, size = 0x4, scoped, tag = 'scoped memory for tpu_custom_call.1']
    #allocation8 [shape = 's32[1]{0}', space=sflag, size = 0x4, scoped, tag = 'scoped memory for tpu_custom_call.1']
    #allocation9 [shape = 'u8[28672]{0}', space=vmem, size = 0x7000, scoped, tag = 'output window, operand 0, single buffered']
    %11 = vsyncpa [#allocation7], 0
    %12 = vsyncpa [#allocation8], 0
    // Predicated region
    $region2: #{tpu_custom_call.1} parent=1 // pred_check
      _
    $region3: #{tpu_custom_call.1} parent=1 // pred_check_branch
      %14 = sbr.rel (0) target = $region5
    $region4: #{tpu_custom_call.1} parent=1 // pred_region
      _
    $region5: #{tpu_custom_call.1} parent=1 // pred_fallthru
      _
    // Predicated region
    $region6: #{tpu_custom_call.1} parent=1 // pred_check
      _
    $region7: #{tpu_custom_call.1} parent=1 // pred_check_branch
      %16 = sbr.rel (0) target = $region9
    $region8: #{tpu_custom_call.1} parent=1 // pred_region
      _
    $region9: #{tpu_custom_call.1} parent=1 // pred_fallthru
      _
    // Predicated region
    $region10: #{tpu_custom_call.1} parent=1 // pred_check
      _
    $region11: #{tpu_custom_call.1} parent=1 // pred_check_branch
      %18 = sbr.rel (0) target = $region13
    $region12: #{tpu_custom_call.1} parent=1 // pred_region
      %s20 = ssub.s32 1536, 1536
      %21 = vsyncadd [#allocation7], %s20
      %s22 = sshll.u32 [#allocation6], 4
      %s23 = int_to_ptr.vmem [resolvable:$true] %s22
      %28 = dma.hbm_to_vmem [thread:$0]  %s2, 1536, %s23, [#allocation7], 128, 128, 8
    $region13: #{tpu_custom_call.1} parent=1 // pred_fallthru
      _
    // Predicated region
    $region14: #{tpu_custom_call.1} parent=1 // pred_check
      _
    $region15: #{tpu_custom_call.1} parent=1 // pred_check_branch
      %30 = sbr.rel (0) target = $region17
    $region16: #{tpu_custom_call.1} parent=1 // pred_region
      _
    $region17: #{tpu_custom_call.1} parent=1 // pred_fallthru
      _
    // Predicated region
    $region18: #{tpu_custom_call.1} parent=1 // pred_check
      _
    $region19: #{tpu_custom_call.1} parent=1 // pred_check_branch
      %32 = sbr.rel (0) target = $region21
    $region20: #{tpu_custom_call.1} parent=1 // pred_region
      _
    $region21: #{tpu_custom_call.1} parent=1 // pred_fallthru
      _
    // Predicated region
    $region22: #{tpu_custom_call.1} parent=1 // pred_check
      _
    $region23: #{tpu_custom_call.1} parent=1 // pred_check_branch
      %34 = sbr.rel (0) target = $region25
    $region24: #{tpu_custom_call.1} parent=1 // pred_region
      _
    $region25: #{tpu_custom_call.1} parent=1 // pred_fallthru
      _
    // Predicated region
    $region26: #{tpu_custom_call.1} parent=1 // pred_check
      _
    $region27: #{tpu_custom_call.1} parent=1 // pred_check_branch
      %36 = sbr.rel (0) target = $region29
    $region28: #{tpu_custom_call.1} parent=1 // pred_region
      %37 = dma.done [#allocation7], 1536
    $region29: #{tpu_custom_call.1} parent=1 // pred_fallthru
      _
    %v38 = vld [vmem:[%s0] sm:$0xff]
    %v39 = vld [vmem:[%s0 + $0x8] sm:$0xff]
    %v40 = vld [vmem:[%s0 + $0x10] sm:$0xff]
    %v41 = vld [vmem:[%s0 + $0x18] sm:$0xff]
    %v42 = vld [vmem:[%s0 + $0x20] sm:$0xff]
    %v43 = vld [vmem:[%s0 + $0x28] sm:$0xff]
    %v44 = vld [vmem:[%s0 + $0x30] sm:$0xff]
    %v45 = vld [vmem:[%s1] sm:$0xff]
    %v46 = vld [vmem:[%s3] sm:$0x1]
    %v48 = vlaneseq
    %v49 = vshrl.u32 %v48, 7
    %v50 = vsub.s32 0, %v49
    %v51 = vrot.slane %v46, %v50
    %vm53 = vcmask 64512
    %v55 = vsel %vm53, %v38, 0
    %v58 = vsel %vm53, %v39, 0
    %v61 = vsel %vm53, %v40, 0
    %v64 = vsel %vm53, %v41, 0
    %v67 = vsel %vm53, %v42, 0
    %v70 = vsel %vm53, %v43, 0
    %v73 = vsel %vm53, %v44, 0
    %75 = vmatprep.subr.mxu0 0.0
    %76 = vmatpush1.msra.mxu0 %v45
    %77 = vmatprep.subr.mxu0 0.0
    %78 = vmatpush1.msra.mxu0 0.0
    %79 = vmatprep.subr.mxu0 0.0
    %80 = vmatpush1.msra.mxu0 0.0
    %81 = vmatprep.subr.mxu0 0.0
    %82 = vmatpush1.msra.mxu0 0.0
    %83 = vmatprep.subr.mxu0 0.0
    %84 = vmatpush1.msra.mxu0 0.0
    %85 = vmatprep.subr.mxu0 0.0
    %86 = vmatpush1.msra.mxu0 0.0
    %87 = vmatprep.subr.mxu0 0.0
    %88 = vmatpush1.msra.mxu0 0.0
    %89 = vmatprep.subr.mxu0 0.0
    %90 = vmatpush1.msra.mxu0 0.0
    %91 = vmatprep.subr.mxu0 0.0
    %92 = vmatpush1.msra.mxu0 0.0
    %93 = vmatprep.subr.mxu0 0.0
    %94 = vmatpush1.msra.mxu0 0.0
    %95 = vmatprep.subr.mxu0 0.0
    %96 = vmatpush1.msra.mxu0 0.0
    %97 = vmatprep.subr.mxu0 0.0
    %98 = vmatpush1.msra.mxu0 0.0
    %99 = vmatprep.subr.mxu0 0.0
    %100 = vmatpush1.msra.mxu0 0.0
    %101 = vmatprep.subr.mxu0 0.0
    %102 = vmatpush1.msra.mxu0 0.0
    %103 = vmatprep.subr.mxu0 0.0
    %104 = vmatpush1.msra.mxu0 0.0
    %105 = vmatprep.subr.mxu0 0.0
    %106 = vmatpush1.msra.mxu0 0.0
    %107 = vmatprep.subr.mxu0 0.0
    %108 = vmatpush1.msra.mxu0 0.0
    %109 = vmatprep.subr.mxu0 0.0
    %110 = vmatpush1.msra.mxu0 0.0
    %111 = vmatprep.subr.mxu0 0.0
    %112 = vmatpush1.msra.mxu0 0.0
    %113 = vmatprep.subr.mxu0 0.0
    %114 = vmatpush1.msra.mxu0 0.0
    %115 = vmatprep.subr.mxu0 0.0
    %116 = vmatpush1.msra.mxu0 0.0
    %117 = vmatprep.subr.mxu0 0.0
    %118 = vmatpush1.msra.mxu0 0.0
    %119 = vmatprep.subr.mxu0 0.0
    %120 = vmatpush1.msra.mxu0 0.0
    %121 = vmatprep.subr.mxu0 0.0
    %122 = vmatpush1.msra.mxu0 0.0
    %123 = vmatprep.subr.mxu0 0.0
    %124 = vmatpush1.msra.mxu0 0.0
    %125 = vmatprep.subr.mxu0 0.0
    %126 = vmatpush1.msra.mxu0 0.0
    %127 = vmatprep.subr.mxu0 0.0
    %128 = vmatpush1.msra.mxu0 0.0
    %129 = vmatprep.subr.mxu0 0.0
    %130 = vmatpush1.msra.mxu0 0.0
    %131 = vmatprep.subr.mxu0 0.0
    %132 = vmatpush1.msra.mxu0 0.0
    %133 = vmatprep.subr.mxu0 0.0
    %134 = vmatpush1.msra.mxu0 0.0
    %135 = vmatprep.subr.mxu0 0.0
    %136 = vmatpush1.msra.mxu0 0.0
    %137 = vmatprep.subr.mxu0 0.0
    %138 = vmatpush1.msra.mxu0 0.0
    %139 = vmatprep.mubr.f32.mxu0 0.0
    %140 = vmatmul.mubr.f32.gmra.mrb[0].mxu0 %v55
    %v141 = vpop.f32.mrb[0].mxu0
    %v142 = vadd.f32 %v51, %v141
    %v143 = vpop.f32.mrb[0].mxu0
    %144 = vmatprep.mubr.f32.mxu0 0.0
    %145 = vmatmul.mubr.f32.gmra.mrb[0].mxu0 %v58
    %v146 = vpop.f32.mrb[0].mxu0
    %v147 = vadd.f32 %v51, %v146
    %v148 = vpop.f32.mrb[0].mxu0
    %149 = vmatprep.mubr.f32.mxu0 0.0
    %150 = vmatmul.mubr.f32.gmra.mrb[0].mxu0 %v61
    %v151 = vpop.f32.mrb[0].mxu0
    %v152 = vadd.f32 %v51, %v151
    %v153 = vpop.f32.mrb[0].mxu0
    %154 = vmatprep.mubr.f32.mxu0 0.0
    %155 = vmatmul.mubr.f32.gmra.mrb[0].mxu0 %v64
    %v156 = vpop.f32.mrb[0].mxu0
    %v157 = vadd.f32 %v51, %v156
    %v158 = vpop.f32.mrb[0].mxu0
    %159 = vmatprep.mubr.f32.mxu0 0.0
    %160 = vmatmul.mubr.f32.gmra.mrb[0].mxu0 %v67
    %v161 = vpop.f32.mrb[0].mxu0
    %v162 = vadd.f32 %v51, %v161
    %v163 = vpop.f32.mrb[0].mxu0
    %164 = vmatprep.mubr.f32.mxu0 0.0
    %165 = vmatmul.mubr.f32.gmra.mrb[0].mxu0 %v70
    %v166 = vpop.f32.mrb[0].mxu0
    %v167 = vadd.f32 %v51, %v166
    %v168 = vpop.f32.mrb[0].mxu0
    %169 = vmatprep.mubr.f32.mxu0 0.0
    %170 = vmatmul.mubr.f32.gmra.mrb[0].mxu0 %v73
    %v171 = vpop.f32.mrb[0].mxu0
    %v172 = vadd.f32 %v51, %v171
    %v173 = vpop.f32.mrb[0].mxu0
    %174 = vdwg.mxu0
    %vm175 = vcmask 195584
    %176 = vst.msk [vmem:[#allocation2] sm:$0xff] %vm175, %v142
    %177 = vst.msk [vmem:[#allocation2 + $0x8] sm:$0xff] %vm175, %v147
    %178 = vst.msk [vmem:[#allocation2 + $0x10] sm:$0xff] %vm175, %v152
    %179 = vst.msk [vmem:[#allocation2 + $0x18] sm:$0xff] %vm175, %v157
    %180 = vst.msk [vmem:[#allocation2 + $0x20] sm:$0xff] %vm175, %v162
    %181 = vst.msk [vmem:[#allocation2 + $0x28] sm:$0xff] %vm175, %v167
    %182 = vst.msk [vmem:[#allocation2 + $0x30] sm:$0xff] %vm175, %v172
    %s183 = scalar_lea.vmem %s1, 8
    %v184 = vld [vmem:[%s183] sm:$0xff]
    %s185 = scalar_lea.vmem %s3, 1
    %v186 = vld [vmem:[%s185] sm:$0x1]
    %v188 = vlaneseq
    %v189 = vshrl.u32 %v188, 7
    %v190 = vsub.s32 0, %v189
    %v191 = vrot.slane %v186, %v190
    %193 = vmatprep.subr.mxu0 0.0
    %194 = vmatpush1.msra.mxu0 %v184
    %195 = vmatprep.subr.mxu0 0.0
    %196 = vmatpush1.msra.mxu0 0.0
    %197 = vmatprep.subr.mxu0 0.0
    %198 = vmatpush1.msra.mxu0 0.0
    %199 = vmatprep.subr.mxu0 0.0
    %200 = vmatpush1.msra.mxu0 0.0
    %201 = vmatprep.subr.mxu0 0.0
    %202 = vmatpush1.msra.mxu0 0.0
    %203 = vmatprep.subr.mxu0 0.0
    %204 = vmatpush1.msra.mxu0 0.0
    %205 = vmatprep.subr.mxu0 0.0
    %206 = vmatpush1.msra.mxu0 0.0
    %207 = vmatprep.subr.mxu0 0.0
    %208 = vmatpush1.msra.mxu0 0.0
    %209 = vmatprep.subr.mxu0 0.0
    %210 = vmatpush1.msra.mxu0 0.0
    %211 = vmatprep.subr.mxu0 0.0
    %212 = vmatpush1.msra.mxu0 0.0
    %213 = vmatprep.subr.mxu0 0.0
    %214 = vmatpush1.msra.mxu0 0.0
    %215 = vmatprep.subr.mxu0 0.0
    %216 = vmatpush1.msra.mxu0 0.0
    %217 = vmatprep.subr.mxu0 0.0
    %218 = vmatpush1.msra.mxu0 0.0
    %219 = vmatprep.subr.mxu0 0.0
    %220 = vmatpush1.msra.mxu0 0.0
    %221 = vmatprep.subr.mxu0 0.0
    %222 = vmatpush1.msra.mxu0 0.0
    %223 = vmatprep.subr.mxu0 0.0
    %224 = vmatpush1.msra.mxu0 0.0
    %225 = vmatprep.subr.mxu0 0.0
    %226 = vmatpush1.msra.mxu0 0.0
    %227 = vmatprep.subr.mxu0 0.0
    %228 = vmatpush1.msra.mxu0 0.0
    %229 = vmatprep.subr.mxu0 0.0
    %230 = vmatpush1.msra.mxu0 0.0
    %231 = vmatprep.subr.mxu0 0.0
    %232 = vmatpush1.msra.mxu0 0.0
    %233 = vmatprep.subr.mxu0 0.0
    %234 = vmatpush1.msra.mxu0 0.0
    %235 = vmatprep.subr.mxu0 0.0
    %236 = vmatpush1.msra.mxu0 0.0
    %237 = vmatprep.subr.mxu0 0.0
    %238 = vmatpush1.msra.mxu0 0.0
    %239 = vmatprep.subr.mxu0 0.0
    %240 = vmatpush1.msra.mxu0 0.0
    %241 = vmatprep.subr.mxu0 0.0
    %242 = vmatpush1.msra.mxu0 0.0
    %243 = vmatprep.subr.mxu0 0.0
    %244 = vmatpush1.msra.mxu0 0.0
    %245 = vmatprep.subr.mxu0 0.0
    %246 = vmatpush1.msra.mxu0 0.0
    %247 = vmatprep.subr.mxu0 0.0
    %248 = vmatpush1.msra.mxu0 0.0
    %249 = vmatprep.subr.mxu0 0.0
    %250 = vmatpush1.msra.mxu0 0.0
    %251 = vmatprep.subr.mxu0 0.0
    %252 = vmatpush1.msra.mxu0 0.0
    %253 = vmatprep.subr.mxu0 0.0
    %254 = vmatpush1.msra.mxu0 0.0
    %255 = vmatprep.subr.mxu0 0.0
    %256 = vmatpush1.msra.mxu0 0.0
    %257 = vmatprep.mubr.f32.mxu0 0.0
    %258 = vmatmul.mubr.f32.gmra.mrb[0].mxu0 %v55
    %v259 = vpop.f32.mrb[0].mxu0
    %v260 = vadd.f32 %v191, %v259
    %v261 = vpop.f32.mrb[0].mxu0
    %262 = vmatprep.mubr.f32.mxu0 0.0
    %263 = vmatmul.mubr.f32.gmra.mrb[0].mxu0 %v58
    %v264 = vpop.f32.mrb[0].mxu0
    %v265 = vadd.f32 %v191, %v264
    %v266 = vpop.f32.mrb[0].mxu0
    %267 = vmatprep.mubr.f32.mxu0 0.0
    %268 = vmatmul.mubr.f32.gmra.mrb[0].mxu0 %v61
    %v269 = vpop.f32.mrb[0].mxu0
    %v270 = vadd.f32 %v191, %v269
    %v271 = vpop.f32.mrb[0].mxu0
    %272 = vmatprep.mubr.f32.mxu0 0.0
    %273 = vmatmul.mubr.f32.gmra.mrb[0].mxu0 %v64
    %v274 = vpop.f32.mrb[0].mxu0
    %v275 = vadd.f32 %v191, %v274
    %v276 = vpop.f32.mrb[0].mxu0
    %277 = vmatprep.mubr.f32.mxu0 0.0
    %278 = vmatmul.mubr.f32.gmra.mrb[0].mxu0 %v67
    %v279 = vpop.f32.mrb[0].mxu0
    %v280 = vadd.f32 %v191, %v279
    %v281 = vpop.f32.mrb[0].mxu0
    %282 = vmatprep.mubr.f32.mxu0 0.0
    %283 = vmatmul.mubr.f32.gmra.mrb[0].mxu0 %v70
    %v284 = vpop.f32.mrb[0].mxu0
    %v285 = vadd.f32 %v191, %v284
    %v286 = vpop.f32.mrb[0].mxu0
    %287 = vmatprep.mubr.f32.mxu0 0.0
    %288 = vmatmul.mubr.f32.gmra.mrb[0].mxu0 %v73
    %v289 = vpop.f32.mrb[0].mxu0
    %v290 = vadd.f32 %v191, %v289
    %v291 = vpop.f32.mrb[0].mxu0
    %292 = vdwg.mxu0
    %293 = vst.msk [vmem:[#allocation3] sm:$0xff] %vm175, %v260
    %294 = vst.msk [vmem:[#allocation3 + $0x8] sm:$0xff] %vm175, %v265
    %295 = vst.msk [vmem:[#allocation3 + $0x10] sm:$0xff] %vm175, %v270
    %296 = vst.msk [vmem:[#allocation3 + $0x18] sm:$0xff] %vm175, %v275
    %297 = vst.msk [vmem:[#allocation3 + $0x20] sm:$0xff] %vm175, %v280
    %298 = vst.msk [vmem:[#allocation3 + $0x28] sm:$0xff] %vm175, %v285
    %299 = vst.msk [vmem:[#allocation3 + $0x30] sm:$0xff] %vm175, %v290
    %s300 = scalar_lea.vmem %s1, 16
    %v301 = vld [vmem:[%s300] sm:$0xff]
    %s302 = scalar_lea.vmem %s3, 2
    %v303 = vld [vmem:[%s302] sm:$0x1]
    %v305 = vlaneseq
    %v306 = vshrl.u32 %v305, 7
    %v307 = vsub.s32 0, %v306
    %v308 = vrot.slane %v303, %v307
    %310 = vmatprep.subr.mxu0 0.0
    %311 = vmatpush1.msra.mxu0 %v301
    %312 = vmatprep.subr.mxu0 0.0
    %313 = vmatpush1.msra.mxu0 0.0
    %314 = vmatprep.subr.mxu0 0.0
    %315 = vmatpush1.msra.mxu0 0.0
    %316 = vmatprep.subr.mxu0 0.0
    %317 = vmatpush1.msra.mxu0 0.0
    %318 = vmatprep.subr.mxu0 0.0
    %319 = vmatpush1.msra.mxu0 0.0
    %320 = vmatprep.subr.mxu0 0.0
    %321 = vmatpush1.msra.mxu0 0.0
    %322 = vmatprep.subr.mxu0 0.0
    %323 = vmatpush1.msra.mxu0 0.0
    %324 = vmatprep.subr.mxu0 0.0
    %325 = vmatpush1.msra.mxu0 0.0
    %326 = vmatprep.subr.mxu0 0.0
    %327 = vmatpush1.msra.mxu0 0.0
    %328 = vmatprep.subr.mxu0 0.0
    %329 = vmatpush1.msra.mxu0 0.0
    %330 = vmatprep.subr.mxu0 0.0
    %331 = vmatpush1.msra.mxu0 0.0
    %332 = vmatprep.subr.mxu0 0.0
    %333 = vmatpush1.msra.mxu0 0.0
    %334 = vmatprep.subr.mxu0 0.0
    %335 = vmatpush1.msra.mxu0 0.0
    %336 = vmatprep.subr.mxu0 0.0
    %337 = vmatpush1.msra.mxu0 0.0
    %338 = vmatprep.subr.mxu0 0.0
    %339 = vmatpush1.msra.mxu0 0.0
    %340 = vmatprep.subr.mxu0 0.0
    %341 = vmatpush1.msra.mxu0 0.0
    %342 = vmatprep.subr.mxu0 0.0
    %343 = vmatpush1.msra.mxu0 0.0
    %344 = vmatprep.subr.mxu0 0.0
    %345 = vmatpush1.msra.mxu0 0.0
    %346 = vmatprep.subr.mxu0 0.0
    %347 = vmatpush1.msra.mxu0 0.0
    %348 = vmatprep.subr.mxu0 0.0
    %349 = vmatpush1.msra.mxu0 0.0
    %350 = vmatprep.subr.mxu0 0.0
    %351 = vmatpush1.msra.mxu0 0.0
    %352 = vmatprep.subr.mxu0 0.0
    %353 = vmatpush1.msra.mxu0 0.0
    %354 = vmatprep.subr.mxu0 0.0
    %355 = vmatpush1.msra.mxu0 0.0
    %356 = vmatprep.subr.mxu0 0.0
    %357 = vmatpush1.msra.mxu0 0.0
    %358 = vmatprep.subr.mxu0 0.0
    %359 = vmatpush1.msra.mxu0 0.0
    %360 = vmatprep.subr.mxu0 0.0
    %361 = vmatpush1.msra.mxu0 0.0
    %362 = vmatprep.subr.mxu0 0.0
    %363 = vmatpush1.msra.mxu0 0.0
    %364 = vmatprep.subr.mxu0 0.0
    %365 = vmatpush1.msra.mxu0 0.0
    %366 = vmatprep.subr.mxu0 0.0
    %367 = vmatpush1.msra.mxu0 0.0
    %368 = vmatprep.subr.mxu0 0.0
    %369 = vmatpush1.msra.mxu0 0.0
    %370 = vmatprep.subr.mxu0 0.0
    %371 = vmatpush1.msra.mxu0 0.0
    %372 = vmatprep.subr.mxu0 0.0
    %373 = vmatpush1.msra.mxu0 0.0
    %374 = vmatprep.mubr.f32.mxu0 0.0
    %375 = vmatmul.mubr.f32.gmra.mrb[0].mxu0 %v55
    %v376 = vpop.f32.mrb[0].mxu0
    %v377 = vadd.f32 %v308, %v376
    %v378 = vpop.f32.mrb[0].mxu0
    %379 = vmatprep.mubr.f32.mxu0 0.0
    %380 = vmatmul.mubr.f32.gmra.mrb[0].mxu0 %v58
    %v381 = vpop.f32.mrb[0].mxu0
    %v382 = vadd.f32 %v308, %v381
    %v383 = vpop.f32.mrb[0].mxu0
    %384 = vmatprep.mubr.f32.mxu0 0.0
    %385 = vmatmul.mubr.f32.gmra.mrb[0].mxu0 %v61
    %v386 = vpop.f32.mrb[0].mxu0
    %v387 = vadd.f32 %v308, %v386
    %v388 = vpop.f32.mrb[0].mxu0
    %389 = vmatprep.mubr.f32.mxu0 0.0
    %390 = vmatmul.mubr.f32.gmra.mrb[0].mxu0 %v64
    %v391 = vpop.f32.mrb[0].mxu0
    %v392 = vadd.f32 %v308, %v391
    %v393 = vpop.f32.mrb[0].mxu0
    %394 = vmatprep.mubr.f32.mxu0 0.0
    %395 = vmatmul.mubr.f32.gmra.mrb[0].mxu0 %v67
    %v396 = vpop.f32.mrb[0].mxu0
    %v397 = vadd.f32 %v308, %v396
    %v398 = vpop.f32.mrb[0].mxu0
    %399 = vmatprep.mubr.f32.mxu0 0.0
    %400 = vmatmul.mubr.f32.gmra.mrb[0].mxu0 %v70
    %v401 = vpop.f32.mrb[0].mxu0
    %v402 = vadd.f32 %v308, %v401
    %v403 = vpop.f32.mrb[0].mxu0
    %404 = vmatprep.mubr.f32.mxu0 0.0
    %405 = vmatmul.mubr.f32.gmra.mrb[0].mxu0 %v73
    %v406 = vpop.f32.mrb[0].mxu0
    %v407 = vadd.f32 %v308, %v406
    %v408 = vpop.f32.mrb[0].mxu0
    %409 = vdwg.mxu0
    %410 = vst.msk [vmem:[#allocation4] sm:$0xff] %vm175, %v377
    %411 = vst.msk [vmem:[#allocation4 + $0x8] sm:$0xff] %vm175, %v382
    %412 = vst.msk [vmem:[#allocation4 + $0x10] sm:$0xff] %vm175, %v387
    %413 = vst.msk [vmem:[#allocation4 + $0x18] sm:$0xff] %vm175, %v392
    %414 = vst.msk [vmem:[#allocation4 + $0x20] sm:$0xff] %vm175, %v397
    %415 = vst.msk [vmem:[#allocation4 + $0x28] sm:$0xff] %vm175, %v402
    %416 = vst.msk [vmem:[#allocation4 + $0x30] sm:$0xff] %vm175, %v407
    %s417 = scalar_lea.vmem %s1, 24
    %v418 = vld [vmem:[%s417] sm:$0xff]
    %s419 = scalar_lea.vmem %s3, 3
    %v420 = vld [vmem:[%s419] sm:$0x1]
    %v422 = vlaneseq
    %v423 = vshrl.u32 %v422, 7
    %v424 = vsub.s32 0, %v423
    %v425 = vrot.slane %v420, %v424
    %427 = vmatprep.subr.mxu0 0.0
    %428 = vmatpush1.msra.mxu0 %v418
    %429 = vmatprep.subr.mxu0 0.0
    %430 = vmatpush1.msra.mxu0 0.0
    %431 = vmatprep.subr.mxu0 0.0
    %432 = vmatpush1.msra.mxu0 0.0
    %433 = vmatprep.subr.mxu0 0.0
    %434 = vmatpush1.msra.mxu0 0.0
    %435 = vmatprep.subr.mxu0 0.0
    %436 = vmatpush1.msra.mxu0 0.0
    %437 = vmatprep.subr.mxu0 0.0
    %438 = vmatpush1.msra.mxu0 0.0
    %439 = vmatprep.subr.mxu0 0.0
    %440 = vmatpush1.msra.mxu0 0.0
    %441 = vmatprep.subr.mxu0 0.0
    %442 = vmatpush1.msra.mxu0 0.0
    %443 = vmatprep.subr.mxu0 0.0
    %444 = vmatpush1.msra.mxu0 0.0
    %445 = vmatprep.subr.mxu0 0.0
    %446 = vmatpush1.msra.mxu0 0.0
    %447 = vmatprep.subr.mxu0 0.0
    %448 = vmatpush1.msra.mxu0 0.0
    %449 = vmatprep.subr.mxu0 0.0
    %450 = vmatpush1.msra.mxu0 0.0
    %451 = vmatprep.subr.mxu0 0.0
    %452 = vmatpush1.msra.mxu0 0.0
    %453 = vmatprep.subr.mxu0 0.0
    %454 = vmatpush1.msra.mxu0 0.0
    %455 = vmatprep.subr.mxu0 0.0
    %456 = vmatpush1.msra.mxu0 0.0
    %457 = vmatprep.subr.mxu0 0.0
    %458 = vmatpush1.msra.mxu0 0.0
    %459 = vmatprep.subr.mxu0 0.0
    %460 = vmatpush1.msra.mxu0 0.0
    %461 = vmatprep.subr.mxu0 0.0
    %462 = vmatpush1.msra.mxu0 0.0
    %463 = vmatprep.subr.mxu0 0.0
    %464 = vmatpush1.msra.mxu0 0.0
    %465 = vmatprep.subr.mxu0 0.0
    %466 = vmatpush1.msra.mxu0 0.0
    %467 = vmatprep.subr.mxu0 0.0
    %468 = vmatpush1.msra.mxu0 0.0
    %469 = vmatprep.subr.mxu0 0.0
    %470 = vmatpush1.msra.mxu0 0.0
    %471 = vmatprep.subr.mxu0 0.0
    %472 = vmatpush1.msra.mxu0 0.0
    %473 = vmatprep.subr.mxu0 0.0
    %474 = vmatpush1.msra.mxu0 0.0
    %475 = vmatprep.subr.mxu0 0.0
    %476 = vmatpush1.msra.mxu0 0.0
    %477 = vmatprep.subr.mxu0 0.0
    %478 = vmatpush1.msra.mxu0 0.0
    %479 = vmatprep.subr.mxu0 0.0
    %480 = vmatpush1.msra.mxu0 0.0
    %481 = vmatprep.subr.mxu0 0.0
    %482 = vmatpush1.msra.mxu0 0.0
    %483 = vmatprep.subr.mxu0 0.0
    %484 = vmatpush1.msra.mxu0 0.0
    %485 = vmatprep.subr.mxu0 0.0
    %486 = vmatpush1.msra.mxu0 0.0
    %487 = vmatprep.subr.mxu0 0.0
    %488 = vmatpush1.msra.mxu0 0.0
    %489 = vmatprep.subr.mxu0 0.0
    %490 = vmatpush1.msra.mxu0 0.0
    %491 = vmatprep.mubr.f32.mxu0 0.0
    %492 = vmatmul.mubr.f32.gmra.mrb[0].mxu0 %v55
    %v493 = vpop.f32.mrb[0].mxu0
    %v494 = vadd.f32 %v425, %v493
    %v495 = vpop.f32.mrb[0].mxu0
    %496 = vmatprep.mubr.f32.mxu0 0.0
    %497 = vmatmul.mubr.f32.gmra.mrb[0].mxu0 %v58
    %v498 = vpop.f32.mrb[0].mxu0
    %v499 = vadd.f32 %v425, %v498
    %v500 = vpop.f32.mrb[0].mxu0
    %501 = vmatprep.mubr.f32.mxu0 0.0
    %502 = vmatmul.mubr.f32.gmra.mrb[0].mxu0 %v61
    %v503 = vpop.f32.mrb[0].mxu0
    %v504 = vadd.f32 %v425, %v503
    %v505 = vpop.f32.mrb[0].mxu0
    %506 = vmatprep.mubr.f32.mxu0 0.0
    %507 = vmatmul.mubr.f32.gmra.mrb[0].mxu0 %v64
    %v508 = vpop.f32.mrb[0].mxu0
    %v509 = vadd.f32 %v425, %v508
    %v510 = vpop.f32.mrb[0].mxu0
    %511 = vmatprep.mubr.f32.mxu0 0.0
    %512 = vmatmul.mubr.f32.gmra.mrb[0].mxu0 %v67
    %v513 = vpop.f32.mrb[0].mxu0
    %v514 = vadd.f32 %v425, %v513
    %v515 = vpop.f32.mrb[0].mxu0
    %516 = vmatprep.mubr.f32.mxu0 0.0
    %517 = vmatmul.mubr.f32.gmra.mrb[0].mxu0 %v70
    %v518 = vpop.f32.mrb[0].mxu0
    %v519 = vadd.f32 %v425, %v518
    %v520 = vpop.f32.mrb[0].mxu0
    %521 = vmatprep.mubr.f32.mxu0 0.0
    %522 = vmatmul.mubr.f32.gmra.mrb[0].mxu0 %v73
    %v523 = vpop.f32.mrb[0].mxu0
    %v524 = vadd.f32 %v425, %v523
    %v525 = vpop.f32.mrb[0].mxu0
    %526 = vdwg.mxu0
    %527 = vst.msk [vmem:[#allocation5] sm:$0xff] %vm175, %v494
    %528 = vst.msk [vmem:[#allocation5 + $0x8] sm:$0xff] %vm175, %v499
    %529 = vst.msk [vmem:[#allocation5 + $0x10] sm:$0xff] %vm175, %v504
    %530 = vst.msk [vmem:[#allocation5 + $0x18] sm:$0xff] %vm175, %v509
    %531 = vst.msk [vmem:[#allocation5 + $0x20] sm:$0xff] %vm175, %v514
    %532 = vst.msk [vmem:[#allocation5 + $0x28] sm:$0xff] %vm175, %v519
    %533 = vst.msk [vmem:[#allocation5 + $0x30] sm:$0xff] %vm175, %v524
    %v534 = vld [vmem:[#allocation2] sm:$0xff]
    %v535 = vld [vmem:[#allocation6] sm:$0xff]
    %v536 = vld [vmem:[#allocation6 + $0x8] sm:$0xff]
    %v537 = vld [vmem:[#allocation6 + $0x10] sm:$0xff]
    %v539 = vsel %vm175, 0.0, 0
    %541 = vmatprep.subr.mxu0 0.0
    %542 = vmatpush1.msra.mxu0 %v535
    %543 = vmatprep.subr.mxu0 0.0
    %544 = vmatpush1.msra.mxu0 %v536
    %545 = vmatprep.subr.mxu0 0.0
    %546 = vmatpush1.msra.mxu0 %v537
    %547 = vmatprep.subr.mxu0 0.0
    %548 = vmatpush1.msra.mxu0 0.0
    %549 = vmatprep.subr.mxu0 0.0
    %550 = vmatpush1.msra.mxu0 0.0
    %551 = vmatprep.subr.mxu0 0.0
    %552 = vmatpush1.msra.mxu0 0.0
    %553 = vmatprep.subr.mxu0 0.0
    %554 = vmatpush1.msra.mxu0 0.0
    %555 = vmatprep.subr.mxu0 0.0
    %556 = vmatpush1.msra.mxu0 0.0
    %557 = vmatprep.subr.mxu0 0.0
    %558 = vmatpush1.msra.mxu0 0.0
    %559 = vmatprep.subr.mxu0 0.0
    %560 = vmatpush1.msra.mxu0 0.0
    %561 = vmatprep.subr.mxu0 0.0
    %562 = vmatpush1.msra.mxu0 0.0
    %563 = vmatprep.subr.mxu0 0.0
    %564 = vmatpush1.msra.mxu0 0.0
    %565 = vmatprep.subr.mxu0 0.0
    %566 = vmatpush1.msra.mxu0 0.0
    %567 = vmatprep.subr.mxu0 0.0
    %568 = vmatpush1.msra.mxu0 0.0
    %569 = vmatprep.subr.mxu0 0.0
    %570 = vmatpush1.msra.mxu0 0.0
    %571 = vmatprep.subr.mxu0 0.0
    %572 = vmatpush1.msra.mxu0 0.0
    %573 = vmatprep.subr.mxu0 0.0
    %574 = vmatpush1.msra.mxu0 0.0
    %575 = vmatprep.subr.mxu0 0.0
    %576 = vmatpush1.msra.mxu0 0.0
    %577 = vmatprep.subr.mxu0 0.0
    %578 = vmatpush1.msra.mxu0 0.0
    %579 = vmatprep.subr.mxu0 0.0
    %580 = vmatpush1.msra.mxu0 0.0
    %581 = vmatprep.subr.mxu0 0.0
    %582 = vmatpush1.msra.mxu0 0.0
    %583 = vmatprep.subr.mxu0 0.0
    %584 = vmatpush1.msra.mxu0 0.0
    %585 = vmatprep.subr.mxu0 0.0
    %586 = vmatpush1.msra.mxu0 0.0
    %587 = vmatprep.subr.mxu0 0.0
    %588 = vmatpush1.msra.mxu0 0.0
    %589 = vmatprep.subr.mxu0 0.0
    %590 = vmatpush1.msra.mxu0 0.0
    %591 = vmatprep.subr.mxu0 0.0
    %592 = vmatpush1.msra.mxu0 0.0
    %593 = vmatprep.subr.mxu0 0.0
    %594 = vmatpush1.msra.mxu0 0.0
    %595 = vmatprep.subr.mxu0 0.0
    %596 = vmatpush1.msra.mxu0 0.0
    %597 = vmatprep.subr.mxu0 0.0
    %598 = vmatpush1.msra.mxu0 0.0
    %599 = vmatprep.subr.mxu0 0.0
    %600 = vmatpush1.msra.mxu0 0.0
    %601 = vmatprep.subr.mxu0 0.0
    %602 = vmatpush1.msra.mxu0 0.0
    %603 = vmatprep.subr.mxu0 0.0
    %604 = vmatpush1.msra.mxu0 0.0
    %605 = vmatprep.mubr.f32.mxu0 0.0
    %606 = vmatmul.mubr.f32.gmra.mrb[0].mxu0 %v539
    %v607 = vpop.f32.mrb[0].mxu0
    %v608 = vadd.f32 0.0, %v607
    %v609 = vpop.f32.mrb[0].mxu0
    %610 = vdwg.mxu0
    %v611 = vadd.f32 %v534, %v608
    %v612 = vld [vmem:[#allocation3] sm:$0xff]
    %s613 = scalar_lea.vmem [#allocation6], 24
    %v614 = vld [vmem:[%s613] sm:$0xff]
    %v615 = vld [vmem:[%s613 + $0x8] sm:$0xff]
    %v616 = vld [vmem:[%s613 + $0x10] sm:$0xff]
    %617 = vmatprep.subr.mxu0 0.0
    %618 = vmatpush1.msra.mxu0 %v614
    %619 = vmatprep.subr.mxu0 0.0
    %620 = vmatpush1.msra.mxu0 %v615
    %621 = vmatprep.subr.mxu0 0.0
    %622 = vmatpush1.msra.mxu0 %v616
    %623 = vmatprep.subr.mxu0 0.0
    %624 = vmatpush1.msra.mxu0 0.0
    %625 = vmatprep.subr.mxu0 0.0
    %626 = vmatpush1.msra.mxu0 0.0
    %627 = vmatprep.subr.mxu0 0.0
    %628 = vmatpush1.msra.mxu0 0.0
    %629 = vmatprep.subr.mxu0 0.0
    %630 = vmatpush1.msra.mxu0 0.0
    %631 = vmatprep.subr.mxu0 0.0
    %632 = vmatpush1.msra.mxu0 0.0
    %633 = vmatprep.subr.mxu0 0.0
    %634 = vmatpush1.msra.mxu0 0.0
    %635 = vmatprep.subr.mxu0 0.0
    %636 = vmatpush1.msra.mxu0 0.0
    %637 = vmatprep.subr.mxu0 0.0
    %638 = vmatpush1.msra.mxu0 0.0
    %639 = vmatprep.subr.mxu0 0.0
    %640 = vmatpush1.msra.mxu0 0.0
    %641 = vmatprep.subr.mxu0 0.0
    %642 = vmatpush1.msra.mxu0 0.0
    %643 = vmatprep.subr.mxu0 0.0
    %644 = vmatpush1.msra.mxu0 0.0
    %645 = vmatprep.subr.mxu0 0.0
    %646 = vmatpush1.msra.mxu0 0.0
    %647 = vmatprep.subr.mxu0 0.0
    %648 = vmatpush1.msra.mxu0 0.0
    %649 = vmatprep.subr.mxu0 0.0
    %650 = vmatpush1.msra.mxu0 0.0
    %651 = vmatprep.subr.mxu0 0.0
    %652 = vmatpush1.msra.mxu0 0.0
    %653 = vmatprep.subr.mxu0 0.0
    %654 = vmatpush1.msra.mxu0 0.0
    %655 = vmatprep.subr.mxu0 0.0
    %656 = vmatpush1.msra.mxu0 0.0
    %657 = vmatprep.subr.mxu0 0.0
    %658 = vmatpush1.msra.mxu0 0.0
    %659 = vmatprep.subr.mxu0 0.0
    %660 = vmatpush1.msra.mxu0 0.0
    %661 = vmatprep.subr.mxu0 0.0
    %662 = vmatpush1.msra.mxu0 0.0
    %663 = vmatprep.subr.mxu0 0.0
    %664 = vmatpush1.msra.mxu0 0.0
    %665 = vmatprep.subr.mxu0 0.0
    %666 = vmatpush1.msra.mxu0 0.0
    %667 = vmatprep.subr.mxu0 0.0
    %668 = vmatpush1.msra.mxu0 0.0
    %669 = vmatprep.subr.mxu0 0.0
    %670 = vmatpush1.msra.mxu0 0.0
    %671 = vmatprep.subr.mxu0 0.0
    %672 = vmatpush1.msra.mxu0 0.0
    %673 = vmatprep.subr.mxu0 0.0
    %674 = vmatpush1.msra.mxu0 0.0
    %675 = vmatprep.subr.mxu0 0.0
    %676 = vmatpush1.msra.mxu0 0.0
    %677 = vmatprep.subr.mxu0 0.0
    %678 = vmatpush1.msra.mxu0 0.0
    %679 = vmatprep.subr.mxu0 0.0
    %680 = vmatpush1.msra.mxu0 0.0
    %681 = vmatprep.mubr.f32.mxu0 0.0
    %682 = vmatmul.mubr.f32.gmra.mrb[0].mxu0 %v539
    %v683 = vpop.f32.mrb[0].mxu0
    %v684 = vadd.f32 0.0, %v683
    %v685 = vpop.f32.mrb[0].mxu0
    %686 = vdwg.mxu0
    %v687 = vadd.f32 %v612, %v684
    %v688 = vld [vmem:[#allocation4] sm:$0xff]
    %s689 = scalar_lea.vmem [#allocation6], 48
    %v690 = vld [vmem:[%s689] sm:$0xff]
    %v691 = vld [vmem:[%s689 + $0x8] sm:$0xff]
    %v692 = vld [vmem:[%s689 + $0x10] sm:$0xff]
    %693 = vmatprep.subr.mxu0 0.0
    %694 = vmatpush1.msra.mxu0 %v690
    %695 = vmatprep.subr.mxu0 0.0
    %696 = vmatpush1.msra.mxu0 %v691
    %697 = vmatprep.subr.mxu0 0.0
    %698 = vmatpush1.msra.mxu0 %v692
    %699 = vmatprep.subr.mxu0 0.0
    %700 = vmatpush1.msra.mxu0 0.0
    %701 = vmatprep.subr.mxu0 0.0
    %702 = vmatpush1.msra.mxu0 0.0
    %703 = vmatprep.subr.mxu0 0.0
    %704 = vmatpush1.msra.mxu0 0.0
    %705 = vmatprep.subr.mxu0 0.0
    %706 = vmatpush1.msra.mxu0 0.0
    %707 = vmatprep.subr.mxu0 0.0
    %708 = vmatpush1.msra.mxu0 0.0
    %709 = vmatprep.subr.mxu0 0.0
    %710 = vmatpush1.msra.mxu0 0.0
    %711 = vmatprep.subr.mxu0 0.0
    %712 = vmatpush1.msra.mxu0 0.0
    %713 = vmatprep.subr.mxu0 0.0
    %714 = vmatpush1.msra.mxu0 0.0
    %715 = vmatprep.subr.mxu0 0.0
    %716 = vmatpush1.msra.mxu0 0.0
    %717 = vmatprep.subr.mxu0 0.0
    %718 = vmatpush1.msra.mxu0 0.0
    %719 = vmatprep.subr.mxu0 0.0
    %720 = vmatpush1.msra.mxu0 0.0
    %721 = vmatprep.subr.mxu0 0.0
    %722 = vmatpush1.msra.mxu0 0.0
    %723 = vmatprep.subr.mxu0 0.0
    %724 = vmatpush1.msra.mxu0 0.0
    %725 = vmatprep.subr.mxu0 0.0
    %726 = vmatpush1.msra.mxu0 0.0
    %727 = vmatprep.subr.mxu0 0.0
    %728 = vmatpush1.msra.mxu0 0.0
    %729 = vmatprep.subr.mxu0 0.0
    %730 = vmatpush1.msra.mxu0 0.0
    %731 = vmatprep.subr.mxu0 0.0
    %732 = vmatpush1.msra.mxu0 0.0
    %733 = vmatprep.subr.mxu0 0.0
    %734 = vmatpush1.msra.mxu0 0.0
    %735 = vmatprep.subr.mxu0 0.0
    %736 = vmatpush1.msra.mxu0 0.0
    %737 = vmatprep.subr.mxu0 0.0
    %738 = vmatpush1.msra.mxu0 0.0
    %739 = vmatprep.subr.mxu0 0.0
    %740 = vmatpush1.msra.mxu0 0.0
    %741 = vmatprep.subr.mxu0 0.0
    %742 = vmatpush1.msra.mxu0 0.0
    %743 = vmatprep.subr.mxu0 0.0
    %744 = vmatpush1.msra.mxu0 0.0
    %745 = vmatprep.subr.mxu0 0.0
    %746 = vmatpush1.msra.mxu0 0.0
    %747 = vmatprep.subr.mxu0 0.0
    %748 = vmatpush1.msra.mxu0 0.0
    %749 = vmatprep.subr.mxu0 0.0
    %750 = vmatpush1.msra.mxu0 0.0
    %751 = vmatprep.subr.mxu0 0.0
    %752 = vmatpush1.msra.mxu0 0.0
    %753 = vmatprep.subr.mxu0 0.0
    %754 = vmatpush1.msra.mxu0 0.0
    %755 = vmatprep.subr.mxu0 0.0
    %756 = vmatpush1.msra.mxu0 0.0
    %757 = vmatprep.mubr.f32.mxu0 0.0
    %758 = vmatmul.mubr.f32.gmra.mrb[0].mxu0 %v539
    %v759 = vpop.f32.mrb[0].mxu0
    %v760 = vadd.f32 0.0, %v759
    %v761 = vpop.f32.mrb[0].mxu0
    %762 = vdwg.mxu0
    %v763 = vadd.f32 %v688, %v760
    %v764 = vld [vmem:[#allocation5] sm:$0xff]
    %s765 = scalar_lea.vmem [#allocation6], 72
    %v766 = vld [vmem:[%s765] sm:$0xff]
    %v767 = vld [vmem:[%s765 + $0x8] sm:$0xff]
    %v768 = vld [vmem:[%s765 + $0x10] sm:$0xff]
    %769 = vmatprep.subr.mxu0 0.0
    %770 = vmatpush1.msra.mxu0 %v766
    %771 = vmatprep.subr.mxu0 0.0
    %772 = vmatpush1.msra.mxu0 %v767
    %773 = vmatprep.subr.mxu0 0.0
    %774 = vmatpush1.msra.mxu0 %v768
    %775 = vmatprep.subr.mxu0 0.0
    %776 = vmatpush1.msra.mxu0 0.0
    %777 = vmatprep.subr.mxu0 0.0
    %778 = vmatpush1.msra.mxu0 0.0
    %779 = vmatprep.subr.mxu0 0.0
    %780 = vmatpush1.msra.mxu0 0.0
    %781 = vmatprep.subr.mxu0 0.0
    %782 = vmatpush1.msra.mxu0 0.0
    %783 = vmatprep.subr.mxu0 0.0
    %784 = vmatpush1.msra.mxu0 0.0
    %785 = vmatprep.subr.mxu0 0.0
    %786 = vmatpush1.msra.mxu0 0.0
    %787 = vmatprep.subr.mxu0 0.0
    %788 = vmatpush1.msra.mxu0 0.0
    %789 = vmatprep.subr.mxu0 0.0
    %790 = vmatpush1.msra.mxu0 0.0
    %791 = vmatprep.subr.mxu0 0.0
    %792 = vmatpush1.msra.mxu0 0.0
    %793 = vmatprep.subr.mxu0 0.0
    %794 = vmatpush1.msra.mxu0 0.0
    %795 = vmatprep.subr.mxu0 0.0
    %796 = vmatpush1.msra.mxu0 0.0
    %797 = vmatprep.subr.mxu0 0.0
    %798 = vmatpush1.msra.mxu0 0.0
    %799 = vmatprep.subr.mxu0 0.0
    %800 = vmatpush1.msra.mxu0 0.0
    %801 = vmatprep.subr.mxu0 0.0
    %802 = vmatpush1.msra.mxu0 0.0
    %803 = vmatprep.subr.mxu0 0.0
    %804 = vmatpush1.msra.mxu0 0.0
    %805 = vmatprep.subr.mxu0 0.0
    %806 = vmatpush1.msra.mxu0 0.0
    %807 = vmatprep.subr.mxu0 0.0
    %808 = vmatpush1.msra.mxu0 0.0
    %809 = vmatprep.subr.mxu0 0.0
    %810 = vmatpush1.msra.mxu0 0.0
    %811 = vmatprep.subr.mxu0 0.0
    %812 = vmatpush1.msra.mxu0 0.0
    %813 = vmatprep.subr.mxu0 0.0
    %814 = vmatpush1.msra.mxu0 0.0
    %815 = vmatprep.subr.mxu0 0.0
    %816 = vmatpush1.msra.mxu0 0.0
    %817 = vmatprep.subr.mxu0 0.0
    %818 = vmatpush1.msra.mxu0 0.0
    %819 = vmatprep.subr.mxu0 0.0
    %820 = vmatpush1.msra.mxu0 0.0
    %821 = vmatprep.subr.mxu0 0.0
    %822 = vmatpush1.msra.mxu0 0.0
    %823 = vmatprep.subr.mxu0 0.0
    %824 = vmatpush1.msra.mxu0 0.0
    %825 = vmatprep.subr.mxu0 0.0
    %826 = vmatpush1.msra.mxu0 0.0
    %827 = vmatprep.subr.mxu0 0.0
    %828 = vmatpush1.msra.mxu0 0.0
    %829 = vmatprep.subr.mxu0 0.0
    %830 = vmatpush1.msra.mxu0 0.0
    %831 = vmatprep.subr.mxu0 0.0
    %832 = vmatpush1.msra.mxu0 0.0
    %833 = vmatprep.mubr.f32.mxu0 0.0
    %834 = vmatmul.mubr.f32.gmra.mrb[0].mxu0 %v539
    %v835 = vpop.f32.mrb[0].mxu0
    %v836 = vadd.f32 0.0, %v835
    %v837 = vpop.f32.mrb[0].mxu0
    %838 = vdwg.mxu0
    %v839 = vadd.f32 %v764, %v836
    %v840 = vxor.u32 %v611, 2147483648
    %v841 = vmul.f32 %v840, 1.442695
    %v842 = vpow.pop %v841
    %v843 = vadd.f32 %v842, 1.0
    %v844 = vrcp.pop %v843
    %v845 = vmul.f32 1.0, %v844
    %v846 = vxor.u32 %v687, 2147483648
    %v847 = vmul.f32 %v846, 1.442695
    %v848 = vpow.pop %v847
    %v849 = vadd.f32 %v848, 1.0
    %v850 = vrcp.pop %v849
    %v851 = vmul.f32 1.0, %v850
    %v852 = vtanh.pop %v763
    %v853 = vxor.u32 %v839, 2147483648
    %v854 = vmul.f32 %v853, 1.442695
    %v855 = vpow.pop %v854
    %v856 = vadd.f32 %v855, 1.0
    %v857 = vrcp.pop %v856
    %v858 = vmul.f32 1.0, %v857
    %v859 = vmul.f32 %v851, 0.0
    %v860 = vmul.f32 %v845, %v852
    %v861 = vadd.f32 %v859, %v860
    %v862 = vtanh.pop %v861
    %v863 = vmul.f32 %v858, %v862
    %v864 = vld [vmem:[%s4] sm:$0xff]
    %v865 = vld [vmem:[%s4 + $0x8] sm:$0xff]
    %v866 = vld [vmem:[%s4 + $0x10] sm:$0xff]
    %v867 = vld [vmem:[%s5] sm:$0x1]
    %v869 = vlaneseq
    %v870 = vshrl.u32 %v869, 7
    %v871 = vsub.s32 0, %v870
    %v872 = vrot.slane %v867, %v871
    %v875 = vsel %vm175, %v863, 0
    %877 = vmatprep.subr.mxu0 0.0
    %878 = vmatpush1.msra.mxu0 %v864
    %879 = vmatprep.subr.mxu0 0.0
    %880 = vmatpush1.msra.mxu0 %v865
    %881 = vmatprep.subr.mxu0 0.0
    %882 = vmatpush1.msra.mxu0 %v866
    %883 = vmatprep.subr.mxu0 0.0
    %884 = vmatpush1.msra.mxu0 0.0
    %885 = vmatprep.subr.mxu0 0.0
    %886 = vmatpush1.msra.mxu0 0.0
    %887 = vmatprep.subr.mxu0 0.0
    %888 = vmatpush1.msra.mxu0 0.0
    %889 = vmatprep.subr.mxu0 0.0
    %890 = vmatpush1.msra.mxu0 0.0
    %891 = vmatprep.subr.mxu0 0.0
    %892 = vmatpush1.msra.mxu0 0.0
    %893 = vmatprep.subr.mxu0 0.0
    %894 = vmatpush1.msra.mxu0 0.0
    %895 = vmatprep.subr.mxu0 0.0
    %896 = vmatpush1.msra.mxu0 0.0
    %897 = vmatprep.subr.mxu0 0.0
    %898 = vmatpush1.msra.mxu0 0.0
    %899 = vmatprep.subr.mxu0 0.0
    %900 = vmatpush1.msra.mxu0 0.0
    %901 = vmatprep.subr.mxu0 0.0
    %902 = vmatpush1.msra.mxu0 0.0
    %903 = vmatprep.subr.mxu0 0.0
    %904 = vmatpush1.msra.mxu0 0.0
    %905 = vmatprep.subr.mxu0 0.0
    %906 = vmatpush1.msra.mxu0 0.0
    %907 = vmatprep.subr.mxu0 0.0
    %908 = vmatpush1.msra.mxu0 0.0
    %909 = vmatprep.subr.mxu0 0.0
    %910 = vmatpush1.msra.mxu0 0.0
    %911 = vmatprep.subr.mxu0 0.0
    %912 = vmatpush1.msra.mxu0 0.0
    %913 = vmatprep.subr.mxu0 0.0
    %914 = vmatpush1.msra.mxu0 0.0
    %915 = vmatprep.subr.mxu0 0.0
    %916 = vmatpush1.msra.mxu0 0.0
    %917 = vmatprep.subr.mxu0 0.0
    %918 = vmatpush1.msra.mxu0 0.0
    %919 = vmatprep.subr.mxu0 0.0
    %920 = vmatpush1.msra.mxu0 0.0
    %921 = vmatprep.subr.mxu0 0.0
    %922 = vmatpush1.msra.mxu0 0.0
    %923 = vmatprep.subr.mxu0 0.0
    %924 = vmatpush1.msra.mxu0 0.0
    %925 = vmatprep.subr.mxu0 0.0
    %926 = vmatpush1.msra.mxu0 0.0
    %927 = vmatprep.subr.mxu0 0.0
    %928 = vmatpush1.msra.mxu0 0.0
    %929 = vmatprep.subr.mxu0 0.0
    %930 = vmatpush1.msra.mxu0 0.0
    %931 = vmatprep.subr.mxu0 0.0
    %932 = vmatpush1.msra.mxu0 0.0
    %933 = vmatprep.subr.mxu0 0.0
    %934 = vmatpush1.msra.mxu0 0.0
    %935 = vmatprep.subr.mxu0 0.0
    %936 = vmatpush1.msra.mxu0 0.0
    %937 = vmatprep.subr.mxu0 0.0
    %938 = vmatpush1.msra.mxu0 0.0
    %939 = vmatprep.subr.mxu0 0.0
    %940 = vmatpush1.msra.mxu0 0.0
    %941 = vmatprep.mubr.f32.mxu0 0.0
    %942 = vmatmul.mubr.f32.gmra.mrb[0].mxu0 %v875
    %v943 = vpop.f32.mrb[0].mxu0
    %v944 = vadd.f32 %v872, %v943
    %v945 = vpop.f32.mrb[0].mxu0
    %946 = vdwg.mxu0
    %947 = vst [vmem:[#allocation9] sm:$0xff] %v944
    %s948 = scalar_lea.vmem [#allocation2], 8
    %v949 = vld [vmem:[%s948] sm:$0xff]
    %v950 = vld [vmem:[#allocation6] sm:$0xff]
    %v951 = vld [vmem:[#allocation6 + $0x8] sm:$0xff]
    %v952 = vld [vmem:[#allocation6 + $0x10] sm:$0xff]
    %953 = vmatprep.subr.mxu0 0.0
    %954 = vmatpush1.msra.mxu0 %v950
    %955 = vmatprep.subr.mxu0 0.0
    %956 = vmatpush1.msra.mxu0 %v951
    %957 = vmatprep.subr.mxu0 0.0
    %958 = vmatpush1.msra.mxu0 %v952
    %959 = vmatprep.subr.mxu0 0.0
    %960 = vmatpush1.msra.mxu0 0.0
    %961 = vmatprep.subr.mxu0 0.0
    %962 = vmatpush1.msra.mxu0 0.0
    %963 = vmatprep.subr.mxu0 0.0
    %964 = vmatpush1.msra.mxu0 0.0
    %965 = vmatprep.subr.mxu0 0.0
    %966 = vmatpush1.msra.mxu0 0.0
    %967 = vmatprep.subr.mxu0 0.0
    %968 = vmatpush1.msra.mxu0 0.0
    %969 = vmatprep.subr.mxu0 0.0
    %970 = vmatpush1.msra.mxu0 0.0
    %971 = vmatprep.subr.mxu0 0.0
    %972 = vmatpush1.msra.mxu0 0.0
    %973 = vmatprep.subr.mxu0 0.0
    %974 = vmatpush1.msra.mxu0 0.0
    %975 = vmatprep.subr.mxu0 0.0
    %976 = vmatpush1.msra.mxu0 0.0
    %977 = vmatprep.subr.mxu0 0.0
    %978 = vmatpush1.msra.mxu0 0.0
    %979 = vmatprep.subr.mxu0 0.0
    %980 = vmatpush1.msra.mxu0 0.0
    %981 = vmatprep.subr.mxu0 0.0
    %982 = vmatpush1.msra.mxu0 0.0
    %983 = vmatprep.subr.mxu0 0.0
    %984 = vmatpush1.msra.mxu0 0.0
    %985 = vmatprep.subr.mxu0 0.0
    %986 = vmatpush1.msra.mxu0 0.0
    %987 = vmatprep.subr.mxu0 0.0
    %988 = vmatpush1.msra.mxu0 0.0
    %989 = vmatprep.subr.mxu0 0.0
    %990 = vmatpush1.msra.mxu0 0.0
    %991 = vmatprep.subr.mxu0 0.0
    %992 = vmatpush1.msra.mxu0 0.0
    %993 = vmatprep.subr.mxu0 0.0
    %994 = vmatpush1.msra.mxu0 0.0
    %995 = vmatprep.subr.mxu0 0.0
    %996 = vmatpush1.msra.mxu0 0.0
    %997 = vmatprep.subr.mxu0 0.0
    %998 = vmatpush1.msra.mxu0 0.0
    %999 = vmatprep.subr.mxu0 0.0
    %1000 = vmatpush1.msra.mxu0 0.0
    %1001 = vmatprep.subr.mxu0 0.0
    %1002 = vmatpush1.msra.mxu0 0.0
    %1003 = vmatprep.subr.mxu0 0.0
    %1004 = vmatpush1.msra.mxu0 0.0
    %1005 = vmatprep.subr.mxu0 0.0
    %1006 = vmatpush1.msra.mxu0 0.0
    %1007 = vmatprep.subr.mxu0 0.0
    %1008 = vmatpush1.msra.mxu0 0.0
    %1009 = vmatprep.subr.mxu0 0.0
    %1010 = vmatpush1.msra.mxu0 0.0
    %1011 = vmatprep.subr.mxu0 0.0
    %1012 = vmatpush1.msra.mxu0 0.0
    %1013 = vmatprep.subr.mxu0 0.0
    %1014 = vmatpush1.msra.mxu0 0.0
    %1015 = vmatprep.subr.mxu0 0.0
    %1016 = vmatpush1.msra.mxu0 0.0
    %1017 = vmatprep.mubr.f32.mxu0 0.0
    %1018 = vmatmul.mubr.f32.gmra.mrb[0].mxu0 %v875
    %v1019 = vpop.f32.mrb[0].mxu0
    %v1020 = vadd.f32 0.0, %v1019
    %v1021 = vpop.f32.mrb[0].mxu0
    %1022 = vdwg.mxu0
    %v1023 = vadd.f32 %v949, %v1020
    %s1024 = scalar_lea.vmem [#allocation3], 8
    %v1025 = vld [vmem:[%s1024] sm:$0xff]
    %v1026 = vld [vmem:[%s613] sm:$0xff]
    %v1027 = vld [vmem:[%s613 + $0x8] sm:$0xff]
    %v1028 = vld [vmem:[%s613 + $0x10] sm:$0xff]
    %1029 = vmatprep.subr.mxu0 0.0
    %1030 = vmatpush1.msra.mxu0 %v1026
    %1031 = vmatprep.subr.mxu0 0.0
    %1032 = vmatpush1.msra.mxu0 %v1027
    %1033 = vmatprep.subr.mxu0 0.0
    %1034 = vmatpush1.msra.mxu0 %v1028
    %1035 = vmatprep.subr.mxu0 0.0
    %1036 = vmatpush1.msra.mxu0 0.0
    %1037 = vmatprep.subr.mxu0 0.0
    %1038 = vmatpush1.msra.mxu0 0.0
    %1039 = vmatprep.subr.mxu0 0.0
    %1040 = vmatpush1.msra.mxu0 0.0
    %1041 = vmatprep.subr.mxu0 0.0
    %1042 = vmatpush1.msra.mxu0 0.0
    %1043 = vmatprep.subr.mxu0 0.0
    %1044 = vmatpush1.msra.mxu0 0.0
    %1045 = vmatprep.subr.mxu0 0.0
    %1046 = vmatpush1.msra.mxu0 0.0
    %1047 = vmatprep.subr.mxu0 0.0
    %1048 = vmatpush1.msra.mxu0 0.0
    %1049 = vmatprep.subr.mxu0 0.0
    %1050 = vmatpush1.msra.mxu0 0.0
    %1051 = vmatprep.subr.mxu0 0.0
    %1052 = vmatpush1.msra.mxu0 0.0
    %1053 = vmatprep.subr.mxu0 0.0
    %1054 = vmatpush1.msra.mxu0 0.0
    %1055 = vmatprep.subr.mxu0 0.0
    %1056 = vmatpush1.msra.mxu0 0.0
    %1057 = vmatprep.subr.mxu0 0.0
    %1058 = vmatpush1.msra.mxu0 0.0
    %1059 = vmatprep.subr.mxu0 0.0
    %1060 = vmatpush1.msra.mxu0 0.0
    %1061 = vmatprep.subr.mxu0 0.0
    %1062 = vmatpush1.msra.mxu0 0.0
    %1063 = vmatprep.subr.mxu0 0.0
    %1064 = vmatpush1.msra.mxu0 0.0
    %1065 = vmatprep.subr.mxu0 0.0
    %1066 = vmatpush1.msra.mxu0 0.0
    %1067 = vmatprep.subr.mxu0 0.0
    %1068 = vmatpush1.msra.mxu0 0.0
    %1069 = vmatprep.subr.mxu0 0.0
    %1070 = vmatpush1.msra.mxu0 0.0
    %1071 = vmatprep.subr.mxu0 0.0
    %1072 = vmatpush1.msra.mxu0 0.0
    %1073 = vmatprep.subr.mxu0 0.0
    %1074 = vmatpush1.msra.mxu0 0.0
    %1075 = vmatprep.subr.mxu0 0.0
    %1076 = vmatpush1.msra.mxu0 0.0
    %1077 = vmatprep.subr.mxu0 0.0
    %1078 = vmatpush1.msra.mxu0 0.0
    %1079 = vmatprep.subr.mxu0 0.0
    %1080 = vmatpush1.msra.mxu0 0.0
    %1081 = vmatprep.subr.mxu0 0.0
    %1082 = vmatpush1.msra.mxu0 0.0
    %1083 = vmatprep.subr.mxu0 0.0
    %1084 = vmatpush1.msra.mxu0 0.0
    %1085 = vmatprep.subr.mxu0 0.0
    %1086 = vmatpush1.msra.mxu0 0.0
    %1087 = vmatprep.subr.mxu0 0.0
    %1088 = vmatpush1.msra.mxu0 0.0
    %1089 = vmatprep.subr.mxu0 0.0
    %1090 = vmatpush1.msra.mxu0 0.0
    %1091 = vmatprep.subr.mxu0 0.0
    %1092 = vmatpush1.msra.mxu0 0.0
    %1093 = vmatprep.mubr.f32.mxu0 0.0
    %1094 = vmatmul.mubr.f32.gmra.mrb[0].mxu0 %v875
    %v1095 = vpop.f32.mrb[0].mxu0
    %v1096 = vadd.f32 0.0, %v1095
    %v1097 = vpop.f32.mrb[0].mxu0
    %1098 = vdwg.mxu0
    %v1099 = vadd.f32 %v1025, %v1096
    %s1100 = scalar_lea.vmem [#allocation4], 8
    %v1101 = vld [vmem:[%s1100] sm:$0xff]
    %v1102 = vld [vmem:[%s689] sm:$0xff]
    %v1103 = vld [vmem:[%s689 + $0x8] sm:$0xff]
    %v1104 = vld [vmem:[%s689 + $0x10] sm:$0xff]
    %1105 = vmatprep.subr.mxu0 0.0
    %1106 = vmatpush1.msra.mxu0 %v1102
    %1107 = vmatprep.subr.mxu0 0.0
    %1108 = vmatpush1.msra.mxu0 %v1103
    %1109 = vmatprep.subr.mxu0 0.0
    %1110 = vmatpush1.msra.mxu0 %v1104
    %1111 = vmatprep.subr.mxu0 0.0
    %1112 = vmatpush1.msra.mxu0 0.0
    %1113 = vmatprep.subr.mxu0 0.0
    %1114 = vmatpush1.msra.mxu0 0.0
    %1115 = vmatprep.subr.mxu0 0.0
    %1116 = vmatpush1.msra.mxu0 0.0
    %1117 = vmatprep.subr.mxu0 0.0
    %1118 = vmatpush1.msra.mxu0 0.0
    %1119 = vmatprep.subr.mxu0 0.0
    %1120 = vmatpush1.msra.mxu0 0.0
    %1121 = vmatprep.subr.mxu0 0.0
    %1122 = vmatpush1.msra.mxu0 0.0
    %1123 = vmatprep.subr.mxu0 0.0
    %1124 = vmatpush1.msra.mxu0 0.0
    %1125 = vmatprep.subr.mxu0 0.0
    %1126 = vmatpush1.msra.mxu0 0.0
    %1127 = vmatprep.subr.mxu0 0.0
    %1128 = vmatpush1.msra.mxu0 0.0
    %1129 = vmatprep.subr.mxu0 0.0
    %1130 = vmatpush1.msra.mxu0 0.0
    %1131 = vmatprep.subr.mxu0 0.0
    %1132 = vmatpush1.msra.mxu0 0.0
    %1133 = vmatprep.subr.mxu0 0.0
    %1134 = vmatpush1.msra.mxu0 0.0
    %1135 = vmatprep.subr.mxu0 0.0
    %1136 = vmatpush1.msra.mxu0 0.0
    %1137 = vmatprep.subr.mxu0 0.0
    %1138 = vmatpush1.msra.mxu0 0.0
    %1139 = vmatprep.subr.mxu0 0.0
    %1140 = vmatpush1.msra.mxu0 0.0
    %1141 = vmatprep.subr.mxu0 0.0
    %1142 = vmatpush1.msra.mxu0 0.0
    %1143 = vmatprep.subr.mxu0 0.0
    %1144 = vmatpush1.msra.mxu0 0.0
    %1145 = vmatprep.subr.mxu0 0.0
    %1146 = vmatpush1.msra.mxu0 0.0
    %1147 = vmatprep.subr.mxu0 0.0
    %1148 = vmatpush1.msra.mxu0 0.0
    %1149 = vmatprep.subr.mxu0 0.0
    %1150 = vmatpush1.msra.mxu0 0.0
    %1151 = vmatprep.subr.mxu0 0.0
    %1152 = vmatpush1.msra.mxu0 0.0
    %1153 = vmatprep.subr.mxu0 0.0
    %1154 = vmatpush1.msra.mxu0 0.0
    %1155 = vmatprep.subr.mxu0 0.0
    %1156 = vmatpush1.msra.mxu0 0.0
    %1157 = vmatprep.subr.mxu0 0.0
    %1158 = vmatpush1.msra.mxu0 0.0
    %1159 = vmatprep.subr.mxu0 0.0
    %1160 = vmatpush1.msra.mxu0 0.0
    %1161 = vmatprep.subr.mxu0 0.0
    %1162 = vmatpush1.msra.mxu0 0.0
    %1163 = vmatprep.subr.mxu0 0.0
    %1164 = vmatpush1.msra.mxu0 0.0
    %1165 = vmatprep.subr.mxu0 0.0
    %1166 = vmatpush1.msra.mxu0 0.0
    %1167 = vmatprep.subr.mxu0 0.0
    %1168 = vmatpush1.msra.mxu0 0.0
    %1169 = vmatprep.mubr.f32.mxu0 0.0
    %1170 = vmatmul.mubr.f32.gmra.mrb[0].mxu0 %v875
    %v1171 = vpop.f32.mrb[0].mxu0
    %v1172 = vadd.f32 0.0, %v1171
    %v1173 = vpop.f32.mrb[0].mxu0
    %1174 = vdwg.mxu0
    %v1175 = vadd.f32 %v1101, %v1172
    %s1176 = scalar_lea.vmem [#allocation5], 8
    %v1177 = vld [vmem:[%s1176] sm:$0xff]
    %v1178 = vld [vmem:[%s765] sm:$0xff]
    %v1179 = vld [vmem:[%s765 + $0x8] sm:$0xff]
    %v1180 = vld [vmem:[%s765 + $0x10] sm:$0xff]
    %1181 = vmatprep.subr.mxu0 0.0
    %1182 = vmatpush1.msra.mxu0 %v1178
    %1183 = vmatprep.subr.mxu0 0.0
    %1184 = vmatpush1.msra.mxu0 %v1179
    %1185 = vmatprep.subr.mxu0 0.0
    %1186 = vmatpush1.msra.mxu0 %v1180
    %1187 = vmatprep.subr.mxu0 0.0
    %1188 = vmatpush1.msra.mxu0 0.0
    %1189 = vmatprep.subr.mxu0 0.0
    %1190 = vmatpush1.msra.mxu0 0.0
    %1191 = vmatprep.subr.mxu0 0.0
    %1192 = vmatpush1.msra.mxu0 0.0
    %1193 = vmatprep.subr.mxu0 0.0
    %1194 = vmatpush1.msra.mxu0 0.0
    %1195 = vmatprep.subr.mxu0 0.0
    %1196 = vmatpush1.msra.mxu0 0.0
    %1197 = vmatprep.subr.mxu0 0.0
    %1198 = vmatpush1.msra.mxu0 0.0
    %1199 = vmatprep.subr.mxu0 0.0
    %1200 = vmatpush1.msra.mxu0 0.0
    %1201 = vmatprep.subr.mxu0 0.0
    %1202 = vmatpush1.msra.mxu0 0.0
    %1203 = vmatprep.subr.mxu0 0.0
    %1204 = vmatpush1.msra.mxu0 0.0
    %1205 = vmatprep.subr.mxu0 0.0
    %1206 = vmatpush1.msra.mxu0 0.0
    %1207 = vmatprep.subr.mxu0 0.0
    %1208 = vmatpush1.msra.mxu0 0.0
    %1209 = vmatprep.subr.mxu0 0.0
    %1210 = vmatpush1.msra.mxu0 0.0
    %1211 = vmatprep.subr.mxu0 0.0
    %1212 = vmatpush1.msra.mxu0 0.0
    %1213 = vmatprep.subr.mxu0 0.0
    %1214 = vmatpush1.msra.mxu0 0.0
    %1215 = vmatprep.subr.mxu0 0.0
    %1216 = vmatpush1.msra.mxu0 0.0
    %1217 = vmatprep.subr.mxu0 0.0
    %1218 = vmatpush1.msra.mxu0 0.0
    %1219 = vmatprep.subr.mxu0 0.0
    %1220 = vmatpush1.msra.mxu0 0.0
    %1221 = vmatprep.subr.mxu0 0.0
    %1222 = vmatpush1.msra.mxu0 0.0
    %1223 = vmatprep.subr.mxu0 0.0
    %1224 = vmatpush1.msra.mxu0 0.0
    %1225 = vmatprep.subr.mxu0 0.0
    %1226 = vmatpush1.msra.mxu0 0.0
    %1227 = vmatprep.subr.mxu0 0.0
    %1228 = vmatpush1.msra.mxu0 0.0
    %1229 = vmatprep.subr.mxu0 0.0
    %1230 = vmatpush1.msra.mxu0 0.0
    %1231 = vmatprep.subr.mxu0 0.0
    %1232 = vmatpush1.msra.mxu0 0.0
    %1233 = vmatprep.subr.mxu0 0.0
    %1234 = vmatpush1.msra.mxu0 0.0
    %1235 = vmatprep.subr.mxu0 0.0
    %1236 = vmatpush1.msra.mxu0 0.0
    %1237 = vmatprep.subr.mxu0 0.0
    %1238 = vmatpush1.msra.mxu0 0.0
    %1239 = vmatprep.subr.mxu0 0.0
    %1240 = vmatpush1.msra.mxu0 0.0
    %1241 = vmatprep.subr.mxu0 0.0
    %1242 = vmatpush1.msra.mxu0 0.0
    %1243 = vmatprep.subr.mxu0 0.0
    %1244 = vmatpush1.msra.mxu0 0.0
    %1245 = vmatprep.mubr.f32.mxu0 0.0
    %1246 = vmatmul.mubr.f32.gmra.mrb[0].mxu0 %v875
    %v1247 = vpop.f32.mrb[0].mxu0
    %v1248 = vadd.f32 0.0, %v1247
    %v1249 = vpop.f32.mrb[0].mxu0
    %1250 = vdwg.mxu0
    %v1251 = vadd.f32 %v1177, %v1248
    %v1252 = vxor.u32 %v1023, 2147483648
    %v1253 = vmul.f32 %v1252, 1.442695
    %v1254 = vpow.pop %v1253
    %v1255 = vadd.f32 %v1254, 1.0
    %v1256 = vrcp.pop %v1255
    %v1257 = vmul.f32 1.0, %v1256
    %v1258 = vxor.u32 %v1099, 2147483648
    %v1259 = vmul.f32 %v1258, 1.442695
    %v1260 = vpow.pop %v1259
    %v1261 = vadd.f32 %v1260, 1.0
    %v1262 = vrcp.pop %v1261
    %v1263 = vmul.f32 1.0, %v1262
    %v1264 = vtanh.pop %v1175
    %v1265 = vxor.u32 %v1251, 2147483648
    %v1266 = vmul.f32 %v1265, 1.442695
    %v1267 = vpow.pop %v1266
    %v1268 = vadd.f32 %v1267, 1.0
    %v1269 = vrcp.pop %v1268
    %v1270 = vmul.f32 1.0, %v1269
    %v1271 = vmul.f32 %v1263, %v861
    %v1272 = vmul.f32 %v1257, %v1264
    %v1273 = vadd.f32 %v1271, %v1272
    %v1274 = vtanh.pop %v1273
    %v1275 = vmul.f32 %v1270, %v1274
    %v1276 = vld [vmem:[%s4] sm:$0xff]
    %v1277 = vld [vmem:[%s4 + $0x8] sm:$0xff]
    %v1278 = vld [vmem:[%s4 + $0x10] sm:$0xff]
    %v1279 = vld [vmem:[%s5] sm:$0x1]
    %v1281 = vlaneseq
    %v1282 = vshrl.u32 %v1281, 7
    %v1283 = vsub.s32 0, %v1282
    %v1284 = vrot.slane %v1279, %v1283
    %v1287 = vsel %vm175, %v1275, 0
    %1289 = vmatprep.subr.mxu0 0.0
    %1290 = vmatpush1.msra.mxu0 %v1276
    %1291 = vmatprep.subr.mxu0 0.0
    %1292 = vmatpush1.msra.mxu0 %v1277
    %1293 = vmatprep.subr.mxu0 0.0
    %1294 = vmatpush1.msra.mxu0 %v1278
    %1295 = vmatprep.subr.mxu0 0.0
    %1296 = vmatpush1.msra.mxu0 0.0
    %1297 = vmatprep.subr.mxu0 0.0
    %1298 = vmatpush1.msra.mxu0 0.0
    %1299 = vmatprep.subr.mxu0 0.0
    %1300 = vmatpush1.msra.mxu0 0.0
    %1301 = vmatprep.subr.mxu0 0.0
    %1302 = vmatpush1.msra.mxu0 0.0
    %1303 = vmatprep.subr.mxu0 0.0
    %1304 = vmatpush1.msra.mxu0 0.0
    %1305 = vmatprep.subr.mxu0 0.0
    %1306 = vmatpush1.msra.mxu0 0.0
    %1307 = vmatprep.subr.mxu0 0.0
    %1308 = vmatpush1.msra.mxu0 0.0
    %1309 = vmatprep.subr.mxu0 0.0
    %1310 = vmatpush1.msra.mxu0 0.0
    %1311 = vmatprep.subr.mxu0 0.0
    %1312 = vmatpush1.msra.mxu0 0.0
    %1313 = vmatprep.subr.mxu0 0.0
    %1314 = vmatpush1.msra.mxu0 0.0
    %1315 = vmatprep.subr.mxu0 0.0
    %1316 = vmatpush1.msra.mxu0 0.0
    %1317 = vmatprep.subr.mxu0 0.0
    %1318 = vmatpush1.msra.mxu0 0.0
    %1319 = vmatprep.subr.mxu0 0.0
    %1320 = vmatpush1.msra.mxu0 0.0
    %1321 = vmatprep.subr.mxu0 0.0
    %1322 = vmatpush1.msra.mxu0 0.0
    %1323 = vmatprep.subr.mxu0 0.0
    %1324 = vmatpush1.msra.mxu0 0.0
    %1325 = vmatprep.subr.mxu0 0.0
    %1326 = vmatpush1.msra.mxu0 0.0
    %1327 = vmatprep.subr.mxu0 0.0
    %1328 = vmatpush1.msra.mxu0 0.0
    %1329 = vmatprep.subr.mxu0 0.0
    %1330 = vmatpush1.msra.mxu0 0.0
    %1331 = vmatprep.subr.mxu0 0.0
    %1332 = vmatpush1.msra.mxu0 0.0
    %1333 = vmatprep.subr.mxu0 0.0
    %1334 = vmatpush1.msra.mxu0 0.0
    %1335 = vmatprep.subr.mxu0 0.0
    %1336 = vmatpush1.msra.mxu0 0.0
    %1337 = vmatprep.subr.mxu0 0.0
    %1338 = vmatpush1.msra.mxu0 0.0
    %1339 = vmatprep.subr.mxu0 0.0
    %1340 = vmatpush1.msra.mxu0 0.0
    %1341 = vmatprep.subr.mxu0 0.0
    %1342 = vmatpush1.msra.mxu0 0.0
    %1343 = vmatprep.subr.mxu0 0.0
    %1344 = vmatpush1.msra.mxu0 0.0
    %1345 = vmatprep.subr.mxu0 0.0
    %1346 = vmatpush1.msra.mxu0 0.0
    %1347 = vmatprep.subr.mxu0 0.0
    %1348 = vmatpush1.msra.mxu0 0.0
    %1349 = vmatprep.subr.mxu0 0.0
    %1350 = vmatpush1.msra.mxu0 0.0
    %1351 = vmatprep.subr.mxu0 0.0
    %1352 = vmatpush1.msra.mxu0 0.0
    %1353 = vmatprep.mubr.f32.mxu0 0.0
    %1354 = vmatmul.mubr.f32.gmra.mrb[0].mxu0 %v1287
    %v1355 = vpop.f32.mrb[0].mxu0
    %v1356 = vadd.f32 %v1284, %v1355
    %v1357 = vpop.f32.mrb[0].mxu0
    %1358 = vdwg.mxu0
    %s1359 = scalar_lea.vmem [#allocation9], 8
    %1360 = vst [vmem:[%s1359] sm:$0xff] %v1356
    %s1361 = scalar_lea.vmem [#allocation2], 16
    %v1362 = vld [vmem:[%s1361] sm:$0xff]
    %v1363 = vld [vmem:[#allocation6] sm:$0xff]
    %v1364 = vld [vmem:[#allocation6 + $0x8] sm:$0xff]
    %v1365 = vld [vmem:[#allocation6 + $0x10] sm:$0xff]
    %1366 = vmatprep.subr.mxu0 0.0
    %1367 = vmatpush1.msra.mxu0 %v1363
    %1368 = vmatprep.subr.mxu0 0.0
    %1369 = vmatpush1.msra.mxu0 %v1364
    %1370 = vmatprep.subr.mxu0 0.0
    %1371 = vmatpush1.msra.mxu0 %v1365
    %1372 = vmatprep.subr.mxu0 0.0
    %1373 = vmatpush1.msra.mxu0 0.0
    %1374 = vmatprep.subr.mxu0 0.0
    %1375 = vmatpush1.msra.mxu0 0.0
    %1376 = vmatprep.subr.mxu0 0.0
    %1377 = vmatpush1.msra.mxu0 0.0
    %1378 = vmatprep.subr.mxu0 0.0
    %1379 = vmatpush1.msra.mxu0 0.0
    %1380 = vmatprep.subr.mxu0 0.0
    %1381 = vmatpush1.msra.mxu0 0.0
    %1382 = vmatprep.subr.mxu0 0.0
    %1383 = vmatpush1.msra.mxu0 0.0
    %1384 = vmatprep.subr.mxu0 0.0
    %1385 = vmatpush1.msra.mxu0 0.0
    %1386 = vmatprep.subr.mxu0 0.0
    %1387 = vmatpush1.msra.mxu0 0.0
    %1388 = vmatprep.subr.mxu0 0.0
    %1389 = vmatpush1.msra.mxu0 0.0
    %1390 = vmatprep.subr.mxu0 0.0
    %1391 = vmatpush1.msra.mxu0 0.0
    %1392 = vmatprep.subr.mxu0 0.0
    %1393 = vmatpush1.msra.mxu0 0.0
    %1394 = vmatprep.subr.mxu0 0.0
    %1395 = vmatpush1.msra.mxu0 0.0
    %1396 = vmatprep.subr.mxu0 0.0
    %1397 = vmatpush1.msra.mxu0 0.0
    %1398 = vmatprep.subr.mxu0 0.0
    %1399 = vmatpush1.msra.mxu0 0.0
    %1400 = vmatprep.subr.mxu0 0.0
    %1401 = vmatpush1.msra.mxu0 0.0
    %1402 = vmatprep.subr.mxu0 0.0
    %1403 = vmatpush1.msra.mxu0 0.0
    %1404 = vmatprep.subr.mxu0 0.0
    %1405 = vmatpush1.msra.mxu0 0.0
    %1406 = vmatprep.subr.mxu0 0.0
    %1407 = vmatpush1.msra.mxu0 0.0
    %1408 = vmatprep.subr.mxu0 0.0
    %1409 = vmatpush1.msra.mxu0 0.0
    %1410 = vmatprep.subr.mxu0 0.0
    %1411 = vmatpush1.msra.mxu0 0.0
    %1412 = vmatprep.subr.mxu0 0.0
    %1413 = vmatpush1.msra.mxu0 0.0
    %1414 = vmatprep.subr.mxu0 0.0
    %1415 = vmatpush1.msra.mxu0 0.0
    %1416 = vmatprep.subr.mxu0 0.0
    %1417 = vmatpush1.msra.mxu0 0.0
    %1418 = vmatprep.subr.mxu0 0.0
    %1419 = vmatpush1.msra.mxu0 0.0
    %1420 = vmatprep.subr.mxu0 0.0
    %1421 = vmatpush1.msra.mxu0 0.0
    %1422 = vmatprep.subr.mxu0 0.0
    %1423 = vmatpush1.msra.mxu0 0.0
    %1424 = vmatprep.subr.mxu0 0.0
    %1425 = vmatpush1.msra.mxu0 0.0
    %1426 = vmatprep.subr.mxu0 0.0
    %1427 = vmatpush1.msra.mxu0 0.0
    %1428 = vmatprep.subr.mxu0 0.0
    %1429 = vmatpush1.msra.mxu0 0.0
    %1430 = vmatprep.mubr.f32.mxu0 0.0
    %1431 = vmatmul.mubr.f32.gmra.mrb[0].mxu0 %v1287
    %v1432 = vpop.f32.mrb[0].mxu0
    %v1433 = vadd.f32 0.0, %v1432
    %v1434 = vpop.f32.mrb[0].mxu0
    %1435 = vdwg.mxu0
    %v1436 = vadd.f32 %v1362, %v1433
    %s1437 = scalar_lea.vmem [#allocation3], 16
    %v1438 = vld [vmem:[%s1437] sm:$0xff]
    %v1439 = vld [vmem:[%s613] sm:$0xff]
    %v1440 = vld [vmem:[%s613 + $0x8] sm:$0xff]
    %v1441 = vld [vmem:[%s613 + $0x10] sm:$0xff]
    %1442 = vmatprep.subr.mxu0 0.0
    %1443 = vmatpush1.msra.mxu0 %v1439
    %1444 = vmatprep.subr.mxu0 0.0
    %1445 = vmatpush1.msra.mxu0 %v1440
    %1446 = vmatprep.subr.mxu0 0.0
    %1447 = vmatpush1.msra.mxu0 %v1441
    %1448 = vmatprep.subr.mxu0 0.0
    %1449 = vmatpush1.msra.mxu0 0.0
    %1450 = vmatprep.subr.mxu0 0.0
    %1451 = vmatpush1.msra.mxu0 0.0
    %1452 = vmatprep.subr.mxu0 0.0
    %1453 = vmatpush1.msra.mxu0 0.0
    %1454 = vmatprep.subr.mxu0 0.0
    %1455 = vmatpush1.msra.mxu0 0.0
    %1456 = vmatprep.subr.mxu0 0.0
    %1457 = vmatpush1.msra.mxu0 0.0
    %1458 = vmatprep.subr.mxu0 0.0
    %1459 = vmatpush1.msra.mxu0 0.0
    %1460 = vmatprep.subr.mxu0 0.0
    %1461 = vmatpush1.msra.mxu0 0.0
    %1462 = vmatprep.subr.mxu0 0.0
    %1463 = vmatpush1.msra.mxu0 0.0
    %1464 = vmatprep.subr.mxu0 0.0
    %1465 = vmatpush1.msra.mxu0 0.0
    %1466 = vmatprep.subr.mxu0 0.0
    %1467 = vmatpush1.msra.mxu0 0.0
    %1468 = vmatprep.subr.mxu0 0.0
    %1469 = vmatpush1.msra.mxu0 0.0
    %1470 = vmatprep.subr.mxu0 0.0
    %1471 = vmatpush1.msra.mxu0 0.0
    %1472 = vmatprep.subr.mxu0 0.0
    %1473 = vmatpush1.msra.mxu0 0.0
    %1474 = vmatprep.subr.mxu0 0.0
    %1475 = vmatpush1.msra.mxu0 0.0
    %1476 = vmatprep.subr.mxu0 0.0
    %1477 = vmatpush1.msra.mxu0 0.0
    %1478 = vmatprep.subr.mxu0 0.0
    %1479 = vmatpush1.msra.mxu0 0.0
    %1480 = vmatprep.subr.mxu0 0.0
    %1481 = vmatpush1.msra.mxu0 0.0
    %1482 = vmatprep.subr.mxu0 0.0
    %1483 = vmatpush1.msra.mxu0 0.0
    %1484 = vmatprep.subr.mxu0 0.0
    %1485 = vmatpush1.msra.mxu0 0.0
    %1486 = vmatprep.subr.mxu0 0.0
    %1487 = vmatpush1.msra.mxu0 0.0
    %1488 = vmatprep.subr.mxu0 0.0
    %1489 = vmatpush1.msra.mxu0 0.0
    %1490 = vmatprep.subr.mxu0 0.0
    %1491 = vmatpush1.msra.mxu0 0.0
    %1492 = vmatprep.subr.mxu0 0.0
    %1493 = vmatpush1.msra.mxu0 0.0
    %1494 = vmatprep.subr.mxu0 0.0
    %1495 = vmatpush1.msra.mxu0 0.0
    %1496 = vmatprep.subr.mxu0 0.0
    %1497 = vmatpush1.msra.mxu0 0.0
    %1498 = vmatprep.subr.mxu0 0.0
    %1499 = vmatpush1.msra.mxu0 0.0
    %1500 = vmatprep.subr.mxu0 0.0
    %1501 = vmatpush1.msra.mxu0 0.0
    %1502 = vmatprep.subr.mxu0 0.0
    %1503 = vmatpush1.msra.mxu0 0.0
    %1504 = vmatprep.subr.mxu0 0.0
    %1505 = vmatpush1.msra.mxu0 0.0
    %1506 = vmatprep.mubr.f32.mxu0 0.0
    %1507 = vmatmul.mubr.f32.gmra.mrb[0].mxu0 %v1287
    %v1508 = vpop.f32.mrb[0].mxu0
    %v1509 = vadd.f32 0.0, %v1508
    %v1510 = vpop.f32.mrb[0].mxu0
    %1511 = vdwg.mxu0
    %v1512 = vadd.f32 %v1438, %v1509
    %s1513 = scalar_lea.vmem [#allocation4], 16
    %v1514 = vld [vmem:[%s1513] sm:$0xff]
    %v1515 = vld [vmem:[%s689] sm:$0xff]
    %v1516 = vld [vmem:[%s689 + $0x8] sm:$0xff]
    %v1517 = vld [vmem:[%s689 + $0x10] sm:$0xff]
    %1518 = vmatprep.subr.mxu0 0.0
    %1519 = vmatpush1.msra.mxu0 %v1515
    %1520 = vmatprep.subr.mxu0 0.0
    %1521 = vmatpush1.msra.mxu0 %v1516
    %1522 = vmatprep.subr.mxu0 0.0
    %1523 = vmatpush1.msra.mxu0 %v1517
    %1524 = vmatprep.subr.mxu0 0.0
    %1525 = vmatpush1.msra.mxu0 0.0
    %1526 = vmatprep.subr.mxu0 0.0
    %1527 = vmatpush1.msra.mxu0 0.0
    %1528 = vmatprep.subr.mxu0 0.0
    %1529 = vmatpush1.msra.mxu0 0.0
    %1530 = vmatprep.subr.mxu0 0.0
    %1531 = vmatpush1.msra.mxu0 0.0
    %1532 = vmatprep.subr.mxu0 0.0
    %1533 = vmatpush1.msra.mxu0 0.0
    %1534 = vmatprep.subr.mxu0 0.0
    %1535 = vmatpush1.msra.mxu0 0.0
    %1536 = vmatprep.subr.mxu0 0.0
    %1537 = vmatpush1.msra.mxu0 0.0
    %1538 = vmatprep.subr.mxu0 0.0
    %1539 = vmatpush1.msra.mxu0 0.0
    %1540 = vmatprep.subr.mxu0 0.0
    %1541 = vmatpush1.msra.mxu0 0.0
    %1542 = vmatprep.subr.mxu0 0.0
    %1543 = vmatpush1.msra.mxu0 0.0
    %1544 = vmatprep.subr.mxu0 0.0
    %1545 = vmatpush1.msra.mxu0 0.0
    %1546 = vmatprep.subr.mxu0 0.0
    %1547 = vmatpush1.msra.mxu0 0.0
    %1548 = vmatprep.subr.mxu0 0.0
    %1549 = vmatpush1.msra.mxu0 0.0
    %1550 = vmatprep.subr.mxu0 0.0
    %1551 = vmatpush1.msra.mxu0 0.0
    %1552 = vmatprep.subr.mxu0 0.0
    %1553 = vmatpush1.msra.mxu0 0.0
    %1554 = vmatprep.subr.mxu0 0.0
    %1555 = vmatpush1.msra.mxu0 0.0
    %1556 = vmatprep.subr.mxu0 0.0
    %1557 = vmatpush1.msra.mxu0 0.0
    %1558 = vmatprep.subr.mxu0 0.0
    %1559 = vmatpush1.msra.mxu0 0.0
    %1560 = vmatprep.subr.mxu0 0.0
    %1561 = vmatpush1.msra.mxu0 0.0
    %1562 = vmatprep.subr.mxu0 0.0
    %1563 = vmatpush1.msra.mxu0 0.0
    %1564 = vmatprep.subr.mxu0 0.0
    %1565 = vmatpush1.msra.mxu0 0.0
    %1566 = vmatprep.subr.mxu0 0.0
    %1567 = vmatpush1.msra.mxu0 0.0
    %1568 = vmatprep.subr.mxu0 0.0
    %1569 = vmatpush1.msra.mxu0 0.0
    %1570 = vmatprep.subr.mxu0 0.0
    %1571 = vmatpush1.msra.mxu0 0.0
    %1572 = vmatprep.subr.mxu0 0.0
    %1573 = vmatpush1.msra.mxu0 0.0
    %1574 = vmatprep.subr.mxu0 0.0
    %1575 = vmatpush1.msra.mxu0 0.0
    %1576 = vmatprep.subr.mxu0 0.0
    %1577 = vmatpush1.msra.mxu0 0.0
    %1578 = vmatprep.subr.mxu0 0.0
    %1579 = vmatpush1.msra.mxu0 0.0
    %1580 = vmatprep.subr.mxu0 0.0
    %1581 = vmatpush1.msra.mxu0 0.0
    %1582 = vmatprep.mubr.f32.mxu0 0.0
    %1583 = vmatmul.mubr.f32.gmra.mrb[0].mxu0 %v1287
    %v1584 = vpop.f32.mrb[0].mxu0
    %v1585 = vadd.f32 0.0, %v1584
    %v1586 = vpop.f32.mrb[0].mxu0
    %1587 = vdwg.mxu0
    %v1588 = vadd.f32 %v1514, %v1585
    %s1589 = scalar_lea.vmem [#allocation5], 16
    %v1590 = vld [vmem:[%s1589] sm:$0xff]
    %v1591 = vld [vmem:[%s765] sm:$0xff]
    %v1592 = vld [vmem:[%s765 + $0x8] sm:$0xff]
    %v1593 = vld [vmem:[%s765 + $0x10] sm:$0xff]
    %1594 = vmatprep.subr.mxu0 0.0
    %1595 = vmatpush1.msra.mxu0 %v1591
    %1596 = vmatprep.subr.mxu0 0.0
    %1597 = vmatpush1.msra.mxu0 %v1592
    %1598 = vmatprep.subr.mxu0 0.0
    %1599 = vmatpush1.msra.mxu0 %v1593
    %1600 = vmatprep.subr.mxu0 0.0
    %1601 = vmatpush1.msra.mxu0 0.0
    %1602 = vmatprep.subr.mxu0 0.0
    %1603 = vmatpush1.msra.mxu0 0.0
    %1604 = vmatprep.subr.mxu0 0.0
    %1605 = vmatpush1.msra.mxu0 0.0
    %1606 = vmatprep.subr.mxu0 0.0
    %1607 = vmatpush1.msra.mxu0 0.0
    %1608 = vmatprep.subr.mxu0 0.0
    %1609 = vmatpush1.msra.mxu0 0.0
    %1610 = vmatprep.subr.mxu0 0.0
    %1611 = vmatpush1.msra.mxu0 0.0
    %1612 = vmatprep.subr.mxu0 0.0
    %1613 = vmatpush1.msra.mxu0 0.0
    %1614 = vmatprep.subr.mxu0 0.0
    %1615 = vmatpush1.msra.mxu0 0.0
    %1616 = vmatprep.subr.mxu0 0.0
    %1617 = vmatpush1.msra.mxu0 0.0
    %1618 = vmatprep.subr.mxu0 0.0
    %1619 = vmatpush1.msra.mxu0 0.0
    %1620 = vmatprep.subr.mxu0 0.0
    %1621 = vmatpush1.msra.mxu0 0.0
    %1622 = vmatprep.subr.mxu0 0.0
    %1623 = vmatpush1.msra.mxu0 0.0
    %1624 = vmatprep.subr.mxu0 0.0
    %1625 = vmatpush1.msra.mxu0 0.0
    %1626 = vmatprep.subr.mxu0 0.0
    %1627 = vmatpush1.msra.mxu0 0.0
    %1628 = vmatprep.subr.mxu0 0.0
    %1629 = vmatpush1.msra.mxu0 0.0
    %1630 = vmatprep.subr.mxu0 0.0
    %1631 = vmatpush1.msra.mxu0 0.0
    %1632 = vmatprep.subr.mxu0 0.0
    %1633 = vmatpush1.msra.mxu0 0.0
    %1634 = vmatprep.subr.mxu0 0.0
    %1635 = vmatpush1.msra.mxu0 0.0
    %1636 = vmatprep.subr.mxu0 0.0
    %1637 = vmatpush1.msra.mxu0 0.0
    %1638 = vmatprep.subr.mxu0 0.0
    %1639 = vmatpush1.msra.mxu0 0.0
    %1640 = vmatprep.subr.mxu0 0.0
    %1641 = vmatpush1.msra.mxu0 0.0
    %1642 = vmatprep.subr.mxu0 0.0
    %1643 = vmatpush1.msra.mxu0 0.0
    %1644 = vmatprep.subr.mxu0 0.0
    %1645 = vmatpush1.msra.mxu0 0.0
    %1646 = vmatprep.subr.mxu0 0.0
    %1647 = vmatpush1.msra.mxu0 0.0
    %1648 = vmatprep.subr.mxu0 0.0
    %1649 = vmatpush1.msra.mxu0 0.0
    %1650 = vmatprep.subr.mxu0 0.0
    %1651 = vmatpush1.msra.mxu0 0.0
    %1652 = vmatprep.subr.mxu0 0.0
    %1653 = vmatpush1.msra.mxu0 0.0
    %1654 = vmatprep.subr.mxu0 0.0
    %1655 = vmatpush1.msra.mxu0 0.0
    %1656 = vmatprep.subr.mxu0 0.0
    %1657 = vmatpush1.msra.mxu0 0.0
    %1658 = vmatprep.mubr.f32.mxu0 0.0
    %1659 = vmatmul.mubr.f32.gmra.mrb[0].mxu0 %v1287
    %v1660 = vpop.f32.mrb[0].mxu0
    %v1661 = vadd.f32 0.0, %v1660
    %v1662 = vpop.f32.mrb[0].mxu0
    %1663 = vdwg.mxu0
    %v1664 = vadd.f32 %v1590, %v1661
    %v1665 = vxor.u32 %v1436, 2147483648
    %v1666 = vmul.f32 %v1665, 1.442695
    %v1667 = vpow.pop %v1666
    %v1668 = vadd.f32 %v1667, 1.0
    %v1669 = vrcp.pop %v1668
    %v1670 = vmul.f32 1.0, %v1669
    %v1671 = vxor.u32 %v1512, 2147483648
    %v1672 = vmul.f32 %v1671, 1.442695
    %v1673 = vpow.pop %v1672
    %v1674 = vadd.f32 %v1673, 1.0
    %v1675 = vrcp.pop %v1674
    %v1676 = vmul.f32 1.0, %v1675
    %v1677 = vtanh.pop %v1588
    %v1678 = vxor.u32 %v1664, 2147483648
    %v1679 = vmul.f32 %v1678, 1.442695
    %v1680 = vpow.pop %v1679
    %v1681 = vadd.f32 %v1680, 1.0
    %v1682 = vrcp.pop %v1681
    %v1683 = vmul.f32 1.0, %v1682
    %v1684 = vmul.f32 %v1676, %v1273
    %v1685 = vmul.f32 %v1670, %v1677
    %v1686 = vadd.f32 %v1684, %v1685
    %v1687 = vtanh.pop %v1686
    %v1688 = vmul.f32 %v1683, %v1687
    %v1689 = vld [vmem:[%s4] sm:$0xff]
    %v1690 = vld [vmem:[%s4 + $0x8] sm:$0xff]
    %v1691 = vld [vmem:[%s4 + $0x10] sm:$0xff]
    %v1692 = vld [vmem:[%s5] sm:$0x1]
    %v1694 = vlaneseq
    %v1695 = vshrl.u32 %v1694, 7
    %v1696 = vsub.s32 0, %v1695
    %v1697 = vrot.slane %v1692, %v1696
    %v1700 = vsel %vm175, %v1688, 0
    %1702 = vmatprep.subr.mxu0 0.0
    %1703 = vmatpush1.msra.mxu0 %v1689
    %1704 = vmatprep.subr.mxu0 0.0
    %1705 = vmatpush1.msra.mxu0 %v1690
    %1706 = vmatprep.subr.mxu0 0.0
    %1707 = vmatpush1.msra.mxu0 %v1691
    %1708 = vmatprep.subr.mxu0 0.0
    %1709 = vmatpush1.msra.mxu0 0.0
    %1710 = vmatprep.subr.mxu0 0.0
    %1711 = vmatpush1.msra.mxu0 0.0
    %1712 = vmatprep.subr.mxu0 0.0
    %1713 = vmatpush1.msra.mxu0 0.0
    %1714 = vmatprep.subr.mxu0 0.0
    %1715 = vmatpush1.msra.mxu0 0.0
    %1716 = vmatprep.subr.mxu0 0.0
    %1717 = vmatpush1.msra.mxu0 0.0
    %1718 = vmatprep.subr.mxu0 0.0
    %1719 = vmatpush1.msra.mxu0 0.0
    %1720 = vmatprep.subr.mxu0 0.0
    %1721 = vmatpush1.msra.mxu0 0.0
    %1722 = vmatprep.subr.mxu0 0.0
    %1723 = vmatpush1.msra.mxu0 0.0
    %1724 = vmatprep.subr.mxu0 0.0
    %1725 = vmatpush1.msra.mxu0 0.0
    %1726 = vmatprep.subr.mxu0 0.0
    %1727 = vmatpush1.msra.mxu0 0.0
    %1728 = vmatprep.subr.mxu0 0.0
    %1729 = vmatpush1.msra.mxu0 0.0
    %1730 = vmatprep.subr.mxu0 0.0
    %1731 = vmatpush1.msra.mxu0 0.0
    %1732 = vmatprep.subr.mxu0 0.0
    %1733 = vmatpush1.msra.mxu0 0.0
    %1734 = vmatprep.subr.mxu0 0.0
    %1735 = vmatpush1.msra.mxu0 0.0
    %1736 = vmatprep.subr.mxu0 0.0
    %1737 = vmatpush1.msra.mxu0 0.0
    %1738 = vmatprep.subr.mxu0 0.0
    %1739 = vmatpush1.msra.mxu0 0.0
    %1740 = vmatprep.subr.mxu0 0.0
    %1741 = vmatpush1.msra.mxu0 0.0
    %1742 = vmatprep.subr.mxu0 0.0
    %1743 = vmatpush1.msra.mxu0 0.0
    %1744 = vmatprep.subr.mxu0 0.0
    %1745 = vmatpush1.msra.mxu0 0.0
    %1746 = vmatprep.subr.mxu0 0.0
    %1747 = vmatpush1.msra.mxu0 0.0
    %1748 = vmatprep.subr.mxu0 0.0
    %1749 = vmatpush1.msra.mxu0 0.0
    %1750 = vmatprep.subr.mxu0 0.0
    %1751 = vmatpush1.msra.mxu0 0.0
    %1752 = vmatprep.subr.mxu0 0.0
    %1753 = vmatpush1.msra.mxu0 0.0
    %1754 = vmatprep.subr.mxu0 0.0
    %1755 = vmatpush1.msra.mxu0 0.0
    %1756 = vmatprep.subr.mxu0 0.0
    %1757 = vmatpush1.msra.mxu0 0.0
    %1758 = vmatprep.subr.mxu0 0.0
    %1759 = vmatpush1.msra.mxu0 0.0
    %1760 = vmatprep.subr.mxu0 0.0
    %1761 = vmatpush1.msra.mxu0 0.0
    %1762 = vmatprep.subr.mxu0 0.0
    %1763 = vmatpush1.msra.mxu0 0.0
    %1764 = vmatprep.subr.mxu0 0.0
    %1765 = vmatpush1.msra.mxu0 0.0
    %1766 = vmatprep.mubr.f32.mxu0 0.0
    %1767 = vmatmul.mubr.f32.gmra.mrb[0].mxu0 %v1700
    %v1768 = vpop.f32.mrb[0].mxu0
    %v1769 = vadd.f32 %v1697, %v1768
    %v1770 = vpop.f32.mrb[0].mxu0
    %1771 = vdwg.mxu0
    %s1772 = scalar_lea.vmem [#allocation9], 16
    %1773 = vst [vmem:[%s1772] sm:$0xff] %v1769
    %s1774 = scalar_lea.vmem [#allocation2], 24
    %v1775 = vld [vmem:[%s1774] sm:$0xff]
    %v1776 = vld [vmem:[#allocation6] sm:$0xff]
    %v1777 = vld [vmem:[#allocation6 + $0x8] sm:$0xff]
    %v1778 = vld [vmem:[#allocation6 + $0x10] sm:$0xff]
    %1779 = vmatprep.subr.mxu0 0.0
    %1780 = vmatpush1.msra.mxu0 %v1776
    %1781 = vmatprep.subr.mxu0 0.0
    %1782 = vmatpush1.msra.mxu0 %v1777
    %1783 = vmatprep.subr.mxu0 0.0
    %1784 = vmatpush1.msra.mxu0 %v1778
    %1785 = vmatprep.subr.mxu0 0.0
    %1786 = vmatpush1.msra.mxu0 0.0
    %1787 = vmatprep.subr.mxu0 0.0
    %1788 = vmatpush1.msra.mxu0 0.0
    %1789 = vmatprep.subr.mxu0 0.0
    %1790 = vmatpush1.msra.mxu0 0.0
    %1791 = vmatprep.subr.mxu0 0.0
    %1792 = vmatpush1.msra.mxu0 0.0
    %1793 = vmatprep.subr.mxu0 0.0
    %1794 = vmatpush1.msra.mxu0 0.0
    %1795 = vmatprep.subr.mxu0 0.0
    %1796 = vmatpush1.msra.mxu0 0.0
    %1797 = vmatprep.subr.mxu0 0.0
    %1798 = vmatpush1.msra.mxu0 0.0
    %1799 = vmatprep.subr.mxu0 0.0
    %1800 = vmatpush1.msra.mxu0 0.0
    %1801 = vmatprep.subr.mxu0 0.0
    %1802 = vmatpush1.msra.mxu0 0.0
    %1803 = vmatprep.subr.mxu0 0.0
    %1804 = vmatpush1.msra.mxu0 0.0
    %1805 = vmatprep.subr.mxu0 0.0
    %1806 = vmatpush1.msra.mxu0 0.0
    %1807 = vmatprep.subr.mxu0 0.0
    %1808 = vmatpush1.msra.mxu0 0.0
    %1809 = vmatprep.subr.mxu0 0.0
    %1810 = vmatpush1.msra.mxu0 0.0
    %1811 = vmatprep.subr.mxu0 0.0
    %1812 = vmatpush1.msra.mxu0 0.0
    %1813 = vmatprep.subr.mxu0 0.0
    %1814 = vmatpush1.msra.mxu0 0.0
    %1815 = vmatprep.subr.mxu0 0.0
    %1816 = vmatpush1.msra.mxu0 0.0
    %1817 = vmatprep.subr.mxu0 0.0
    %1818 = vmatpush1.msra.mxu0 0.0
    %1819 = vmatprep.subr.mxu0 0.0
    %1820 = vmatpush1.msra.mxu0 0.0
    %1821 = vmatprep.subr.mxu0 0.0
    %1822 = vmatpush1.msra.mxu0 0.0
    %1823 = vmatprep.subr.mxu0 0.0
    %1824 = vmatpush1.msra.mxu0 0.0
    %1825 = vmatprep.subr.mxu0 0.0
    %1826 = vmatpush1.msra.mxu0 0.0
    %1827 = vmatprep.subr.mxu0 0.0
    %1828 = vmatpush1.msra.mxu0 0.0
    %1829 = vmatprep.subr.mxu0 0.0
    %1830 = vmatpush1.msra.mxu0 0.0
    %1831 = vmatprep.subr.mxu0 0.0
    %1832 = vmatpush1.msra.mxu0 0.0
    %1833 = vmatprep.subr.mxu0 0.0
    %1834 = vmatpush1.msra.mxu0 0.0
    %1835 = vmatprep.subr.mxu0 0.0
    %1836 = vmatpush1.msra.mxu0 0.0
    %1837 = vmatprep.subr.mxu0 0.0
    %1838 = vmatpush1.msra.mxu0 0.0
    %1839 = vmatprep.subr.mxu0 0.0
    %1840 = vmatpush1.msra.mxu0 0.0
    %1841 = vmatprep.subr.mxu0 0.0
    %1842 = vmatpush1.msra.mxu0 0.0
    %1843 = vmatprep.mubr.f32.mxu0 0.0
    %1844 = vmatmul.mubr.f32.gmra.mrb[0].mxu0 %v1700
    %v1845 = vpop.f32.mrb[0].mxu0
    %v1846 = vadd.f32 0.0, %v1845
    %v1847 = vpop.f32.mrb[0].mxu0
    %1848 = vdwg.mxu0
    %v1849 = vadd.f32 %v1775, %v1846
    %s1850 = scalar_lea.vmem [#allocation3], 24
    %v1851 = vld [vmem:[%s1850] sm:$0xff]
    %v1852 = vld [vmem:[%s613] sm:$0xff]
    %v1853 = vld [vmem:[%s613 + $0x8] sm:$0xff]
    %v1854 = vld [vmem:[%s613 + $0x10] sm:$0xff]
    %1855 = vmatprep.subr.mxu0 0.0
    %1856 = vmatpush1.msra.mxu0 %v1852
    %1857 = vmatprep.subr.mxu0 0.0
    %1858 = vmatpush1.msra.mxu0 %v1853
    %1859 = vmatprep.subr.mxu0 0.0
    %1860 = vmatpush1.msra.mxu0 %v1854
    %1861 = vmatprep.subr.mxu0 0.0
    %1862 = vmatpush1.msra.mxu0 0.0
    %1863 = vmatprep.subr.mxu0 0.0
    %1864 = vmatpush1.msra.mxu0 0.0
    %1865 = vmatprep.subr.mxu0 0.0
    %1866 = vmatpush1.msra.mxu0 0.0
    %1867 = vmatprep.subr.mxu0 0.0
    %1868 = vmatpush1.msra.mxu0 0.0
    %1869 = vmatprep.subr.mxu0 0.0
    %1870 = vmatpush1.msra.mxu0 0.0
    %1871 = vmatprep.subr.mxu0 0.0
    %1872 = vmatpush1.msra.mxu0 0.0
    %1873 = vmatprep.subr.mxu0 0.0
    %1874 = vmatpush1.msra.mxu0 0.0
    %1875 = vmatprep.subr.mxu0 0.0
    %1876 = vmatpush1.msra.mxu0 0.0
    %1877 = vmatprep.subr.mxu0 0.0
    %1878 = vmatpush1.msra.mxu0 0.0
    %1879 = vmatprep.subr.mxu0 0.0
    %1880 = vmatpush1.msra.mxu0 0.0
    %1881 = vmatprep.subr.mxu0 0.0
    %1882 = vmatpush1.msra.mxu0 0.0
    %1883 = vmatprep.subr.mxu0 0.0
    %1884 = vmatpush1.msra.mxu0 0.0
    %1885 = vmatprep.subr.mxu0 0.0
    %1886 = vmatpush1.msra.mxu0 0.0
    %1887 = vmatprep.subr.mxu0 0.0
    %1888 = vmatpush1.msra.mxu0 0.0
    %1889 = vmatprep.subr.mxu0 0.0
    %1890 = vmatpush1.msra.mxu0 0.0
    %1891 = vmatprep.subr.mxu0 0.0
    %1892 = vmatpush1.msra.mxu0 0.0
    %1893 = vmatprep.subr.mxu0 0.0
    %1894 = vmatpush1.msra.mxu0 0.0
    %1895 = vmatprep.subr.mxu0 0.0
    %1896 = vmatpush1.msra.mxu0 0.0
    %1897 = vmatprep.subr.mxu0 0.0
    %1898 = vmatpush1.msra.mxu0 0.0
    %1899 = vmatprep.subr.mxu0 0.0
    %1900 = vmatpush1.msra.mxu0 0.0
    %1901 = vmatprep.subr.mxu0 0.0
    %1902 = vmatpush1.msra.mxu0 0.0
    %1903 = vmatprep.subr.mxu0 0.0
    %1904 = vmatpush1.msra.mxu0 0.0
    %1905 = vmatprep.subr.mxu0 0.0
    %1906 = vmatpush1.msra.mxu0 0.0
    %1907 = vmatprep.subr.mxu0 0.0
    %1908 = vmatpush1.msra.mxu0 0.0
    %1909 = vmatprep.subr.mxu0 0.0
    %1910 = vmatpush1.msra.mxu0 0.0
    %1911 = vmatprep.subr.mxu0 0.0
    %1912 = vmatpush1.msra.mxu0 0.0
    %1913 = vmatprep.subr.mxu0 0.0
    %1914 = vmatpush1.msra.mxu0 0.0
    %1915 = vmatprep.subr.mxu0 0.0
    %1916 = vmatpush1.msra.mxu0 0.0
    %1917 = vmatprep.subr.mxu0 0.0
    %1918 = vmatpush1.msra.mxu0 0.0
    %1919 = vmatprep.mubr.f32.mxu0 0.0
    %1920 = vmatmul.mubr.f32.gmra.mrb[0].mxu0 %v1700
    %v1921 = vpop.f32.mrb[0].mxu0
    %v1922 = vadd.f32 0.0, %v1921
    %v1923 = vpop.f32.mrb[0].mxu0
    %1924 = vdwg.mxu0
    %v1925 = vadd.f32 %v1851, %v1922
    %s1926 = scalar_lea.vmem [#allocation4], 24
    %v1927 = vld [vmem:[%s1926] sm:$0xff]
    %v1928 = vld [vmem:[%s689] sm:$0xff]
    %v1929 = vld [vmem:[%s689 + $0x8] sm:$0xff]
    %v1930 = vld [vmem:[%s689 + $0x10] sm:$0xff]
    %1931 = vmatprep.subr.mxu0 0.0
    %1932 = vmatpush1.msra.mxu0 %v1928
    %1933 = vmatprep.subr.mxu0 0.0
    %1934 = vmatpush1.msra.mxu0 %v1929
    %1935 = vmatprep.subr.mxu0 0.0
    %1936 = vmatpush1.msra.mxu0 %v1930
    %1937 = vmatprep.subr.mxu0 0.0
    %1938 = vmatpush1.msra.mxu0 0.0
    %1939 = vmatprep.subr.mxu0 0.0
    %1940 = vmatpush1.msra.mxu0 0.0
    %1941 = vmatprep.subr.mxu0 0.0
    %1942 = vmatpush1.msra.mxu0 0.0
    %1943 = vmatprep.subr.mxu0 0.0
    %1944 = vmatpush1.msra.mxu0 0.0
    %1945 = vmatprep.subr.mxu0 0.0
    %1946 = vmatpush1.msra.mxu0 0.0
    %1947 = vmatprep.subr.mxu0 0.0
    %1948 = vmatpush1.msra.mxu0 0.0
    %1949 = vmatprep.subr.mxu0 0.0
    %1950 = vmatpush1.msra.mxu0 0.0
    %1951 = vmatprep.subr.mxu0 0.0
    %1952 = vmatpush1.msra.mxu0 0.0
    %1953 = vmatprep.subr.mxu0 0.0
    %1954 = vmatpush1.msra.mxu0 0.0
    %1955 = vmatprep.subr.mxu0 0.0
    %1956 = vmatpush1.msra.mxu0 0.0
    %1957 = vmatprep.subr.mxu0 0.0
    %1958 = vmatpush1.msra.mxu0 0.0
    %1959 = vmatprep.subr.mxu0 0.0
    %1960 = vmatpush1.msra.mxu0 0.0
    %1961 = vmatprep.subr.mxu0 0.0
    %1962 = vmatpush1.msra.mxu0 0.0
    %1963 = vmatprep.subr.mxu0 0.0
    %1964 = vmatpush1.msra.mxu0 0.0
    %1965 = vmatprep.subr.mxu0 0.0
    %1966 = vmatpush1.msra.mxu0 0.0
    %1967 = vmatprep.subr.mxu0 0.0
    %1968 = vmatpush1.msra.mxu0 0.0
    %1969 = vmatprep.subr.mxu0 0.0
    %1970 = vmatpush1.msra.mxu0 0.0
    %1971 = vmatprep.subr.mxu0 0.0
    %1972 = vmatpush1.msra.mxu0 0.0
    %1973 = vmatprep.subr.mxu0 0.0
    %1974 = vmatpush1.msra.mxu0 0.0
    %1975 = vmatprep.subr.mxu0 0.0
    %1976 = vmatpush1.msra.mxu0 0.0
    %1977 = vmatprep.subr.mxu0 0.0
    %1978 = vmatpush1.msra.mxu0 0.0
    %1979 = vmatprep.subr.mxu0 0.0
    %1980 = vmatpush1.msra.mxu0 0.0
    %1981 = vmatprep.subr.mxu0 0.0
    %1982 = vmatpush1.msra.mxu0 0.0
    %1983 = vmatprep.subr.mxu0 0.0
    %1984 = vmatpush1.msra.mxu0 0.0
    %1985 = vmatprep.subr.mxu0 0.0
    %1986 = vmatpush1.msra.mxu0 0.0
    %1987 = vmatprep.subr.mxu0 0.0
    %1988 = vmatpush1.msra.mxu0 0.0
    %1989 = vmatprep.subr.mxu0 0.0
    %1990 = vmatpush1.msra.mxu0 0.0
    %1991 = vmatprep.subr.mxu0 0.0
    %1992 = vmatpush1.msra.mxu0 0.0
    %1993 = vmatprep.subr.mxu0 0.0
    %1994 = vmatpush1.msra.mxu0 0.0
    %1995 = vmatprep.mubr.f32.mxu0 0.0
    %1996 = vmatmul.mubr.f32.gmra.mrb[0].mxu0 %v1700
    %v1997 = vpop.f32.mrb[0].mxu0
    %v1998 = vadd.f32 0.0, %v1997
    %v1999 = vpop.f32.mrb[0].mxu0
    %2000 = vdwg.mxu0
    %v2001 = vadd.f32 %v1927, %v1998
    %s2002 = scalar_lea.vmem [#allocation5], 24
    %v2003 = vld [vmem:[%s2002] sm:$0xff]
    %v2004 = vld [vmem:[%s765] sm:$0xff]
    %v2005 = vld [vmem:[%s765 + $0x8] sm:$0xff]
    %v2006 = vld [vmem:[%s765 + $0x10] sm:$0xff]
    %2007 = vmatprep.subr.mxu0 0.0
    %2008 = vmatpush1.msra.mxu0 %v2004
    %2009 = vmatprep.subr.mxu0 0.0
    %2010 = vmatpush1.msra.mxu0 %v2005
    %2011 = vmatprep.subr.mxu0 0.0
    %2012 = vmatpush1.msra.mxu0 %v2006
    %2013 = vmatprep.subr.mxu0 0.0
    %2014 = vmatpush1.msra.mxu0 0.0
    %2015 = vmatprep.subr.mxu0 0.0
    %2016 = vmatpush1.msra.mxu0 0.0
    %2017 = vmatprep.subr.mxu0 0.0
    %2018 = vmatpush1.msra.mxu0 0.0
    %2019 = vmatprep.subr.mxu0 0.0
    %2020 = vmatpush1.msra.mxu0 0.0
    %2021 = vmatprep.subr.mxu0 0.0
    %2022 = vmatpush1.msra.mxu0 0.0
    %2023 = vmatprep.subr.mxu0 0.0
    %2024 = vmatpush1.msra.mxu0 0.0
    %2025 = vmatprep.subr.mxu0 0.0
    %2026 = vmatpush1.msra.mxu0 0.0
    %2027 = vmatprep.subr.mxu0 0.0
    %2028 = vmatpush1.msra.mxu0 0.0
    %2029 = vmatprep.subr.mxu0 0.0
    %2030 = vmatpush1.msra.mxu0 0.0
    %2031 = vmatprep.subr.mxu0 0.0
    %2032 = vmatpush1.msra.mxu0 0.0
    %2033 = vmatprep.subr.mxu0 0.0
    %2034 = vmatpush1.msra.mxu0 0.0
    %2035 = vmatprep.subr.mxu0 0.0
    %2036 = vmatpush1.msra.mxu0 0.0
    %2037 = vmatprep.subr.mxu0 0.0
    %2038 = vmatpush1.msra.mxu0 0.0
    %2039 = vmatprep.subr.mxu0 0.0
    %2040 = vmatpush1.msra.mxu0 0.0
    %2041 = vmatprep.subr.mxu0 0.0
    %2042 = vmatpush1.msra.mxu0 0.0
    %2043 = vmatprep.subr.mxu0 0.0
    %2044 = vmatpush1.msra.mxu0 0.0
    %2045 = vmatprep.subr.mxu0 0.0
    %2046 = vmatpush1.msra.mxu0 0.0
    %2047 = vmatprep.subr.mxu0 0.0
    %2048 = vmatpush1.msra.mxu0 0.0
    %2049 = vmatprep.subr.mxu0 0.0
    %2050 = vmatpush1.msra.mxu0 0.0
    %2051 = vmatprep.subr.mxu0 0.0
    %2052 = vmatpush1.msra.mxu0 0.0
    %2053 = vmatprep.subr.mxu0 0.0
    %2054 = vmatpush1.msra.mxu0 0.0
    %2055 = vmatprep.subr.mxu0 0.0
    %2056 = vmatpush1.msra.mxu0 0.0
    %2057 = vmatprep.subr.mxu0 0.0
    %2058 = vmatpush1.msra.mxu0 0.0
    %2059 = vmatprep.subr.mxu0 0.0
    %2060 = vmatpush1.msra.mxu0 0.0
    %2061 = vmatprep.subr.mxu0 0.0
    %2062 = vmatpush1.msra.mxu0 0.0
    %2063 = vmatprep.subr.mxu0 0.0
    %2064 = vmatpush1.msra.mxu0 0.0
    %2065 = vmatprep.subr.mxu0 0.0
    %2066 = vmatpush1.msra.mxu0 0.0
    %2067 = vmatprep.subr.mxu0 0.0
    %2068 = vmatpush1.msra.mxu0 0.0
    %2069 = vmatprep.subr.mxu0 0.0
    %2070 = vmatpush1.msra.mxu0 0.0
    %2071 = vmatprep.mubr.f32.mxu0 0.0
    %2072 = vmatmul.mubr.f32.gmra.mrb[0].mxu0 %v1700
    %v2073 = vpop.f32.mrb[0].mxu0
    %v2074 = vadd.f32 0.0, %v2073
    %v2075 = vpop.f32.mrb[0].mxu0
    %2076 = vdwg.mxu0
    %v2077 = vadd.f32 %v2003, %v2074
    %v2078 = vxor.u32 %v1849, 2147483648
    %v2079 = vmul.f32 %v2078, 1.442695
    %v2080 = vpow.pop %v2079
    %v2081 = vadd.f32 %v2080, 1.0
    %v2082 = vrcp.pop %v2081
    %v2083 = vmul.f32 1.0, %v2082
    %v2084 = vxor.u32 %v1925, 2147483648
    %v2085 = vmul.f32 %v2084, 1.442695
    %v2086 = vpow.pop %v2085
    %v2087 = vadd.f32 %v2086, 1.0
    %v2088 = vrcp.pop %v2087
    %v2089 = vmul.f32 1.0, %v2088
    %v2090 = vtanh.pop %v2001
    %v2091 = vxor.u32 %v2077, 2147483648
    %v2092 = vmul.f32 %v2091, 1.442695
    %v2093 = vpow.pop %v2092
    %v2094 = vadd.f32 %v2093, 1.0
    %v2095 = vrcp.pop %v2094
    %v2096 = vmul.f32 1.0, %v2095
    %v2097 = vmul.f32 %v2089, %v1686
    %v2098 = vmul.f32 %v2083, %v2090
    %v2099 = vadd.f32 %v2097, %v2098
    %v2100 = vtanh.pop %v2099
    %v2101 = vmul.f32 %v2096, %v2100
    %v2102 = vld [vmem:[%s4] sm:$0xff]
    %v2103 = vld [vmem:[%s4 + $0x8] sm:$0xff]
    %v2104 = vld [vmem:[%s4 + $0x10] sm:$0xff]
    %v2105 = vld [vmem:[%s5] sm:$0x1]
    %v2107 = vlaneseq
    %v2108 = vshrl.u32 %v2107, 7
    %v2109 = vsub.s32 0, %v2108
    %v2110 = vrot.slane %v2105, %v2109
    %v2113 = vsel %vm175, %v2101, 0
    %2115 = vmatprep.subr.mxu0 0.0
    %2116 = vmatpush1.msra.mxu0 %v2102
    %2117 = vmatprep.subr.mxu0 0.0
    %2118 = vmatpush1.msra.mxu0 %v2103
    %2119 = vmatprep.subr.mxu0 0.0
    %2120 = vmatpush1.msra.mxu0 %v2104
    %2121 = vmatprep.subr.mxu0 0.0
    %2122 = vmatpush1.msra.mxu0 0.0
    %2123 = vmatprep.subr.mxu0 0.0
    %2124 = vmatpush1.msra.mxu0 0.0
    %2125 = vmatprep.subr.mxu0 0.0
    %2126 = vmatpush1.msra.mxu0 0.0
    %2127 = vmatprep.subr.mxu0 0.0
    %2128 = vmatpush1.msra.mxu0 0.0
    %2129 = vmatprep.subr.mxu0 0.0
    %2130 = vmatpush1.msra.mxu0 0.0
    %2131 = vmatprep.subr.mxu0 0.0
    %2132 = vmatpush1.msra.mxu0 0.0
    %2133 = vmatprep.subr.mxu0 0.0
    %2134 = vmatpush1.msra.mxu0 0.0
    %2135 = vmatprep.subr.mxu0 0.0
    %2136 = vmatpush1.msra.mxu0 0.0
    %2137 = vmatprep.subr.mxu0 0.0
    %2138 = vmatpush1.msra.mxu0 0.0
    %2139 = vmatprep.subr.mxu0 0.0
    %2140 = vmatpush1.msra.mxu0 0.0
    %2141 = vmatprep.subr.mxu0 0.0
    %2142 = vmatpush1.msra.mxu0 0.0
    %2143 = vmatprep.subr.mxu0 0.0
    %2144 = vmatpush1.msra.mxu0 0.0
    %2145 = vmatprep.subr.mxu0 0.0
    %2146 = vmatpush1.msra.mxu0 0.0
    %2147 = vmatprep.subr.mxu0 0.0
    %2148 = vmatpush1.msra.mxu0 0.0
    %2149 = vmatprep.subr.mxu0 0.0
    %2150 = vmatpush1.msra.mxu0 0.0
    %2151 = vmatprep.subr.mxu0 0.0
    %2152 = vmatpush1.msra.mxu0 0.0
    %2153 = vmatprep.subr.mxu0 0.0
    %2154 = vmatpush1.msra.mxu0 0.0
    %2155 = vmatprep.subr.mxu0 0.0
    %2156 = vmatpush1.msra.mxu0 0.0
    %2157 = vmatprep.subr.mxu0 0.0
    %2158 = vmatpush1.msra.mxu0 0.0
    %2159 = vmatprep.subr.mxu0 0.0
    %2160 = vmatpush1.msra.mxu0 0.0
    %2161 = vmatprep.subr.mxu0 0.0
    %2162 = vmatpush1.msra.mxu0 0.0
    %2163 = vmatprep.subr.mxu0 0.0
    %2164 = vmatpush1.msra.mxu0 0.0
    %2165 = vmatprep.subr.mxu0 0.0
    %2166 = vmatpush1.msra.mxu0 0.0
    %2167 = vmatprep.subr.mxu0 0.0
    %2168 = vmatpush1.msra.mxu0 0.0
    %2169 = vmatprep.subr.mxu0 0.0
    %2170 = vmatpush1.msra.mxu0 0.0
    %2171 = vmatprep.subr.mxu0 0.0
    %2172 = vmatpush1.msra.mxu0 0.0
    %2173 = vmatprep.subr.mxu0 0.0
    %2174 = vmatpush1.msra.mxu0 0.0
    %2175 = vmatprep.subr.mxu0 0.0
    %2176 = vmatpush1.msra.mxu0 0.0
    %2177 = vmatprep.subr.mxu0 0.0
    %2178 = vmatpush1.msra.mxu0 0.0
    %2179 = vmatprep.mubr.f32.mxu0 0.0
    %2180 = vmatmul.mubr.f32.gmra.mrb[0].mxu0 %v2113
    %v2181 = vpop.f32.mrb[0].mxu0
    %v2182 = vadd.f32 %v2110, %v2181
    %v2183 = vpop.f32.mrb[0].mxu0
    %2184 = vdwg.mxu0
    %s2185 = scalar_lea.vmem [#allocation9], 24
    %2186 = vst [vmem:[%s2185] sm:$0xff] %v2182
    %s2187 = scalar_lea.vmem [#allocation2], 32
    %v2188 = vld [vmem:[%s2187] sm:$0xff]
    %v2189 = vld [vmem:[#allocation6] sm:$0xff]
    %v2190 = vld [vmem:[#allocation6 + $0x8] sm:$0xff]
    %v2191 = vld [vmem:[#allocation6 + $0x10] sm:$0xff]
    %2192 = vmatprep.subr.mxu0 0.0
    %2193 = vmatpush1.msra.mxu0 %v2189
    %2194 = vmatprep.subr.mxu0 0.0
    %2195 = vmatpush1.msra.mxu0 %v2190
    %2196 = vmatprep.subr.mxu0 0.0
    %2197 = vmatpush1.msra.mxu0 %v2191
    %2198 = vmatprep.subr.mxu0 0.0
    %2199 = vmatpush1.msra.mxu0 0.0
    %2200 = vmatprep.subr.mxu0 0.0
    %2201 = vmatpush1.msra.mxu0 0.0
    %2202 = vmatprep.subr.mxu0 0.0
    %2203 = vmatpush1.msra.mxu0 0.0
    %2204 = vmatprep.subr.mxu0 0.0
    %2205 = vmatpush1.msra.mxu0 0.0
    %2206 = vmatprep.subr.mxu0 0.0
    %2207 = vmatpush1.msra.mxu0 0.0
    %2208 = vmatprep.subr.mxu0 0.0
    %2209 = vmatpush1.msra.mxu0 0.0
    %2210 = vmatprep.subr.mxu0 0.0
    %2211 = vmatpush1.msra.mxu0 0.0
    %2212 = vmatprep.subr.mxu0 0.0
    %2213 = vmatpush1.msra.mxu0 0.0
    %2214 = vmatprep.subr.mxu0 0.0
    %2215 = vmatpush1.msra.mxu0 0.0
    %2216 = vmatprep.subr.mxu0 0.0
    %2217 = vmatpush1.msra.mxu0 0.0
    %2218 = vmatprep.subr.mxu0 0.0
    %2219 = vmatpush1.msra.mxu0 0.0
    %2220 = vmatprep.subr.mxu0 0.0
    %2221 = vmatpush1.msra.mxu0 0.0
    %2222 = vmatprep.subr.mxu0 0.0
    %2223 = vmatpush1.msra.mxu0 0.0
    %2224 = vmatprep.subr.mxu0 0.0
    %2225 = vmatpush1.msra.mxu0 0.0
    %2226 = vmatprep.subr.mxu0 0.0
    %2227 = vmatpush1.msra.mxu0 0.0
    %2228 = vmatprep.subr.mxu0 0.0
    %2229 = vmatpush1.msra.mxu0 0.0
    %2230 = vmatprep.subr.mxu0 0.0
    %2231 = vmatpush1.msra.mxu0 0.0
    %2232 = vmatprep.subr.mxu0 0.0
    %2233 = vmatpush1.msra.mxu0 0.0
    %2234 = vmatprep.subr.mxu0 0.0
    %2235 = vmatpush1.msra.mxu0 0.0
    %2236 = vmatprep.subr.mxu0 0.0
    %2237 = vmatpush1.msra.mxu0 0.0
    %2238 = vmatprep.subr.mxu0 0.0
    %2239 = vmatpush1.msra.mxu0 0.0
    %2240 = vmatprep.subr.mxu0 0.0
    %2241 = vmatpush1.msra.mxu0 0.0
    %2242 = vmatprep.subr.mxu0 0.0
    %2243 = vmatpush1.msra.mxu0 0.0
    %2244 = vmatprep.subr.mxu0 0.0
    %2245 = vmatpush1.msra.mxu0 0.0
    %2246 = vmatprep.subr.mxu0 0.0
    %2247 = vmatpush1.msra.mxu0 0.0
    %2248 = vmatprep.subr.mxu0 0.0
    %2249 = vmatpush1.msra.mxu0 0.0
    %2250 = vmatprep.subr.mxu0 0.0
    %2251 = vmatpush1.msra.mxu0 0.0
    %2252 = vmatprep.subr.mxu0 0.0
    %2253 = vmatpush1.msra.mxu0 0.0
    %2254 = vmatprep.subr.mxu0 0.0
    %2255 = vmatpush1.msra.mxu0 0.0
    %2256 = vmatprep.mubr.f32.mxu0 0.0
    %2257 = vmatmul.mubr.f32.gmra.mrb[0].mxu0 %v2113
    %v2258 = vpop.f32.mrb[0].mxu0
    %v2259 = vadd.f32 0.0, %v2258
    %v2260 = vpop.f32.mrb[0].mxu0
    %2261 = vdwg.mxu0
    %v2262 = vadd.f32 %v2188, %v2259
    %s2263 = scalar_lea.vmem [#allocation3], 32
    %v2264 = vld [vmem:[%s2263] sm:$0xff]
    %v2265 = vld [vmem:[%s613] sm:$0xff]
    %v2266 = vld [vmem:[%s613 + $0x8] sm:$0xff]
    %v2267 = vld [vmem:[%s613 + $0x10] sm:$0xff]
    %2268 = vmatprep.subr.mxu0 0.0
    %2269 = vmatpush1.msra.mxu0 %v2265
    %2270 = vmatprep.subr.mxu0 0.0
    %2271 = vmatpush1.msra.mxu0 %v2266
    %2272 = vmatprep.subr.mxu0 0.0
    %2273 = vmatpush1.msra.mxu0 %v2267
    %2274 = vmatprep.subr.mxu0 0.0
    %2275 = vmatpush1.msra.mxu0 0.0
    %2276 = vmatprep.subr.mxu0 0.0
    %2277 = vmatpush1.msra.mxu0 0.0
    %2278 = vmatprep.subr.mxu0 0.0
    %2279 = vmatpush1.msra.mxu0 0.0
    %2280 = vmatprep.subr.mxu0 0.0
    %2281 = vmatpush1.msra.mxu0 0.0
    %2282 = vmatprep.subr.mxu0 0.0
    %2283 = vmatpush1.msra.mxu0 0.0
    %2284 = vmatprep.subr.mxu0 0.0
    %2285 = vmatpush1.msra.mxu0 0.0
    %2286 = vmatprep.subr.mxu0 0.0
    %2287 = vmatpush1.msra.mxu0 0.0
    %2288 = vmatprep.subr.mxu0 0.0
    %2289 = vmatpush1.msra.mxu0 0.0
    %2290 = vmatprep.subr.mxu0 0.0
    %2291 = vmatpush1.msra.mxu0 0.0
    %2292 = vmatprep.subr.mxu0 0.0
    %2293 = vmatpush1.msra.mxu0 0.0
    %2294 = vmatprep.subr.mxu0 0.0
    %2295 = vmatpush1.msra.mxu0 0.0
    %2296 = vmatprep.subr.mxu0 0.0
    %2297 = vmatpush1.msra.mxu0 0.0
    %2298 = vmatprep.subr.mxu0 0.0
    %2299 = vmatpush1.msra.mxu0 0.0
    %2300 = vmatprep.subr.mxu0 0.0
    %2301 = vmatpush1.msra.mxu0 0.0
    %2302 = vmatprep.subr.mxu0 0.0
    %2303 = vmatpush1.msra.mxu0 0.0
    %2304 = vmatprep.subr.mxu0 0.0
    %2305 = vmatpush1.msra.mxu0 0.0
    %2306 = vmatprep.subr.mxu0 0.0
    %2307 = vmatpush1.msra.mxu0 0.0
    %2308 = vmatprep.subr.mxu0 0.0
    %2309 = vmatpush1.msra.mxu0 0.0
    %2310 = vmatprep.subr.mxu0 0.0
    %2311 = vmatpush1.msra.mxu0 0.0
    %2312 = vmatprep.subr.mxu0 0.0
    %2313 = vmatpush1.msra.mxu0 0.0
    %2314 = vmatprep.subr.mxu0 0.0
    %2315 = vmatpush1.msra.mxu0 0.0
    %2316 = vmatprep.subr.mxu0 0.0
    %2317 = vmatpush1.msra.mxu0 0.0
    %2318 = vmatprep.subr.mxu0 0.0
    %2319 = vmatpush1.msra.mxu0 0.0
    %2320 = vmatprep.subr.mxu0 0.0
    %2321 = vmatpush1.msra.mxu0 0.0
    %2322 = vmatprep.subr.mxu0 0.0
    %2323 = vmatpush1.msra.mxu0 0.0
    %2324 = vmatprep.subr.mxu0 0.0
    %2325 = vmatpush1.msra.mxu0 0.0
    %2326 = vmatprep.subr.mxu0 0.0
    %2327 = vmatpush1.msra.mxu0 0.0
    %2328 = vmatprep.subr.mxu0 0.0
    %2329 = vmatpush1.msra.mxu0 0.0
    %2330 = vmatprep.subr.mxu0 0.0
    %2331 = vmatpush1.msra.mxu0 0.0
    %2332 = vmatprep.mubr.f32.mxu0 0.0
    %2333 = vmatmul.mubr.f32.gmra.mrb[0].mxu0 %v2113
    %v2334 = vpop.f32.mrb[0].mxu0
    %v2335 = vadd.f32 0.0, %v2334
    %v2336 = vpop.f32.mrb[0].mxu0
    %2337 = vdwg.mxu0
    %v2338 = vadd.f32 %v2264, %v2335
    %s2339 = scalar_lea.vmem [#allocation4], 32
    %v2340 = vld [vmem:[%s2339] sm:$0xff]
    %v2341 = vld [vmem:[%s689] sm:$0xff]
    %v2342 = vld [vmem:[%s689 + $0x8] sm:$0xff]
    %v2343 = vld [vmem:[%s689 + $0x10] sm:$0xff]
    %2344 = vmatprep.subr.mxu0 0.0
    %2345 = vmatpush1.msra.mxu0 %v2341
    %2346 = vmatprep.subr.mxu0 0.0
    %2347 = vmatpush1.msra.mxu0 %v2342
    %2348 = vmatprep.subr.mxu0 0.0
    %2349 = vmatpush1.msra.mxu0 %v2343
    %2350 = vmatprep.subr.mxu0 0.0
    %2351 = vmatpush1.msra.mxu0 0.0
    %2352 = vmatprep.subr.mxu0 0.0
    %2353 = vmatpush1.msra.mxu0 0.0
    %2354 = vmatprep.subr.mxu0 0.0
    %2355 = vmatpush1.msra.mxu0 0.0
    %2356 = vmatprep.subr.mxu0 0.0
    %2357 = vmatpush1.msra.mxu0 0.0
    %2358 = vmatprep.subr.mxu0 0.0
    %2359 = vmatpush1.msra.mxu0 0.0
    %2360 = vmatprep.subr.mxu0 0.0
    %2361 = vmatpush1.msra.mxu0 0.0
    %2362 = vmatprep.subr.mxu0 0.0
    %2363 = vmatpush1.msra.mxu0 0.0
    %2364 = vmatprep.subr.mxu0 0.0
    %2365 = vmatpush1.msra.mxu0 0.0
    %2366 = vmatprep.subr.mxu0 0.0
    %2367 = vmatpush1.msra.mxu0 0.0
    %2368 = vmatprep.subr.mxu0 0.0
    %2369 = vmatpush1.msra.mxu0 0.0
    %2370 = vmatprep.subr.mxu0 0.0
    %2371 = vmatpush1.msra.mxu0 0.0
    %2372 = vmatprep.subr.mxu0 0.0
    %2373 = vmatpush1.msra.mxu0 0.0
    %2374 = vmatprep.subr.mxu0 0.0
    %2375 = vmatpush1.msra.mxu0 0.0
    %2376 = vmatprep.subr.mxu0 0.0
    %2377 = vmatpush1.msra.mxu0 0.0
    %2378 = vmatprep.subr.mxu0 0.0
    %2379 = vmatpush1.msra.mxu0 0.0
    %2380 = vmatprep.subr.mxu0 0.0
    %2381 = vmatpush1.msra.mxu0 0.0
    %2382 = vmatprep.subr.mxu0 0.0
    %2383 = vmatpush1.msra.mxu0 0.0
    %2384 = vmatprep.subr.mxu0 0.0
    %2385 = vmatpush1.msra.mxu0 0.0
    %2386 = vmatprep.subr.mxu0 0.0
    %2387 = vmatpush1.msra.mxu0 0.0
    %2388 = vmatprep.subr.mxu0 0.0
    %2389 = vmatpush1.msra.mxu0 0.0
    %2390 = vmatprep.subr.mxu0 0.0
    %2391 = vmatpush1.msra.mxu0 0.0
    %2392 = vmatprep.subr.mxu0 0.0
    %2393 = vmatpush1.msra.mxu0 0.0
    %2394 = vmatprep.subr.mxu0 0.0
    %2395 = vmatpush1.msra.mxu0 0.0
    %2396 = vmatprep.subr.mxu0 0.0
    %2397 = vmatpush1.msra.mxu0 0.0
    %2398 = vmatprep.subr.mxu0 0.0
    %2399 = vmatpush1.msra.mxu0 0.0
    %2400 = vmatprep.subr.mxu0 0.0
    %2401 = vmatpush1.msra.mxu0 0.0
    %2402 = vmatprep.subr.mxu0 0.0
    %2403 = vmatpush1.msra.mxu0 0.0
    %2404 = vmatprep.subr.mxu0 0.0
    %2405 = vmatpush1.msra.mxu0 0.0
    %2406 = vmatprep.subr.mxu0 0.0
    %2407 = vmatpush1.msra.mxu0 0.0
    %2408 = vmatprep.mubr.f32.mxu0 0.0
    %2409 = vmatmul.mubr.f32.gmra.mrb[0].mxu0 %v2113
    %v2410 = vpop.f32.mrb[0].mxu0
    %v2411 = vadd.f32 0.0, %v2410
    %v2412 = vpop.f32.mrb[0].mxu0
    %2413 = vdwg.mxu0
    %v2414 = vadd.f32 %v2340, %v2411
    %s2415 = scalar_lea.vmem [#allocation5], 32
    %v2416 = vld [vmem:[%s2415] sm:$0xff]
    %v2417 = vld [vmem:[%s765] sm:$0xff]
    %v2418 = vld [vmem:[%s765 + $0x8] sm:$0xff]
    %v2419 = vld [vmem:[%s765 + $0x10] sm:$0xff]
    %2420 = vmatprep.subr.mxu0 0.0
    %2421 = vmatpush1.msra.mxu0 %v2417
    %2422 = vmatprep.subr.mxu0 0.0
    %2423 = vmatpush1.msra.mxu0 %v2418
    %2424 = vmatprep.subr.mxu0 0.0
    %2425 = vmatpush1.msra.mxu0 %v2419
    %2426 = vmatprep.subr.mxu0 0.0
    %2427 = vmatpush1.msra.mxu0 0.0
    %2428 = vmatprep.subr.mxu0 0.0
    %2429 = vmatpush1.msra.mxu0 0.0
    %2430 = vmatprep.subr.mxu0 0.0
    %2431 = vmatpush1.msra.mxu0 0.0
    %2432 = vmatprep.subr.mxu0 0.0
    %2433 = vmatpush1.msra.mxu0 0.0
    %2434 = vmatprep.subr.mxu0 0.0
    %2435 = vmatpush1.msra.mxu0 0.0
    %2436 = vmatprep.subr.mxu0 0.0
    %2437 = vmatpush1.msra.mxu0 0.0
    %2438 = vmatprep.subr.mxu0 0.0
    %2439 = vmatpush1.msra.mxu0 0.0
    %2440 = vmatprep.subr.mxu0 0.0
    %2441 = vmatpush1.msra.mxu0 0.0
    %2442 = vmatprep.subr.mxu0 0.0
    %2443 = vmatpush1.msra.mxu0 0.0
    %2444 = vmatprep.subr.mxu0 0.0
    %2445 = vmatpush1.msra.mxu0 0.0
    %2446 = vmatprep.subr.mxu0 0.0
    %2447 = vmatpush1.msra.mxu0 0.0
    %2448 = vmatprep.subr.mxu0 0.0
    %2449 = vmatpush1.msra.mxu0 0.0
    %2450 = vmatprep.subr.mxu0 0.0
    %2451 = vmatpush1.msra.mxu0 0.0
    %2452 = vmatprep.subr.mxu0 0.0
    %2453 = vmatpush1.msra.mxu0 0.0
    %2454 = vmatprep.subr.mxu0 0.0
    %2455 = vmatpush1.msra.mxu0 0.0
    %2456 = vmatprep.subr.mxu0 0.0
    %2457 = vmatpush1.msra.mxu0 0.0
    %2458 = vmatprep.subr.mxu0 0.0
    %2459 = vmatpush1.msra.mxu0 0.0
    %2460 = vmatprep.subr.mxu0 0.0
    %2461 = vmatpush1.msra.mxu0 0.0
    %2462 = vmatprep.subr.mxu0 0.0
    %2463 = vmatpush1.msra.mxu0 0.0
    %2464 = vmatprep.subr.mxu0 0.0
    %2465 = vmatpush1.msra.mxu0 0.0
    %2466 = vmatprep.subr.mxu0 0.0
    %2467 = vmatpush1.msra.mxu0 0.0
    %2468 = vmatprep.subr.mxu0 0.0
    %2469 = vmatpush1.msra.mxu0 0.0
    %2470 = vmatprep.subr.mxu0 0.0
    %2471 = vmatpush1.msra.mxu0 0.0
    %2472 = vmatprep.subr.mxu0 0.0
    %2473 = vmatpush1.msra.mxu0 0.0
    %2474 = vmatprep.subr.mxu0 0.0
    %2475 = vmatpush1.msra.mxu0 0.0
    %2476 = vmatprep.subr.mxu0 0.0
    %2477 = vmatpush1.msra.mxu0 0.0
    %2478 = vmatprep.subr.mxu0 0.0
    %2479 = vmatpush1.msra.mxu0 0.0
    %2480 = vmatprep.subr.mxu0 0.0
    %2481 = vmatpush1.msra.mxu0 0.0
    %2482 = vmatprep.subr.mxu0 0.0
    %2483 = vmatpush1.msra.mxu0 0.0
    %2484 = vmatprep.mubr.f32.mxu0 0.0
    %2485 = vmatmul.mubr.f32.gmra.mrb[0].mxu0 %v2113
    %v2486 = vpop.f32.mrb[0].mxu0
    %v2487 = vadd.f32 0.0, %v2486
    %v2488 = vpop.f32.mrb[0].mxu0
    %2489 = vdwg.mxu0
    %v2490 = vadd.f32 %v2416, %v2487
    %v2491 = vxor.u32 %v2262, 2147483648
    %v2492 = vmul.f32 %v2491, 1.442695
    %v2493 = vpow.pop %v2492
    %v2494 = vadd.f32 %v2493, 1.0
    %v2495 = vrcp.pop %v2494
    %v2496 = vmul.f32 1.0, %v2495
    %v2497 = vxor.u32 %v2338, 2147483648
    %v2498 = vmul.f32 %v2497, 1.442695
    %v2499 = vpow.pop %v2498
    %v2500 = vadd.f32 %v2499, 1.0
    %v2501 = vrcp.pop %v2500
    %v2502 = vmul.f32 1.0, %v2501
    %v2503 = vtanh.pop %v2414
    %v2504 = vxor.u32 %v2490, 2147483648
    %v2505 = vmul.f32 %v2504, 1.442695
    %v2506 = vpow.pop %v2505
    %v2507 = vadd.f32 %v2506, 1.0
    %v2508 = vrcp.pop %v2507
    %v2509 = vmul.f32 1.0, %v2508
    %v2510 = vmul.f32 %v2502, %v2099
    %v2511 = vmul.f32 %v2496, %v2503
    %v2512 = vadd.f32 %v2510, %v2511
    %v2513 = vtanh.pop %v2512
    %v2514 = vmul.f32 %v2509, %v2513
    %v2515 = vld [vmem:[%s4] sm:$0xff]
    %v2516 = vld [vmem:[%s4 + $0x8] sm:$0xff]
    %v2517 = vld [vmem:[%s4 + $0x10] sm:$0xff]
    %v2518 = vld [vmem:[%s5] sm:$0x1]
    %v2520 = vlaneseq
    %v2521 = vshrl.u32 %v2520, 7
    %v2522 = vsub.s32 0, %v2521
    %v2523 = vrot.slane %v2518, %v2522
    %v2526 = vsel %vm175, %v2514, 0
    %2528 = vmatprep.subr.mxu0 0.0
    %2529 = vmatpush1.msra.mxu0 %v2515
    %2530 = vmatprep.subr.mxu0 0.0
    %2531 = vmatpush1.msra.mxu0 %v2516
    %2532 = vmatprep.subr.mxu0 0.0
    %2533 = vmatpush1.msra.mxu0 %v2517
    %2534 = vmatprep.subr.mxu0 0.0
    %2535 = vmatpush1.msra.mxu0 0.0
    %2536 = vmatprep.subr.mxu0 0.0
    %2537 = vmatpush1.msra.mxu0 0.0
    %2538 = vmatprep.subr.mxu0 0.0
    %2539 = vmatpush1.msra.mxu0 0.0
    %2540 = vmatprep.subr.mxu0 0.0
    %2541 = vmatpush1.msra.mxu0 0.0
    %2542 = vmatprep.subr.mxu0 0.0
    %2543 = vmatpush1.msra.mxu0 0.0
    %2544 = vmatprep.subr.mxu0 0.0
    %2545 = vmatpush1.msra.mxu0 0.0
    %2546 = vmatprep.subr.mxu0 0.0
    %2547 = vmatpush1.msra.mxu0 0.0
    %2548 = vmatprep.subr.mxu0 0.0
    %2549 = vmatpush1.msra.mxu0 0.0
    %2550 = vmatprep.subr.mxu0 0.0
    %2551 = vmatpush1.msra.mxu0 0.0
    %2552 = vmatprep.subr.mxu0 0.0
    %2553 = vmatpush1.msra.mxu0 0.0
    %2554 = vmatprep.subr.mxu0 0.0
    %2555 = vmatpush1.msra.mxu0 0.0
    %2556 = vmatprep.subr.mxu0 0.0
    %2557 = vmatpush1.msra.mxu0 0.0
    %2558 = vmatprep.subr.mxu0 0.0
    %2559 = vmatpush1.msra.mxu0 0.0
    %2560 = vmatprep.subr.mxu0 0.0
    %2561 = vmatpush1.msra.mxu0 0.0
    %2562 = vmatprep.subr.mxu0 0.0
    %2563 = vmatpush1.msra.mxu0 0.0
    %2564 = vmatprep.subr.mxu0 0.0
    %2565 = vmatpush1.msra.mxu0 0.0
    %2566 = vmatprep.subr.mxu0 0.0
    %2567 = vmatpush1.msra.mxu0 0.0
    %2568 = vmatprep.subr.mxu0 0.0
    %2569 = vmatpush1.msra.mxu0 0.0
    %2570 = vmatprep.subr.mxu0 0.0
    %2571 = vmatpush1.msra.mxu0 0.0
    %2572 = vmatprep.subr.mxu0 0.0
    %2573 = vmatpush1.msra.mxu0 0.0
    %2574 = vmatprep.subr.mxu0 0.0
    %2575 = vmatpush1.msra.mxu0 0.0
    %2576 = vmatprep.subr.mxu0 0.0
    %2577 = vmatpush1.msra.mxu0 0.0
    %2578 = vmatprep.subr.mxu0 0.0
    %2579 = vmatpush1.msra.mxu0 0.0
    %2580 = vmatprep.subr.mxu0 0.0
    %2581 = vmatpush1.msra.mxu0 0.0
    %2582 = vmatprep.subr.mxu0 0.0
    %2583 = vmatpush1.msra.mxu0 0.0
    %2584 = vmatprep.subr.mxu0 0.0
    %2585 = vmatpush1.msra.mxu0 0.0
    %2586 = vmatprep.subr.mxu0 0.0
    %2587 = vmatpush1.msra.mxu0 0.0
    %2588 = vmatprep.subr.mxu0 0.0
    %2589 = vmatpush1.msra.mxu0 0.0
    %2590 = vmatprep.subr.mxu0 0.0
    %2591 = vmatpush1.msra.mxu0 0.0
    %2592 = vmatprep.mubr.f32.mxu0 0.0
    %2593 = vmatmul.mubr.f32.gmra.mrb[0].mxu0 %v2526
    %v2594 = vpop.f32.mrb[0].mxu0
    %v2595 = vadd.f32 %v2523, %v2594
    %v2596 = vpop.f32.mrb[0].mxu0
    %2597 = vdwg.mxu0
    %s2598 = scalar_lea.vmem [#allocation9], 32
    %2599 = vst [vmem:[%s2598] sm:$0xff] %v2595
    %s2600 = scalar_lea.vmem [#allocation2], 40
    %v2601 = vld [vmem:[%s2600] sm:$0xff]
    %v2602 = vld [vmem:[#allocation6] sm:$0xff]
    %v2603 = vld [vmem:[#allocation6 + $0x8] sm:$0xff]
    %v2604 = vld [vmem:[#allocation6 + $0x10] sm:$0xff]
    %2605 = vmatprep.subr.mxu0 0.0
    %2606 = vmatpush1.msra.mxu0 %v2602
    %2607 = vmatprep.subr.mxu0 0.0
    %2608 = vmatpush1.msra.mxu0 %v2603
    %2609 = vmatprep.subr.mxu0 0.0
    %2610 = vmatpush1.msra.mxu0 %v2604
    %2611 = vmatprep.subr.mxu0 0.0
    %2612 = vmatpush1.msra.mxu0 0.0
    %2613 = vmatprep.subr.mxu0 0.0
    %2614 = vmatpush1.msra.mxu0 0.0
    %2615 = vmatprep.subr.mxu0 0.0
    %2616 = vmatpush1.msra.mxu0 0.0
    %2617 = vmatprep.subr.mxu0 0.0
    %2618 = vmatpush1.msra.mxu0 0.0
    %2619 = vmatprep.subr.mxu0 0.0
    %2620 = vmatpush1.msra.mxu0 0.0
    %2621 = vmatprep.subr.mxu0 0.0
    %2622 = vmatpush1.msra.mxu0 0.0
    %2623 = vmatprep.subr.mxu0 0.0
    %2624 = vmatpush1.msra.mxu0 0.0
    %2625 = vmatprep.subr.mxu0 0.0
    %2626 = vmatpush1.msra.mxu0 0.0
    %2627 = vmatprep.subr.mxu0 0.0
    %2628 = vmatpush1.msra.mxu0 0.0
    %2629 = vmatprep.subr.mxu0 0.0
    %2630 = vmatpush1.msra.mxu0 0.0
    %2631 = vmatprep.subr.mxu0 0.0
    %2632 = vmatpush1.msra.mxu0 0.0
    %2633 = vmatprep.subr.mxu0 0.0
    %2634 = vmatpush1.msra.mxu0 0.0
    %2635 = vmatprep.subr.mxu0 0.0
    %2636 = vmatpush1.msra.mxu0 0.0
    %2637 = vmatprep.subr.mxu0 0.0
    %2638 = vmatpush1.msra.mxu0 0.0
    %2639 = vmatprep.subr.mxu0 0.0
    %2640 = vmatpush1.msra.mxu0 0.0
    %2641 = vmatprep.subr.mxu0 0.0
    %2642 = vmatpush1.msra.mxu0 0.0
    %2643 = vmatprep.subr.mxu0 0.0
    %2644 = vmatpush1.msra.mxu0 0.0
    %2645 = vmatprep.subr.mxu0 0.0
    %2646 = vmatpush1.msra.mxu0 0.0
    %2647 = vmatprep.subr.mxu0 0.0
    %2648 = vmatpush1.msra.mxu0 0.0
    %2649 = vmatprep.subr.mxu0 0.0
    %2650 = vmatpush1.msra.mxu0 0.0
    %2651 = vmatprep.subr.mxu0 0.0
    %2652 = vmatpush1.msra.mxu0 0.0
    %2653 = vmatprep.subr.mxu0 0.0
    %2654 = vmatpush1.msra.mxu0 0.0
    %2655 = vmatprep.subr.mxu0 0.0
    %2656 = vmatpush1.msra.mxu0 0.0
    %2657 = vmatprep.subr.mxu0 0.0
    %2658 = vmatpush1.msra.mxu0 0.0
    %2659 = vmatprep.subr.mxu0 0.0
    %2660 = vmatpush1.msra.mxu0 0.0
    %2661 = vmatprep.subr.mxu0 0.0
    %2662 = vmatpush1.msra.mxu0 0.0
    %2663 = vmatprep.subr.mxu0 0.0
    %2664 = vmatpush1.msra.mxu0 0.0
    %2665 = vmatprep.subr.mxu0 0.0
    %2666 = vmatpush1.msra.mxu0 0.0
    %2667 = vmatprep.subr.mxu0 0.0
    %2668 = vmatpush1.msra.mxu0 0.0
    %2669 = vmatprep.mubr.f32.mxu0 0.0
    %2670 = vmatmul.mubr.f32.gmra.mrb[0].mxu0 %v2526
    %v2671 = vpop.f32.mrb[0].mxu0
    %v2672 = vadd.f32 0.0, %v2671
    %v2673 = vpop.f32.mrb[0].mxu0
    %2674 = vdwg.mxu0
    %v2675 = vadd.f32 %v2601, %v2672
    %s2676 = scalar_lea.vmem [#allocation3], 40
    %v2677 = vld [vmem:[%s2676] sm:$0xff]
    %v2678 = vld [vmem:[%s613] sm:$0xff]
    %v2679 = vld [vmem:[%s613 + $0x8] sm:$0xff]
    %v2680 = vld [vmem:[%s613 + $0x10] sm:$0xff]
    %2681 = vmatprep.subr.mxu0 0.0
    %2682 = vmatpush1.msra.mxu0 %v2678
    %2683 = vmatprep.subr.mxu0 0.0
    %2684 = vmatpush1.msra.mxu0 %v2679
    %2685 = vmatprep.subr.mxu0 0.0
    %2686 = vmatpush1.msra.mxu0 %v2680
    %2687 = vmatprep.subr.mxu0 0.0
    %2688 = vmatpush1.msra.mxu0 0.0
    %2689 = vmatprep.subr.mxu0 0.0
    %2690 = vmatpush1.msra.mxu0 0.0
    %2691 = vmatprep.subr.mxu0 0.0
    %2692 = vmatpush1.msra.mxu0 0.0
    %2693 = vmatprep.subr.mxu0 0.0
    %2694 = vmatpush1.msra.mxu0 0.0
    %2695 = vmatprep.subr.mxu0 0.0
    %2696 = vmatpush1.msra.mxu0 0.0
    %2697 = vmatprep.subr.mxu0 0.0
    %2698 = vmatpush1.msra.mxu0 0.0
    %2699 = vmatprep.subr.mxu0 0.0
    %2700 = vmatpush1.msra.mxu0 0.0
    %2701 = vmatprep.subr.mxu0 0.0
    %2702 = vmatpush1.msra.mxu0 0.0
    %2703 = vmatprep.subr.mxu0 0.0
    %2704 = vmatpush1.msra.mxu0 0.0
    %2705 = vmatprep.subr.mxu0 0.0
    %2706 = vmatpush1.msra.mxu0 0.0
    %2707 = vmatprep.subr.mxu0 0.0
    %2708 = vmatpush1.msra.mxu0 0.0
    %2709 = vmatprep.subr.mxu0 0.0
    %2710 = vmatpush1.msra.mxu0 0.0
    %2711 = vmatprep.subr.mxu0 0.0
    %2712 = vmatpush1.msra.mxu0 0.0
    %2713 = vmatprep.subr.mxu0 0.0
    %2714 = vmatpush1.msra.mxu0 0.0
    %2715 = vmatprep.subr.mxu0 0.0
    %2716 = vmatpush1.msra.mxu0 0.0
    %2717 = vmatprep.subr.mxu0 0.0
    %2718 = vmatpush1.msra.mxu0 0.0
    %2719 = vmatprep.subr.mxu0 0.0
    %2720 = vmatpush1.msra.mxu0 0.0
    %2721 = vmatprep.subr.mxu0 0.0
    %2722 = vmatpush1.msra.mxu0 0.0
    %2723 = vmatprep.subr.mxu0 0.0
    %2724 = vmatpush1.msra.mxu0 0.0
    %2725 = vmatprep.subr.mxu0 0.0
    %2726 = vmatpush1.msra.mxu0 0.0
    %2727 = vmatprep.subr.mxu0 0.0
    %2728 = vmatpush1.msra.mxu0 0.0
    %2729 = vmatprep.subr.mxu0 0.0
    %2730 = vmatpush1.msra.mxu0 0.0
    %2731 = vmatprep.subr.mxu0 0.0
    %2732 = vmatpush1.msra.mxu0 0.0
    %2733 = vmatprep.subr.mxu0 0.0
    %2734 = vmatpush1.msra.mxu0 0.0
    %2735 = vmatprep.subr.mxu0 0.0
    %2736 = vmatpush1.msra.mxu0 0.0
    %2737 = vmatprep.subr.mxu0 0.0
    %2738 = vmatpush1.msra.mxu0 0.0
    %2739 = vmatprep.subr.mxu0 0.0
    %2740 = vmatpush1.msra.mxu0 0.0
    %2741 = vmatprep.subr.mxu0 0.0
    %2742 = vmatpush1.msra.mxu0 0.0
    %2743 = vmatprep.subr.mxu0 0.0
    %2744 = vmatpush1.msra.mxu0 0.0
    %2745 = vmatprep.mubr.f32.mxu0 0.0
    %2746 = vmatmul.mubr.f32.gmra.mrb[0].mxu0 %v2526
    %v2747 = vpop.f32.mrb[0].mxu0
    %v2748 = vadd.f32 0.0, %v2747
    %v2749 = vpop.f32.mrb[0].mxu0
    %2750 = vdwg.mxu0
    %v2751 = vadd.f32 %v2677, %v2748
    %s2752 = scalar_lea.vmem [#allocation4], 40
    %v2753 = vld [vmem:[%s2752] sm:$0xff]
    %v2754 = vld [vmem:[%s689] sm:$0xff]
    %v2755 = vld [vmem:[%s689 + $0x8] sm:$0xff]
    %v2756 = vld [vmem:[%s689 + $0x10] sm:$0xff]
    %2757 = vmatprep.subr.mxu0 0.0
    %2758 = vmatpush1.msra.mxu0 %v2754
    %2759 = vmatprep.subr.mxu0 0.0
    %2760 = vmatpush1.msra.mxu0 %v2755
    %2761 = vmatprep.subr.mxu0 0.0
    %2762 = vmatpush1.msra.mxu0 %v2756
    %2763 = vmatprep.subr.mxu0 0.0
    %2764 = vmatpush1.msra.mxu0 0.0
    %2765 = vmatprep.subr.mxu0 0.0
    %2766 = vmatpush1.msra.mxu0 0.0
    %2767 = vmatprep.subr.mxu0 0.0
    %2768 = vmatpush1.msra.mxu0 0.0
    %2769 = vmatprep.subr.mxu0 0.0
    %2770 = vmatpush1.msra.mxu0 0.0
    %2771 = vmatprep.subr.mxu0 0.0
    %2772 = vmatpush1.msra.mxu0 0.0
    %2773 = vmatprep.subr.mxu0 0.0
    %2774 = vmatpush1.msra.mxu0 0.0
    %2775 = vmatprep.subr.mxu0 0.0
    %2776 = vmatpush1.msra.mxu0 0.0
    %2777 = vmatprep.subr.mxu0 0.0
    %2778 = vmatpush1.msra.mxu0 0.0
    %2779 = vmatprep.subr.mxu0 0.0
    %2780 = vmatpush1.msra.mxu0 0.0
    %2781 = vmatprep.subr.mxu0 0.0
    %2782 = vmatpush1.msra.mxu0 0.0
    %2783 = vmatprep.subr.mxu0 0.0
    %2784 = vmatpush1.msra.mxu0 0.0
    %2785 = vmatprep.subr.mxu0 0.0
    %2786 = vmatpush1.msra.mxu0 0.0
    %2787 = vmatprep.subr.mxu0 0.0
    %2788 = vmatpush1.msra.mxu0 0.0
    %2789 = vmatprep.subr.mxu0 0.0
    %2790 = vmatpush1.msra.mxu0 0.0
    %2791 = vmatprep.subr.mxu0 0.0
    %2792 = vmatpush1.msra.mxu0 0.0
    %2793 = vmatprep.subr.mxu0 0.0
    %2794 = vmatpush1.msra.mxu0 0.0
    %2795 = vmatprep.subr.mxu0 0.0
    %2796 = vmatpush1.msra.mxu0 0.0
    %2797 = vmatprep.subr.mxu0 0.0
    %2798 = vmatpush1.msra.mxu0 0.0
    %2799 = vmatprep.subr.mxu0 0.0
    %2800 = vmatpush1.msra.mxu0 0.0
    %2801 = vmatprep.subr.mxu0 0.0
    %2802 = vmatpush1.msra.mxu0 0.0
    %2803 = vmatprep.subr.mxu0 0.0
    %2804 = vmatpush1.msra.mxu0 0.0
    %2805 = vmatprep.subr.mxu0 0.0
    %2806 = vmatpush1.msra.mxu0 0.0
    %2807 = vmatprep.subr.mxu0 0.0
    %2808 = vmatpush1.msra.mxu0 0.0
    %2809 = vmatprep.subr.mxu0 0.0
    %2810 = vmatpush1.msra.mxu0 0.0
    %2811 = vmatprep.subr.mxu0 0.0
    %2812 = vmatpush1.msra.mxu0 0.0
    %2813 = vmatprep.subr.mxu0 0.0
    %2814 = vmatpush1.msra.mxu0 0.0
    %2815 = vmatprep.subr.mxu0 0.0
    %2816 = vmatpush1.msra.mxu0 0.0
    %2817 = vmatprep.subr.mxu0 0.0
    %2818 = vmatpush1.msra.mxu0 0.0
    %2819 = vmatprep.subr.mxu0 0.0
    %2820 = vmatpush1.msra.mxu0 0.0
    %2821 = vmatprep.mubr.f32.mxu0 0.0
    %2822 = vmatmul.mubr.f32.gmra.mrb[0].mxu0 %v2526
    %v2823 = vpop.f32.mrb[0].mxu0
    %v2824 = vadd.f32 0.0, %v2823
    %v2825 = vpop.f32.mrb[0].mxu0
    %2826 = vdwg.mxu0
    %v2827 = vadd.f32 %v2753, %v2824
    %s2828 = scalar_lea.vmem [#allocation5], 40
    %v2829 = vld [vmem:[%s2828] sm:$0xff]
    %v2830 = vld [vmem:[%s765] sm:$0xff]
    %v2831 = vld [vmem:[%s765 + $0x8] sm:$0xff]
    %v2832 = vld [vmem:[%s765 + $0x10] sm:$0xff]
    %2833 = vmatprep.subr.mxu0 0.0
    %2834 = vmatpush1.msra.mxu0 %v2830
    %2835 = vmatprep.subr.mxu0 0.0
    %2836 = vmatpush1.msra.mxu0 %v2831
    %2837 = vmatprep.subr.mxu0 0.0
    %2838 = vmatpush1.msra.mxu0 %v2832
    %2839 = vmatprep.subr.mxu0 0.0
    %2840 = vmatpush1.msra.mxu0 0.0
    %2841 = vmatprep.subr.mxu0 0.0
    %2842 = vmatpush1.msra.mxu0 0.0
    %2843 = vmatprep.subr.mxu0 0.0
    %2844 = vmatpush1.msra.mxu0 0.0
    %2845 = vmatprep.subr.mxu0 0.0
    %2846 = vmatpush1.msra.mxu0 0.0
    %2847 = vmatprep.subr.mxu0 0.0
    %2848 = vmatpush1.msra.mxu0 0.0
    %2849 = vmatprep.subr.mxu0 0.0
    %2850 = vmatpush1.msra.mxu0 0.0
    %2851 = vmatprep.subr.mxu0 0.0
    %2852 = vmatpush1.msra.mxu0 0.0
    %2853 = vmatprep.subr.mxu0 0.0
    %2854 = vmatpush1.msra.mxu0 0.0
    %2855 = vmatprep.subr.mxu0 0.0
    %2856 = vmatpush1.msra.mxu0 0.0
    %2857 = vmatprep.subr.mxu0 0.0
    %2858 = vmatpush1.msra.mxu0 0.0
    %2859 = vmatprep.subr.mxu0 0.0
    %2860 = vmatpush1.msra.mxu0 0.0
    %2861 = vmatprep.subr.mxu0 0.0
    %2862 = vmatpush1.msra.mxu0 0.0
    %2863 = vmatprep.subr.mxu0 0.0
    %2864 = vmatpush1.msra.mxu0 0.0
    %2865 = vmatprep.subr.mxu0 0.0
    %2866 = vmatpush1.msra.mxu0 0.0
    %2867 = vmatprep.subr.mxu0 0.0
    %2868 = vmatpush1.msra.mxu0 0.0
    %2869 = vmatprep.subr.mxu0 0.0
    %2870 = vmatpush1.msra.mxu0 0.0
    %2871 = vmatprep.subr.mxu0 0.0
    %2872 = vmatpush1.msra.mxu0 0.0
    %2873 = vmatprep.subr.mxu0 0.0
    %2874 = vmatpush1.msra.mxu0 0.0
    %2875 = vmatprep.subr.mxu0 0.0
    %2876 = vmatpush1.msra.mxu0 0.0
    %2877 = vmatprep.subr.mxu0 0.0
    %2878 = vmatpush1.msra.mxu0 0.0
    %2879 = vmatprep.subr.mxu0 0.0
    %2880 = vmatpush1.msra.mxu0 0.0
    %2881 = vmatprep.subr.mxu0 0.0
    %2882 = vmatpush1.msra.mxu0 0.0
    %2883 = vmatprep.subr.mxu0 0.0
    %2884 = vmatpush1.msra.mxu0 0.0
    %2885 = vmatprep.subr.mxu0 0.0
    %2886 = vmatpush1.msra.mxu0 0.0
    %2887 = vmatprep.subr.mxu0 0.0
    %2888 = vmatpush1.msra.mxu0 0.0
    %2889 = vmatprep.subr.mxu0 0.0
    %2890 = vmatpush1.msra.mxu0 0.0
    %2891 = vmatprep.subr.mxu0 0.0
    %2892 = vmatpush1.msra.mxu0 0.0
    %2893 = vmatprep.subr.mxu0 0.0
    %2894 = vmatpush1.msra.mxu0 0.0
    %2895 = vmatprep.subr.mxu0 0.0
    %2896 = vmatpush1.msra.mxu0 0.0
    %2897 = vmatprep.mubr.f32.mxu0 0.0
    %2898 = vmatmul.mubr.f32.gmra.mrb[0].mxu0 %v2526
    %v2899 = vpop.f32.mrb[0].mxu0
    %v2900 = vadd.f32 0.0, %v2899
    %v2901 = vpop.f32.mrb[0].mxu0
    %2902 = vdwg.mxu0
    %v2903 = vadd.f32 %v2829, %v2900
    %v2904 = vxor.u32 %v2675, 2147483648
    %v2905 = vmul.f32 %v2904, 1.442695
    %v2906 = vpow.pop %v2905
    %v2907 = vadd.f32 %v2906, 1.0
    %v2908 = vrcp.pop %v2907
    %v2909 = vmul.f32 1.0, %v2908
    %v2910 = vxor.u32 %v2751, 2147483648
    %v2911 = vmul.f32 %v2910, 1.442695
    %v2912 = vpow.pop %v2911
    %v2913 = vadd.f32 %v2912, 1.0
    %v2914 = vrcp.pop %v2913
    %v2915 = vmul.f32 1.0, %v2914
    %v2916 = vtanh.pop %v2827
    %v2917 = vxor.u32 %v2903, 2147483648
    %v2918 = vmul.f32 %v2917, 1.442695
    %v2919 = vpow.pop %v2918
    %v2920 = vadd.f32 %v2919, 1.0
    %v2921 = vrcp.pop %v2920
    %v2922 = vmul.f32 1.0, %v2921
    %v2923 = vmul.f32 %v2915, %v2512
    %v2924 = vmul.f32 %v2909, %v2916
    %v2925 = vadd.f32 %v2923, %v2924
    %v2926 = vtanh.pop %v2925
    %v2927 = vmul.f32 %v2922, %v2926
    %v2928 = vld [vmem:[%s4] sm:$0xff]
    %v2929 = vld [vmem:[%s4 + $0x8] sm:$0xff]
    %v2930 = vld [vmem:[%s4 + $0x10] sm:$0xff]
    %v2931 = vld [vmem:[%s5] sm:$0x1]
    %v2933 = vlaneseq
    %v2934 = vshrl.u32 %v2933, 7
    %v2935 = vsub.s32 0, %v2934
    %v2936 = vrot.slane %v2931, %v2935
    %v2939 = vsel %vm175, %v2927, 0
    %2941 = vmatprep.subr.mxu0 0.0
    %2942 = vmatpush1.msra.mxu0 %v2928
    %2943 = vmatprep.subr.mxu0 0.0
    %2944 = vmatpush1.msra.mxu0 %v2929
    %2945 = vmatprep.subr.mxu0 0.0
    %2946 = vmatpush1.msra.mxu0 %v2930
    %2947 = vmatprep.subr.mxu0 0.0
    %2948 = vmatpush1.msra.mxu0 0.0
    %2949 = vmatprep.subr.mxu0 0.0
    %2950 = vmatpush1.msra.mxu0 0.0
    %2951 = vmatprep.subr.mxu0 0.0
    %2952 = vmatpush1.msra.mxu0 0.0
    %2953 = vmatprep.subr.mxu0 0.0
    %2954 = vmatpush1.msra.mxu0 0.0
    %2955 = vmatprep.subr.mxu0 0.0
    %2956 = vmatpush1.msra.mxu0 0.0
    %2957 = vmatprep.subr.mxu0 0.0
    %2958 = vmatpush1.msra.mxu0 0.0
    %2959 = vmatprep.subr.mxu0 0.0
    %2960 = vmatpush1.msra.mxu0 0.0
    %2961 = vmatprep.subr.mxu0 0.0
    %2962 = vmatpush1.msra.mxu0 0.0
    %2963 = vmatprep.subr.mxu0 0.0
    %2964 = vmatpush1.msra.mxu0 0.0
    %2965 = vmatprep.subr.mxu0 0.0
    %2966 = vmatpush1.msra.mxu0 0.0
    %2967 = vmatprep.subr.mxu0 0.0
    %2968 = vmatpush1.msra.mxu0 0.0
    %2969 = vmatprep.subr.mxu0 0.0
    %2970 = vmatpush1.msra.mxu0 0.0
    %2971 = vmatprep.subr.mxu0 0.0
    %2972 = vmatpush1.msra.mxu0 0.0
    %2973 = vmatprep.subr.mxu0 0.0
    %2974 = vmatpush1.msra.mxu0 0.0
    %2975 = vmatprep.subr.mxu0 0.0
    %2976 = vmatpush1.msra.mxu0 0.0
    %2977 = vmatprep.subr.mxu0 0.0
    %2978 = vmatpush1.msra.mxu0 0.0
    %2979 = vmatprep.subr.mxu0 0.0
    %2980 = vmatpush1.msra.mxu0 0.0
    %2981 = vmatprep.subr.mxu0 0.0
    %2982 = vmatpush1.msra.mxu0 0.0
    %2983 = vmatprep.subr.mxu0 0.0
    %2984 = vmatpush1.msra.mxu0 0.0
    %2985 = vmatprep.subr.mxu0 0.0
    %2986 = vmatpush1.msra.mxu0 0.0
    %2987 = vmatprep.subr.mxu0 0.0
    %2988 = vmatpush1.msra.mxu0 0.0
    %2989 = vmatprep.subr.mxu0 0.0
    %2990 = vmatpush1.msra.mxu0 0.0
    %2991 = vmatprep.subr.mxu0 0.0
    %2992 = vmatpush1.msra.mxu0 0.0
    %2993 = vmatprep.subr.mxu0 0.0
    %2994 = vmatpush1.msra.mxu0 0.0
    %2995 = vmatprep.subr.mxu0 0.0
    %2996 = vmatpush1.msra.mxu0 0.0
    %2997 = vmatprep.subr.mxu0 0.0
    %2998 = vmatpush1.msra.mxu0 0.0
    %2999 = vmatprep.subr.mxu0 0.0
    %3000 = vmatpush1.msra.mxu0 0.0
    %3001 = vmatprep.subr.mxu0 0.0
    %3002 = vmatpush1.msra.mxu0 0.0
    %3003 = vmatprep.subr.mxu0 0.0
    %3004 = vmatpush1.msra.mxu0 0.0
    %3005 = vmatprep.mubr.f32.mxu0 0.0
    %3006 = vmatmul.mubr.f32.gmra.mrb[0].mxu0 %v2939
    %v3007 = vpop.f32.mrb[0].mxu0
    %v3008 = vadd.f32 %v2936, %v3007
    %v3009 = vpop.f32.mrb[0].mxu0
    %3010 = vdwg.mxu0
    %s3011 = scalar_lea.vmem [#allocation9], 40
    %3012 = vst [vmem:[%s3011] sm:$0xff] %v3008
    %s3013 = scalar_lea.vmem [#allocation2], 48
    %v3014 = vld [vmem:[%s3013] sm:$0xff]
    %v3015 = vld [vmem:[#allocation6] sm:$0xff]
    %v3016 = vld [vmem:[#allocation6 + $0x8] sm:$0xff]
    %v3017 = vld [vmem:[#allocation6 + $0x10] sm:$0xff]
    %3018 = vmatprep.subr.mxu0 0.0
    %3019 = vmatpush1.msra.mxu0 %v3015
    %3020 = vmatprep.subr.mxu0 0.0
    %3021 = vmatpush1.msra.mxu0 %v3016
    %3022 = vmatprep.subr.mxu0 0.0
    %3023 = vmatpush1.msra.mxu0 %v3017
    %3024 = vmatprep.subr.mxu0 0.0
    %3025 = vmatpush1.msra.mxu0 0.0
    %3026 = vmatprep.subr.mxu0 0.0
    %3027 = vmatpush1.msra.mxu0 0.0
    %3028 = vmatprep.subr.mxu0 0.0
    %3029 = vmatpush1.msra.mxu0 0.0
    %3030 = vmatprep.subr.mxu0 0.0
    %3031 = vmatpush1.msra.mxu0 0.0
    %3032 = vmatprep.subr.mxu0 0.0
    %3033 = vmatpush1.msra.mxu0 0.0
    %3034 = vmatprep.subr.mxu0 0.0
    %3035 = vmatpush1.msra.mxu0 0.0
    %3036 = vmatprep.subr.mxu0 0.0
    %3037 = vmatpush1.msra.mxu0 0.0
    %3038 = vmatprep.subr.mxu0 0.0
    %3039 = vmatpush1.msra.mxu0 0.0
    %3040 = vmatprep.subr.mxu0 0.0
    %3041 = vmatpush1.msra.mxu0 0.0
    %3042 = vmatprep.subr.mxu0 0.0
    %3043 = vmatpush1.msra.mxu0 0.0
    %3044 = vmatprep.subr.mxu0 0.0
    %3045 = vmatpush1.msra.mxu0 0.0
    %3046 = vmatprep.subr.mxu0 0.0
    %3047 = vmatpush1.msra.mxu0 0.0
    %3048 = vmatprep.subr.mxu0 0.0
    %3049 = vmatpush1.msra.mxu0 0.0
    %3050 = vmatprep.subr.mxu0 0.0
    %3051 = vmatpush1.msra.mxu0 0.0
    %3052 = vmatprep.subr.mxu0 0.0
    %3053 = vmatpush1.msra.mxu0 0.0
    %3054 = vmatprep.subr.mxu0 0.0
    %3055 = vmatpush1.msra.mxu0 0.0
    %3056 = vmatprep.subr.mxu0 0.0
    %3057 = vmatpush1.msra.mxu0 0.0
    %3058 = vmatprep.subr.mxu0 0.0
    %3059 = vmatpush1.msra.mxu0 0.0
    %3060 = vmatprep.subr.mxu0 0.0
    %3061 = vmatpush1.msra.mxu0 0.0
    %3062 = vmatprep.subr.mxu0 0.0
    %3063 = vmatpush1.msra.mxu0 0.0
    %3064 = vmatprep.subr.mxu0 0.0
    %3065 = vmatpush1.msra.mxu0 0.0
    %3066 = vmatprep.subr.mxu0 0.0
    %3067 = vmatpush1.msra.mxu0 0.0
    %3068 = vmatprep.subr.mxu0 0.0
    %3069 = vmatpush1.msra.mxu0 0.0
    %3070 = vmatprep.subr.mxu0 0.0
    %3071 = vmatpush1.msra.mxu0 0.0
    %3072 = vmatprep.subr.mxu0 0.0
    %3073 = vmatpush1.msra.mxu0 0.0
    %3074 = vmatprep.subr.mxu0 0.0
    %3075 = vmatpush1.msra.mxu0 0.0
    %3076 = vmatprep.subr.mxu0 0.0
    %3077 = vmatpush1.msra.mxu0 0.0
    %3078 = vmatprep.subr.mxu0 0.0
    %3079 = vmatpush1.msra.mxu0 0.0
    %3080 = vmatprep.subr.mxu0 0.0
    %3081 = vmatpush1.msra.mxu0 0.0
    %3082 = vmatprep.mubr.f32.mxu0 0.0
    %3083 = vmatmul.mubr.f32.gmra.mrb[0].mxu0 %v2939
    %v3084 = vpop.f32.mrb[0].mxu0
    %v3085 = vadd.f32 0.0, %v3084
    %v3086 = vpop.f32.mrb[0].mxu0
    %3087 = vdwg.mxu0
    %v3088 = vadd.f32 %v3014, %v3085
    %s3089 = scalar_lea.vmem [#allocation3], 48
    %v3090 = vld [vmem:[%s3089] sm:$0xff]
    %v3091 = vld [vmem:[%s613] sm:$0xff]
    %v3092 = vld [vmem:[%s613 + $0x8] sm:$0xff]
    %v3093 = vld [vmem:[%s613 + $0x10] sm:$0xff]
    %3094 = vmatprep.subr.mxu0 0.0
    %3095 = vmatpush1.msra.mxu0 %v3091
    %3096 = vmatprep.subr.mxu0 0.0
    %3097 = vmatpush1.msra.mxu0 %v3092
    %3098 = vmatprep.subr.mxu0 0.0
    %3099 = vmatpush1.msra.mxu0 %v3093
    %3100 = vmatprep.subr.mxu0 0.0
    %3101 = vmatpush1.msra.mxu0 0.0
    %3102 = vmatprep.subr.mxu0 0.0
    %3103 = vmatpush1.msra.mxu0 0.0
    %3104 = vmatprep.subr.mxu0 0.0
    %3105 = vmatpush1.msra.mxu0 0.0
    %3106 = vmatprep.subr.mxu0 0.0
    %3107 = vmatpush1.msra.mxu0 0.0
    %3108 = vmatprep.subr.mxu0 0.0
    %3109 = vmatpush1.msra.mxu0 0.0
    %3110 = vmatprep.subr.mxu0 0.0
    %3111 = vmatpush1.msra.mxu0 0.0
    %3112 = vmatprep.subr.mxu0 0.0
    %3113 = vmatpush1.msra.mxu0 0.0
    %3114 = vmatprep.subr.mxu0 0.0
    %3115 = vmatpush1.msra.mxu0 0.0
    %3116 = vmatprep.subr.mxu0 0.0
    %3117 = vmatpush1.msra.mxu0 0.0
    %3118 = vmatprep.subr.mxu0 0.0
    %3119 = vmatpush1.msra.mxu0 0.0
    %3120 = vmatprep.subr.mxu0 0.0
    %3121 = vmatpush1.msra.mxu0 0.0
    %3122 = vmatprep.subr.mxu0 0.0
    %3123 = vmatpush1.msra.mxu0 0.0
    %3124 = vmatprep.subr.mxu0 0.0
    %3125 = vmatpush1.msra.mxu0 0.0
    %3126 = vmatprep.subr.mxu0 0.0
    %3127 = vmatpush1.msra.mxu0 0.0
    %3128 = vmatprep.subr.mxu0 0.0
    %3129 = vmatpush1.msra.mxu0 0.0
    %3130 = vmatprep.subr.mxu0 0.0
    %3131 = vmatpush1.msra.mxu0 0.0
    %3132 = vmatprep.subr.mxu0 0.0
    %3133 = vmatpush1.msra.mxu0 0.0
    %3134 = vmatprep.subr.mxu0 0.0
    %3135 = vmatpush1.msra.mxu0 0.0
    %3136 = vmatprep.subr.mxu0 0.0
    %3137 = vmatpush1.msra.mxu0 0.0
    %3138 = vmatprep.subr.mxu0 0.0
    %3139 = vmatpush1.msra.mxu0 0.0
    %3140 = vmatprep.subr.mxu0 0.0
    %3141 = vmatpush1.msra.mxu0 0.0
    %3142 = vmatprep.subr.mxu0 0.0
    %3143 = vmatpush1.msra.mxu0 0.0
    %3144 = vmatprep.subr.mxu0 0.0
    %3145 = vmatpush1.msra.mxu0 0.0
    %3146 = vmatprep.subr.mxu0 0.0
    %3147 = vmatpush1.msra.mxu0 0.0
    %3148 = vmatprep.subr.mxu0 0.0
    %3149 = vmatpush1.msra.mxu0 0.0
    %3150 = vmatprep.subr.mxu0 0.0
    %3151 = vmatpush1.msra.mxu0 0.0
    %3152 = vmatprep.subr.mxu0 0.0
    %3153 = vmatpush1.msra.mxu0 0.0
    %3154 = vmatprep.subr.mxu0 0.0
    %3155 = vmatpush1.msra.mxu0 0.0
    %3156 = vmatprep.subr.mxu0 0.0
    %3157 = vmatpush1.msra.mxu0 0.0
    %3158 = vmatprep.mubr.f32.mxu0 0.0
    %3159 = vmatmul.mubr.f32.gmra.mrb[0].mxu0 %v2939
    %v3160 = vpop.f32.mrb[0].mxu0
    %v3161 = vadd.f32 0.0, %v3160
    %v3162 = vpop.f32.mrb[0].mxu0
    %3163 = vdwg.mxu0
    %v3164 = vadd.f32 %v3090, %v3161
    %s3165 = scalar_lea.vmem [#allocation4], 48
    %v3166 = vld [vmem:[%s3165] sm:$0xff]
    %v3167 = vld [vmem:[%s689] sm:$0xff]
    %v3168 = vld [vmem:[%s689 + $0x8] sm:$0xff]
    %v3169 = vld [vmem:[%s689 + $0x10] sm:$0xff]
    %3170 = vmatprep.subr.mxu0 0.0
    %3171 = vmatpush1.msra.mxu0 %v3167
    %3172 = vmatprep.subr.mxu0 0.0
    %3173 = vmatpush1.msra.mxu0 %v3168
    %3174 = vmatprep.subr.mxu0 0.0
    %3175 = vmatpush1.msra.mxu0 %v3169
    %3176 = vmatprep.subr.mxu0 0.0
    %3177 = vmatpush1.msra.mxu0 0.0
    %3178 = vmatprep.subr.mxu0 0.0
    %3179 = vmatpush1.msra.mxu0 0.0
    %3180 = vmatprep.subr.mxu0 0.0
    %3181 = vmatpush1.msra.mxu0 0.0
    %3182 = vmatprep.subr.mxu0 0.0
    %3183 = vmatpush1.msra.mxu0 0.0
    %3184 = vmatprep.subr.mxu0 0.0
    %3185 = vmatpush1.msra.mxu0 0.0
    %3186 = vmatprep.subr.mxu0 0.0
    %3187 = vmatpush1.msra.mxu0 0.0
    %3188 = vmatprep.subr.mxu0 0.0
    %3189 = vmatpush1.msra.mxu0 0.0
    %3190 = vmatprep.subr.mxu0 0.0
    %3191 = vmatpush1.msra.mxu0 0.0
    %3192 = vmatprep.subr.mxu0 0.0
    %3193 = vmatpush1.msra.mxu0 0.0
    %3194 = vmatprep.subr.mxu0 0.0
    %3195 = vmatpush1.msra.mxu0 0.0
    %3196 = vmatprep.subr.mxu0 0.0
    %3197 = vmatpush1.msra.mxu0 0.0
    %3198 = vmatprep.subr.mxu0 0.0
    %3199 = vmatpush1.msra.mxu0 0.0
    %3200 = vmatprep.subr.mxu0 0.0
    %3201 = vmatpush1.msra.mxu0 0.0
    %3202 = vmatprep.subr.mxu0 0.0
    %3203 = vmatpush1.msra.mxu0 0.0
    %3204 = vmatprep.subr.mxu0 0.0
    %3205 = vmatpush1.msra.mxu0 0.0
    %3206 = vmatprep.subr.mxu0 0.0
    %3207 = vmatpush1.msra.mxu0 0.0
    %3208 = vmatprep.subr.mxu0 0.0
    %3209 = vmatpush1.msra.mxu0 0.0
    %3210 = vmatprep.subr.mxu0 0.0
    %3211 = vmatpush1.msra.mxu0 0.0
    %3212 = vmatprep.subr.mxu0 0.0
    %3213 = vmatpush1.msra.mxu0 0.0
    %3214 = vmatprep.subr.mxu0 0.0
    %3215 = vmatpush1.msra.mxu0 0.0
    %3216 = vmatprep.subr.mxu0 0.0
    %3217 = vmatpush1.msra.mxu0 0.0
    %3218 = vmatprep.subr.mxu0 0.0
    %3219 = vmatpush1.msra.mxu0 0.0
    %3220 = vmatprep.subr.mxu0 0.0
    %3221 = vmatpush1.msra.mxu0 0.0
    %3222 = vmatprep.subr.mxu0 0.0
    %3223 = vmatpush1.msra.mxu0 0.0
    %3224 = vmatprep.subr.mxu0 0.0
    %3225 = vmatpush1.msra.mxu0 0.0
    %3226 = vmatprep.subr.mxu0 0.0
    %3227 = vmatpush1.msra.mxu0 0.0
    %3228 = vmatprep.subr.mxu0 0.0
    %3229 = vmatpush1.msra.mxu0 0.0
    %3230 = vmatprep.subr.mxu0 0.0
    %3231 = vmatpush1.msra.mxu0 0.0
    %3232 = vmatprep.subr.mxu0 0.0
    %3233 = vmatpush1.msra.mxu0 0.0
    %3234 = vmatprep.mubr.f32.mxu0 0.0
    %3235 = vmatmul.mubr.f32.gmra.mrb[0].mxu0 %v2939
    %v3236 = vpop.f32.mrb[0].mxu0
    %v3237 = vadd.f32 0.0, %v3236
    %v3238 = vpop.f32.mrb[0].mxu0
    %3239 = vdwg.mxu0
    %v3240 = vadd.f32 %v3166, %v3237
    %s3241 = scalar_lea.vmem [#allocation5], 48
    %v3242 = vld [vmem:[%s3241] sm:$0xff]
    %v3243 = vld [vmem:[%s765] sm:$0xff]
    %v3244 = vld [vmem:[%s765 + $0x8] sm:$0xff]
    %v3245 = vld [vmem:[%s765 + $0x10] sm:$0xff]
    %3246 = vmatprep.subr.mxu0 0.0
    %3247 = vmatpush1.msra.mxu0 %v3243
    %3248 = vmatprep.subr.mxu0 0.0
    %3249 = vmatpush1.msra.mxu0 %v3244
    %3250 = vmatprep.subr.mxu0 0.0
    %3251 = vmatpush1.msra.mxu0 %v3245
    %3252 = vmatprep.subr.mxu0 0.0
    %3253 = vmatpush1.msra.mxu0 0.0
    %3254 = vmatprep.subr.mxu0 0.0
    %3255 = vmatpush1.msra.mxu0 0.0
    %3256 = vmatprep.subr.mxu0 0.0
    %3257 = vmatpush1.msra.mxu0 0.0
    %3258 = vmatprep.subr.mxu0 0.0
    %3259 = vmatpush1.msra.mxu0 0.0
    %3260 = vmatprep.subr.mxu0 0.0
    %3261 = vmatpush1.msra.mxu0 0.0
    %3262 = vmatprep.subr.mxu0 0.0
    %3263 = vmatpush1.msra.mxu0 0.0
    %3264 = vmatprep.subr.mxu0 0.0
    %3265 = vmatpush1.msra.mxu0 0.0
    %3266 = vmatprep.subr.mxu0 0.0
    %3267 = vmatpush1.msra.mxu0 0.0
    %3268 = vmatprep.subr.mxu0 0.0
    %3269 = vmatpush1.msra.mxu0 0.0
    %3270 = vmatprep.subr.mxu0 0.0
    %3271 = vmatpush1.msra.mxu0 0.0
    %3272 = vmatprep.subr.mxu0 0.0
    %3273 = vmatpush1.msra.mxu0 0.0
    %3274 = vmatprep.subr.mxu0 0.0
    %3275 = vmatpush1.msra.mxu0 0.0
    %3276 = vmatprep.subr.mxu0 0.0
    %3277 = vmatpush1.msra.mxu0 0.0
    %3278 = vmatprep.subr.mxu0 0.0
    %3279 = vmatpush1.msra.mxu0 0.0
    %3280 = vmatprep.subr.mxu0 0.0
    %3281 = vmatpush1.msra.mxu0 0.0
    %3282 = vmatprep.subr.mxu0 0.0
    %3283 = vmatpush1.msra.mxu0 0.0
    %3284 = vmatprep.subr.mxu0 0.0
    %3285 = vmatpush1.msra.mxu0 0.0
    %3286 = vmatprep.subr.mxu0 0.0
    %3287 = vmatpush1.msra.mxu0 0.0
    %3288 = vmatprep.subr.mxu0 0.0
    %3289 = vmatpush1.msra.mxu0 0.0
    %3290 = vmatprep.subr.mxu0 0.0
    %3291 = vmatpush1.msra.mxu0 0.0
    %3292 = vmatprep.subr.mxu0 0.0
    %3293 = vmatpush1.msra.mxu0 0.0
    %3294 = vmatprep.subr.mxu0 0.0
    %3295 = vmatpush1.msra.mxu0 0.0
    %3296 = vmatprep.subr.mxu0 0.0
    %3297 = vmatpush1.msra.mxu0 0.0
    %3298 = vmatprep.subr.mxu0 0.0
    %3299 = vmatpush1.msra.mxu0 0.0
    %3300 = vmatprep.subr.mxu0 0.0
    %3301 = vmatpush1.msra.mxu0 0.0
    %3302 = vmatprep.subr.mxu0 0.0
    %3303 = vmatpush1.msra.mxu0 0.0
    %3304 = vmatprep.subr.mxu0 0.0
    %3305 = vmatpush1.msra.mxu0 0.0
    %3306 = vmatprep.subr.mxu0 0.0
    %3307 = vmatpush1.msra.mxu0 0.0
    %3308 = vmatprep.subr.mxu0 0.0
    %3309 = vmatpush1.msra.mxu0 0.0
    %3310 = vmatprep.mubr.f32.mxu0 0.0
    %3311 = vmatmul.mubr.f32.gmra.mrb[0].mxu0 %v2939
    %v3312 = vpop.f32.mrb[0].mxu0
    %v3313 = vadd.f32 0.0, %v3312
    %v3314 = vpop.f32.mrb[0].mxu0
    %3315 = vdwg.mxu0
    %v3316 = vadd.f32 %v3242, %v3313
    %v3317 = vxor.u32 %v3088, 2147483648
    %v3318 = vmul.f32 %v3317, 1.442695
    %v3319 = vpow.pop %v3318
    %v3320 = vadd.f32 %v3319, 1.0
    %v3321 = vrcp.pop %v3320
    %v3322 = vmul.f32 1.0, %v3321
    %v3323 = vxor.u32 %v3164, 2147483648
    %v3324 = vmul.f32 %v3323, 1.442695
    %v3325 = vpow.pop %v3324
    %v3326 = vadd.f32 %v3325, 1.0
    %v3327 = vrcp.pop %v3326
    %v3328 = vmul.f32 1.0, %v3327
    %v3329 = vtanh.pop %v3240
    %v3330 = vxor.u32 %v3316, 2147483648
    %v3331 = vmul.f32 %v3330, 1.442695
    %v3332 = vpow.pop %v3331
    %v3333 = vadd.f32 %v3332, 1.0
    %v3334 = vrcp.pop %v3333
    %v3335 = vmul.f32 1.0, %v3334
    %v3336 = vmul.f32 %v3328, %v2925
    %v3337 = vmul.f32 %v3322, %v3329
    %v3338 = vadd.f32 %v3336, %v3337
    %v3339 = vtanh.pop %v3338
    %v3340 = vmul.f32 %v3335, %v3339
    %v3341 = vld [vmem:[%s4] sm:$0xff]
    %v3342 = vld [vmem:[%s4 + $0x8] sm:$0xff]
    %v3343 = vld [vmem:[%s4 + $0x10] sm:$0xff]
    %v3344 = vld [vmem:[%s5] sm:$0x1]
    %v3346 = vlaneseq
    %v3347 = vshrl.u32 %v3346, 7
    %v3348 = vsub.s32 0, %v3347
    %v3349 = vrot.slane %v3344, %v3348
    %v3352 = vsel %vm175, %v3340, 0
    %3354 = vmatprep.subr.mxu0 0.0
    %3355 = vmatpush1.msra.mxu0 %v3341
    %3356 = vmatprep.subr.mxu0 0.0
    %3357 = vmatpush1.msra.mxu0 %v3342
    %3358 = vmatprep.subr.mxu0 0.0
    %3359 = vmatpush1.msra.mxu0 %v3343
    %3360 = vmatprep.subr.mxu0 0.0
    %3361 = vmatpush1.msra.mxu0 0.0
    %3362 = vmatprep.subr.mxu0 0.0
    %3363 = vmatpush1.msra.mxu0 0.0
    %3364 = vmatprep.subr.mxu0 0.0
    %3365 = vmatpush1.msra.mxu0 0.0
    %3366 = vmatprep.subr.mxu0 0.0
    %3367 = vmatpush1.msra.mxu0 0.0
    %3368 = vmatprep.subr.mxu0 0.0
    %3369 = vmatpush1.msra.mxu0 0.0
    %3370 = vmatprep.subr.mxu0 0.0
    %3371 = vmatpush1.msra.mxu0 0.0
    %3372 = vmatprep.subr.mxu0 0.0
    %3373 = vmatpush1.msra.mxu0 0.0
    %3374 = vmatprep.subr.mxu0 0.0
    %3375 = vmatpush1.msra.mxu0 0.0
    %3376 = vmatprep.subr.mxu0 0.0
    %3377 = vmatpush1.msra.mxu0 0.0
    %3378 = vmatprep.subr.mxu0 0.0
    %3379 = vmatpush1.msra.mxu0 0.0
    %3380 = vmatprep.subr.mxu0 0.0
    %3381 = vmatpush1.msra.mxu0 0.0
    %3382 = vmatprep.subr.mxu0 0.0
    %3383 = vmatpush1.msra.mxu0 0.0
    %3384 = vmatprep.subr.mxu0 0.0
    %3385 = vmatpush1.msra.mxu0 0.0
    %3386 = vmatprep.subr.mxu0 0.0
    %3387 = vmatpush1.msra.mxu0 0.0
    %3388 = vmatprep.subr.mxu0 0.0
    %3389 = vmatpush1.msra.mxu0 0.0
    %3390 = vmatprep.subr.mxu0 0.0
    %3391 = vmatpush1.msra.mxu0 0.0
    %3392 = vmatprep.subr.mxu0 0.0
    %3393 = vmatpush1.msra.mxu0 0.0
    %3394 = vmatprep.subr.mxu0 0.0
    %3395 = vmatpush1.msra.mxu0 0.0
    %3396 = vmatprep.subr.mxu0 0.0
    %3397 = vmatpush1.msra.mxu0 0.0
    %3398 = vmatprep.subr.mxu0 0.0
    %3399 = vmatpush1.msra.mxu0 0.0
    %3400 = vmatprep.subr.mxu0 0.0
    %3401 = vmatpush1.msra.mxu0 0.0
    %3402 = vmatprep.subr.mxu0 0.0
    %3403 = vmatpush1.msra.mxu0 0.0
    %3404 = vmatprep.subr.mxu0 0.0
    %3405 = vmatpush1.msra.mxu0 0.0
    %3406 = vmatprep.subr.mxu0 0.0
    %3407 = vmatpush1.msra.mxu0 0.0
    %3408 = vmatprep.subr.mxu0 0.0
    %3409 = vmatpush1.msra.mxu0 0.0
    %3410 = vmatprep.subr.mxu0 0.0
    %3411 = vmatpush1.msra.mxu0 0.0
    %3412 = vmatprep.subr.mxu0 0.0
    %3413 = vmatpush1.msra.mxu0 0.0
    %3414 = vmatprep.subr.mxu0 0.0
    %3415 = vmatpush1.msra.mxu0 0.0
    %3416 = vmatprep.subr.mxu0 0.0
    %3417 = vmatpush1.msra.mxu0 0.0
    %3418 = vmatprep.mubr.f32.mxu0 0.0
    %3419 = vmatmul.mubr.f32.gmra.mrb[0].mxu0 %v3352
    %v3420 = vpop.f32.mrb[0].mxu0
    %v3421 = vadd.f32 %v3349, %v3420
    %v3422 = vpop.f32.mrb[0].mxu0
    %3423 = vdwg.mxu0
    %s3424 = scalar_lea.vmem [#allocation9], 48
    %3425 = vst [vmem:[%s3424] sm:$0xff] %v3421
    // Predicated region
    $region30: #{tpu_custom_call.1} parent=1 // pred_check
      _
    $region31: #{tpu_custom_call.1} parent=1 // pred_check_branch
      %3427 = sbr.rel (0) target = $region33
    $region32: #{tpu_custom_call.1} parent=1 // pred_region
      %s3429 = ssub.s32 896, 896
      %3430 = vsyncadd [#allocation8], %s3429
      %s3431 = sshll.u32 [#allocation9], 4
      %s3432 = int_to_ptr.vmem [resolvable:$true] %s3431
      %3437 = dma.vmem_to_hbm [thread:$0]  %s3432, 896, %s6, [#allocation8], 128, 128, 8
    $region33: #{tpu_custom_call.1} parent=1 // pred_fallthru
      _
    // Predicated region
    $region34: #{tpu_custom_call.1} parent=1 // pred_check
      _
    $region35: #{tpu_custom_call.1} parent=1 // pred_check_branch
      %3439 = sbr.rel (0) target = $region37
    $region36: #{tpu_custom_call.1} parent=1 // pred_region
      %3440 = dma.done [#allocation8], 896
    $region37: #{tpu_custom_call.1} parent=1 // pred_fallthru
      _
    %3441 = vsyncpa [#allocation7], 1
    %3442 = vsyncpa [#allocation8], 1

</llo_original>
